<compile_context>
chip_gen: v7x
topology: tpu7x:2x2x1
jax: 0.10.0
libtpu: 0.0.40
codegen_flags: <defaults>
</compile_context>

<pallas_src>
import math

import jax
import jax.numpy as jnp
import numpy as np
from jax.experimental import pallas as pl
from jax.experimental.pallas import tpu as pltpu


# ----------------------------------------------------------------------------
# Kernel 1: conv-as-matmul, per image:  (CO, 27) @ (27, HW)  + bias + ReLU
# ----------------------------------------------------------------------------
def conv_relu_kernel(p_ref, w_ref, b_ref, o_ref):
    # p_ref: (1, K, HW)  bf16 im2col patches for one image (K on sublanes)
    # w_ref: (CO, K)     bf16 flattened conv weight
    # b_ref: (CO, 1)     f32 conv bias
    # o_ref: (1, CO, HW) bf16 relu(conv) -- HW on lanes => unmasked stores
    acc = jnp.dot(w_ref[...], p_ref[0], preferred_element_type=jnp.float32)
    acc = acc + b_ref[...]
    o_ref[0] = jnp.maximum(acc, 0.0).astype(o_ref.dtype)


def conv_relu(patches, wc, bc):
    N, K, HW = patches.shape
    CO = wc.shape[0]
    return pl.pallas_call(
        conv_relu_kernel,
        out_shape=jax.ShapeDtypeStruct((N, CO, HW), jnp.bfloat16),
        grid_spec=pltpu.PrefetchScalarGridSpec(
            num_scalar_prefetch=0,
            grid=(N,),
            in_specs=[
                pl.BlockSpec((1, K, HW), lambda n: (n, 0, 0)),
                pl.BlockSpec((CO, K), lambda n: (0, 0)),
                pl.BlockSpec((CO, 1), lambda n: (0, 0)),
            ],
            out_specs=pl.BlockSpec((1, CO, HW), lambda n: (n, 0, 0)),
        ),
        compiler_params=pltpu.CompilerParams(
            dimension_semantics=("parallel",)),
    )(patches, wc, bc)


# ----------------------------------------------------------------------------
# Kernel 2: fc1 (K-tiled reduction, 2-way column split) + ReLU + fc_output
# ----------------------------------------------------------------------------
def mlp_head_kernel(x_ref, w1_ref, b1_ref, w2_ref, part_ref, acc_ref):
    # grid = (2 column-halves ["parallel"], D//tk K-tiles ["arbitrary"])
    # x_ref:    (N, tk)       bf16 feature slice (NCHW flatten order)
    # w1_ref:   (1, tk, 64)   bf16 fc1 weight slice for this column half
    # b1_ref:   (1, 1, 64)    f32 fc1 bias half
    # w2_ref:   (64, NC)      f32 fc2 weight rows for this half
    # part_ref: (1, N, NC)    f32 partial logits for this half
    # acc_ref:  (N, 64)       f32 persistent accumulator
    k = pl.program_id(1)

    @pl.when(k == 0)
    def _():
        acc_ref[...] = jnp.zeros_like(acc_ref)

    acc_ref[...] += jnp.dot(x_ref[...], w1_ref[0],
                            preferred_element_type=jnp.float32)

    @pl.when(k == pl.num_programs(1) - 1)
    def _():
        h = jnp.maximum(acc_ref[...] + b1_ref[0], 0.0)          # (N, 64)
        part_ref[0] = jnp.dot(h, w2_ref[...],
                              preferred_element_type=jnp.float32)  # (N, NC)


def mlp_head(feat, w1, b1, w2, *, tk=8192):
    N, D = feat.shape
    NH, _, HHALF = w1.shape            # (2, D, 64)
    NC = w2.shape[1]
    tk = min(tk, D)
    assert D % tk == 0
    nk = D // tk
    return pl.pallas_call(
        mlp_head_kernel,
        out_shape=jax.ShapeDtypeStruct((NH, N, NC), jnp.float32),
        grid_spec=pltpu.PrefetchScalarGridSpec(
            num_scalar_prefetch=0,
            grid=(NH, nk),
            in_specs=[
                pl.BlockSpec((N, tk), lambda h, k: (0, k)),
                pl.BlockSpec((1, tk, HHALF), lambda h, k: (h, k, 0)),
                pl.BlockSpec((1, 1, HHALF), lambda h, k: (h, 0, 0)),
                pl.BlockSpec((HHALF, NC), lambda h, k: (h, 0)),
            ],
            out_specs=pl.BlockSpec((1, N, NC), lambda h, k: (h, 0, 0)),
            scratch_shapes=[pltpu.VMEM((N, HHALF), jnp.float32)],
        ),
        compiler_params=pltpu.CompilerParams(
            dimension_semantics=("parallel", "arbitrary")),
    )(feat, w1, b1, w2)


# ----------------------------------------------------------------------------
# One-time parameter preprocessing (hoisted out of the per-forward path)
# ----------------------------------------------------------------------------
def prepare_params(params):
    CO, C, KH, KW = params["conv_w"].shape        # (64, 3, 3, 3)
    Hd, D = params["fc1_w"].shape                 # (128, D)
    assert Hd % 2 == 0
    wc = params["conv_w"].reshape(CO, C * KH * KW).astype(jnp.bfloat16)  # (64,27)
    bc = params["conv_b"].reshape(CO, 1).astype(jnp.float32)             # (64,1)
    # Conv kernel already emits features in NCHW flatten order, so fc1 only
    # needs a transpose + 2-way column split + bf16 cast (done ONCE here).
    w1 = (params["fc1_w"].astype(jnp.bfloat16).T        # (D, 128)
          .reshape(D, 2, Hd // 2)
          .transpose(1, 0, 2))                          # (2, D, 64)
    b1 = params["fc1_b"].reshape(2, 1, Hd // 2).astype(jnp.float32)
    w2 = params["fc2_w"].T.astype(jnp.float32)          # (128, NC)
    b2 = params["fc2_b"].astype(jnp.float32)             # (NC,)
    return {"wc": wc, "bc": bc, "w1": w1, "b1": b1, "w2": w2, "b2": b2}


# ----------------------------------------------------------------------------
# im2col producing (N, C*KH*KW, H*W): reduction on sublanes, spatial on lanes.
# Column order k = c*9 + kh*3 + kw matches the OIHW conv-weight flatten.
# ----------------------------------------------------------------------------
def im2col_nchw_T(x, kh=3, kw=3, pad=1):
    N, C, H, W = x.shape
    xp = jnp.pad(x, ((0, 0), (0, 0), (pad, pad), (pad, pad)))
    cols = []
    for i in range(kh):
        for j in range(kw):
            cols.append(xp[:, :, i:i + H, j:j + W])      # (N, C, H, W)
    p = jnp.stack(cols, axis=2)                          # (N, C, kh*kw, H, W)
    return p.reshape(N, C * kh * kw, H * W)


# ----------------------------------------------------------------------------
# Full forward (== Network.forward), expects pre-processed params
# ----------------------------------------------------------------------------
def network_forward(prep, x):
    N, C, H, W = x.shape
    CO = prep["wc"].shape[0]
    HW = H * W

    patches = im2col_nchw_T(x).astype(jnp.bfloat16)      # (N, 27, HW)
    conv_out = conv_relu(patches, prep["wc"], prep["bc"])  # (N, CO, HW) bf16

    # NCHW flatten == torch `x.view(N, -1)`; contiguous last-two-dim merge
    # (<=128 KiB, tiny compared to the 4 MiB fc1 weight stream).
    feat = conv_out.reshape(N, CO * HW)                  # (N, D) bf16

    partial = mlp_head(feat, prep["w1"], prep["b1"], prep["w2"])  # (2, N, NC)

    # Trivial epilogue: sum the two column-half partial logits, add fc2 bias,
    # exact softmax (so proba rows sum to 1, matching F.softmax).
    logits = partial[0] + partial[1] + prep["b2"]
    proba = jax.nn.softmax(logits, axis=1)
    return logits, proba


# ----------------------------------------------------------------------------
# Pure-JAX reference for correctness checking
# ----------------------------------------------------------------------------
def reference_forward(params, x):
    y = jax.lax.conv_general_dilated(
        x, params["conv_w"], window_strides=(1, 1), padding=((1, 1), (1, 1)),
        dimension_numbers=("NCHW", "OIHW", "NCHW"))
    y = jnp.maximum(y + params["conv_b"][None, :, None, None], 0.0)
    f = y.reshape(y.shape[0], -1)
    h = jnp.maximum(f @ params["fc1_w"].T + params["fc1_b"], 0.0)
    logits = h @ params["fc2_w"].T + params["fc2_b"]
    proba = jax.nn.softmax(logits, axis=1)
    return logits, proba


if __name__ == "__main__":
    # Shapes consistent with the module: in_channels=3, input_dim=16, n_classes=10
    N, C, H, W = 2, 3, 16, 16
    n_classes = 10
    out_dim = math.floor((H - 3 + 2 * 1) / 1) + 1   # = 16
    D = out_dim * out_dim * 64                       # fc1 in_features

    key = jax.random.PRNGKey(0)
    k0, k1, k2, k3, k4, k5, kx = jax.random.split(key, 7)
    params = {
        "conv_w": jax.random.normal(k0, (64, C, 3, 3), jnp.float32) * 0.1,
        "conv_b": jax.random.normal(k1, (64,), jnp.float32) * 0.1,
        "fc1_w": jax.random.normal(k2, (128, D), jnp.float32) / math.sqrt(D),
        "fc1_b": jax.random.normal(k3, (128,), jnp.float32) * 0.1,
        "fc2_w": jax.random.normal(k4, (n_classes, 128), jnp.float32) / math.sqrt(128),
        "fc2_b": jax.random.normal(k5, (n_classes,), jnp.float32) * 0.1,
    }
    x = jax.random.normal(kx, (N, C, H, W), jnp.float32)

    # One-time preprocessing (hoisted out of the forward, per review item 1).
    prep = prepare_params(params)
    forward = jax.jit(network_forward)

    logits, proba = jax.block_until_ready(forward(prep, x))
    ref_logits, ref_proba = jax.block_until_ready(reference_forward(params, x))

    np.testing.assert_allclose(np.asarray(logits), np.asarray(ref_logits),
                               rtol=2e-2, atol=2e-2)
    np.testing.assert_allclose(np.asarray(proba), np.asarray(ref_proba),
                               rtol=2e-2, atol=2e-2)
    assert logits.shape == (N, n_classes) and proba.shape == (N, n_classes)

    print("KERNEL_OK")
</pallas_src>

<mosaic_0001>
module attributes {stable_mosaic.version = 11 : i64} {
  func.func @conv_relu_kernel(%arg0: i32, %arg1: memref<1x27x256xbf16, #tpu.memory_space<vmem>>, %arg2: memref<64x27xbf16, #tpu.memory_space<vmem>>, %arg3: memref<64x1xf32, #tpu.memory_space<vmem>>, %arg4: memref<1x64x256xbf16, #tpu.memory_space<vmem>>) attributes {dimension_semantics = [#tpu.dimension_semantics<parallel>], iteration_bounds = array<i64: 2>, scalar_prefetch = 0 : i64, scratch_operands = 0 : i64, tpu.core_type = #tpu.core_type<tc>, window_params = [{transform_indices = @transform_0, window_bounds = array<i64: 1, 27, 256>}, {pipeline_mode = #tpu.pipeline_mode<synchronous>, transform_indices = @transform_1, window_bounds = array<i64: 64, 27>}, {pipeline_mode = #tpu.pipeline_mode<synchronous>, transform_indices = @transform_2, window_bounds = array<i64: 64, 1>}, {transform_indices = @transform_3, window_bounds = array<i64: 1, 64, 256>}]} {
    %c0 = arith.constant 0 : index
    %c0_0 = arith.constant 0 : index
    %0 = vector.load %arg2[%c0, %c0_0] : memref<64x27xbf16, #tpu.memory_space<vmem>>, vector<64x27xbf16>
    %c0_1 = arith.constant 0 : index
    %c0_2 = arith.constant 0 : index
    %c0_3 = arith.constant 0 : index
    %1 = vector.load %arg1[%c0_1, %c0_2, %c0_3] : memref<1x27x256xbf16, #tpu.memory_space<vmem>>, vector<1x27x256xbf16>
    %2 = vector.shape_cast %1 : vector<1x27x256xbf16> to vector<27x256xbf16>
    %cst = arith.constant dense<0.000000e+00> : vector<64x256xf32>
    %3 = tpu.matmul %0, %2, %cst {dimension_numbers = #tpu.dot_dimension_numbers<[1], [0], [0], [1], [0, 0, 1, 1], [], []>} : vector<64x27xbf16>, vector<27x256xbf16>, vector<64x256xf32> -> vector<64x256xf32>
    %c0_4 = arith.constant 0 : index
    %c0_5 = arith.constant 0 : index
    %4 = vector.load %arg3[%c0_4, %c0_5] : memref<64x1xf32, #tpu.memory_space<vmem>>, vector<64x1xf32>
    %5 = vector.broadcast %4 : vector<64x1xf32> to vector<64x256xf32>
    %6 = arith.addf %3, %5 : vector<64x256xf32>
    %cst_6 = arith.constant 0.000000e+00 : f32
    %7 = vector.broadcast %cst_6 : f32 to vector<64x256xf32>
    %8 = arith.maximumf %6, %7 : vector<64x256xf32>
    %9 = arith.truncf %8 : vector<64x256xf32> to vector<64x256xbf16>
    %c0_7 = arith.constant 0 : index
    %c0_8 = arith.constant 0 : index
    %c0_9 = arith.constant 0 : index
    %10 = vector.load %arg4[%c0_7, %c0_8, %c0_9] : memref<1x64x256xbf16, #tpu.memory_space<vmem>>, vector<1x64x256xbf16>
    %11 = vector.shape_cast %10 : vector<1x64x256xbf16> to vector<64x256xbf16>
    %12 = vector.shape_cast %9 : vector<64x256xbf16> to vector<1x64x256xbf16>
    tpu.vector_store %arg4[%c0_7, %c0_8, %c0_9], %12 {strides = array<i32>} : memref<1x64x256xbf16, #tpu.memory_space<vmem>>, vector<1x64x256xbf16>,
    return
  }
  func.func @transform_0(%arg0: i32) -> (i32, i32, i32) {
    %c0_i32 = arith.constant 0 : i32
    %c0_i32_0 = arith.constant 0 : i32
    %c0_i32_1 = arith.constant 0 : i32
    return %arg0, %c0_i32, %c0_i32_0 : i32, i32, i32
  }
  func.func @transform_1(%arg0: i32) -> (i32, i32) {
    %c0_i32 = arith.constant 0 : i32
    %c0_i32_0 = arith.constant 0 : i32
    %c0_i32_1 = arith.constant 0 : i32
    return %c0_i32, %c0_i32_0 : i32, i32
  }
  func.func @transform_2(%arg0: i32) -> (i32, i32) {
    %c0_i32 = arith.constant 0 : i32
    %c0_i32_0 = arith.constant 0 : i32
    %c0_i32_1 = arith.constant 0 : i32
    return %c0_i32, %c0_i32_0 : i32, i32
  }
  func.func @transform_3(%arg0: i32) -> (i32, i32, i32) {
    %c0_i32 = arith.constant 0 : i32
    %c0_i32_0 = arith.constant 0 : i32
    %c0_i32_1 = arith.constant 0 : i32
    return %arg0, %c0_i32, %c0_i32_0 : i32, i32, i32
  }
}

module attributes {stable_mosaic.version = 11 : i64} {
  func.func @mlp_head_kernel(%arg0: i32, %arg1: i32, %arg2: memref<2x8192xbf16, #tpu.memory_space<vmem>>, %arg3: memref<1x8192x64xbf16, #tpu.memory_space<vmem>>, %arg4: memref<1x1x64xf32, #tpu.memory_space<vmem>>, %arg5: memref<64x10xf32, #tpu.memory_space<vmem>>, %arg6: memref<1x2x10xf32, #tpu.memory_space<vmem>>, %arg7: memref<2x64xf32, #tpu.memory_space<vmem>>) attributes {dimension_semantics = [#tpu.dimension_semantics<parallel>, #tpu.dimension_semantics<arbitrary>], iteration_bounds = array<i64: 2, 2>, scalar_prefetch = 0 : i64, scratch_operands = 1 : i64, tpu.core_type = #tpu.core_type<tc>, window_params = [{transform_indices = @transform_0, window_bounds = array<i64: 2, 8192>}, {transform_indices = @transform_1, window_bounds = array<i64: 1, 8192, 64>}, {transform_indices = @transform_2, window_bounds = array<i64: 1, 1, 64>}, {transform_indices = @transform_3, window_bounds = array<i64: 64, 10>}, {transform_indices = @transform_4, window_bounds = array<i64: 1, 2, 10>}]} {
    %c0_i32 = arith.constant 0 : i32
    %0 = arith.cmpi eq, %arg1, %c0_i32 : i32
    %1 = arith.extui %0 : i1 to i32
    %c0_i32_0 = arith.constant 0 : i32
    %2 = arith.cmpi ne, %1, %c0_i32_0 : i32
    scf.if %2 {
      %cst_10 = arith.constant 0.000000e+00 : f32
      %13 = vector.broadcast %cst_10 : f32 to vector<2x64xf32>
      %c0_11 = arith.constant 0 : index
      %c0_12 = arith.constant 0 : index
      %14 = vector.load %arg7[%c0_11, %c0_12] : memref<2x64xf32, #tpu.memory_space<vmem>>, vector<2x64xf32>
      tpu.vector_store %arg7[%c0_11, %c0_12], %13 {strides = array<i32>} : memref<2x64xf32, #tpu.memory_space<vmem>>, vector<2x64xf32>,
    } else {
    }
    %c0 = arith.constant 0 : index
    %c0_1 = arith.constant 0 : index
    %3 = vector.load %arg7[%c0, %c0_1] : memref<2x64xf32, #tpu.memory_space<vmem>>, vector<2x64xf32>
    %c0_2 = arith.constant 0 : index
    %c0_3 = arith.constant 0 : index
    %4 = vector.load %arg2[%c0_2, %c0_3] : memref<2x8192xbf16, #tpu.memory_space<vmem>>, vector<2x8192xbf16>
    %c0_4 = arith.constant 0 : index
    %c0_5 = arith.constant 0 : index
    %c0_6 = arith.constant 0 : index
    %5 = vector.load %arg3[%c0_4, %c0_5, %c0_6] : memref<1x8192x64xbf16, #tpu.memory_space<vmem>>, vector<1x8192x64xbf16>
    %6 = vector.shape_cast %5 : vector<1x8192x64xbf16> to vector<8192x64xbf16>
    %cst = arith.constant dense<0.000000e+00> : vector<2x64xf32>
    %7 = tpu.matmul %4, %6, %cst {dimension_numbers = #tpu.dot_dimension_numbers<[1], [0], [0], [1], [0, 0, 1, 1], [], []>} : vector<2x8192xbf16>, vector<8192x64xbf16>, vector<2x64xf32> -> vector<2x64xf32>
    %8 = arith.addf %3, %7 : vector<2x64xf32>
    %c0_7 = arith.constant 0 : index
    %c0_8 = arith.constant 0 : index
    %9 = vector.load %arg7[%c0_7, %c0_8] : memref<2x64xf32, #tpu.memory_space<vmem>>, vector<2x64xf32>
    tpu.vector_store %arg7[%c0_7, %c0_8], %8 {strides = array<i32>} : memref<2x64xf32, #tpu.memory_space<vmem>>, vector<2x64xf32>,
    %c1_i32 = arith.constant 1 : i32
    %10 = arith.cmpi eq, %arg1, %c1_i32 : i32
    %11 = arith.extui %10 : i1 to i32
    %c0_i32_9 = arith.constant 0 : i32
    %12 = arith.cmpi ne, %11, %c0_i32_9 : i32
    scf.if %12 {
      %c0_10 = arith.constant 0 : index
      %c0_11 = arith.constant 0 : index
      %13 = vector.load %arg7[%c0_10, %c0_11] : memref<2x64xf32, #tpu.memory_space<vmem>>, vector<2x64xf32>
      %c0_12 = arith.constant 0 : index
      %c0_13 = arith.constant 0 : index
      %c0_14 = arith.constant 0 : index
      %14 = vector.load %arg4[%c0_12, %c0_13, %c0_14] : memref<1x1x64xf32, #tpu.memory_space<vmem>>, vector<1x1x64xf32>
      %15 = vector.shape_cast %14 : vector<1x1x64xf32> to vector<1x64xf32>
      %16 = vector.broadcast %15 : vector<1x64xf32> to vector<2x64xf32>
      %17 = arith.addf %13, %16 : vector<2x64xf32>
      %cst_15 = arith.constant 0.000000e+00 : f32
      %18 = vector.broadcast %cst_15 : f32 to vector<2x64xf32>
      %19 = arith.maximumf %17, %18 : vector<2x64xf32>
      %c0_16 = arith.constant 0 : index
      %c0_17 = arith.constant 0 : index
      %20 = vector.load %arg5[%c0_16, %c0_17] : memref<64x10xf32, #tpu.memory_space<vmem>>, vector<64x10xf32>
      %cst_18 = arith.constant dense<0.000000e+00> : vector<2x10xf32>
      %21 = tpu.matmul %19, %20, %cst_18 {dimension_numbers = #tpu.dot_dimension_numbers<[1], [0], [0], [1], [0, 0, 1, 1], [], []>} : vector<2x64xf32>, vector<64x10xf32>, vector<2x10xf32> -> vector<2x10xf32>
      %c0_19 = arith.constant 0 : index
      %c0_20 = arith.constant 0 : index
      %c0_21 = arith.constant 0 : index
      %22 = vector.load %arg6[%c0_19, %c0_20, %c0_21] : memref<1x2x10xf32, #tpu.memory_space<vmem>>, vector<1x2x10xf32>
      %23 = vector.shape_cast %22 : vector<1x2x10xf32> to vector<2x10xf32>
      %24 = vector.shape_cast %21 : vector<2x10xf32> to vector<1x2x10xf32>
      tpu.vector_store %arg6[%c0_19, %c0_20, %c0_21], %24 {strides = array<i32>} : memref<1x2x10xf32, #tpu.memory_space<vmem>>, vector<1x2x10xf32>,
    } else {
    }
    return
  }
  func.func @transform_0(%arg0: i32, %arg1: i32) -> (i32, i32) {
    %c0_i32 = arith.constant 0 : i32
    %c0_i32_0 = arith.constant 0 : i32
    return %c0_i32, %arg1 : i32, i32
  }
  func.func @transform_1(%arg0: i32, %arg1: i32) -> (i32, i32, i32) {
    %c0_i32 = arith.constant 0 : i32
    %c0_i32_0 = arith.constant 0 : i32
    return %arg0, %arg1, %c0_i32 : i32, i32, i32
  }
  func.func @transform_2(%arg0: i32, %arg1: i32) -> (i32, i32, i32) {
    %c0_i32 = arith.constant 0 : i32
    %c0_i32_0 = arith.constant 0 : i32
    %c0_i32_1 = arith.constant 0 : i32
    return %arg0, %c0_i32, %c0_i32_0 : i32, i32, i32
  }
  func.func @transform_3(%arg0: i32, %arg1: i32) -> (i32, i32) {
    %c0_i32 = arith.constant 0 : i32
    %c0_i32_0 = arith.constant 0 : i32
    return %arg0, %c0_i32 : i32, i32
  }
  func.func @transform_4(%arg0: i32, %arg1: i32) -> (i32, i32, i32) {
    %c0_i32 = arith.constant 0 : i32
    %c0_i32_0 = arith.constant 0 : i32
    %c0_i32_1 = arith.constant 0 : i32
    return %arg0, %c0_i32, %c0_i32_0 : i32, i32, i32
  }
}

</mosaic_0001>

<llo_original>
// kernel: network_forward.2
$region0: #{network_forward.2}
  #allocation0 [shape = 'u32[]', space=smem, size = 0x4, offset = 0x4, fixed_abs, tag = 'smem constant byte address 0x4 - core index']
  #allocation1 [shape = 'u32[144,128]{1,0:T(1,128)}', space=vmem, size = 0x12000, scoped, tag = 'internal scratch']
  %s0 = inlined_call_operand.vmem [shape: bf16[2,27,256], index: 0, kind: input, shape index: {}]
  %s1 = inlined_call_operand.vmem [shape: bf16[64,27], index: 1, kind: input, shape index: {}]
  %s2 = inlined_call_operand.vmem [shape: f32[64,1], index: 2, kind: input, shape index: {}]
  %s3 = inlined_call_operand.vmem [shape: bf16[2,64,256], index: 3, kind: output, shape index: {}]
  %s4 = sld [smem:[#allocation0]]
  $region45: #{network_forward.2} parent=0
    _
  %s6 = ssub.s32 1, %s4
  %s7 = scalar_select 0, %s6, %s4
  loop: start=0, step=1, limit=4
  $region2: #{network_forward.2} parent=0 // loop_pre_header
    _
  $region3: #{network_forward.2} parent=0 // loop_header
    %s9 = sphi 0, %s13
    %p10 = scmp.ge.s32.totalorder %s9, 4
    %s19 = sphi 0, %s21
    %s22 = sphi 0, %s19
    %s23 = sphi 0, %s22
    %s39 = sphi 0, %s23
    %s43 = sphi 0, %s43
    %s45 = sphi 0, %s43
    %s46 = sphi 0, %s45
    %s60 = sphi 0, %s46
    %s64 = sphi 0, %s64
    %s66 = sphi 0, %s64
    %s67 = sphi 0, %s66
    %s81 = sphi 0, %s67
    %s87 = sphi 0, %s89
    %s90 = sphi 0, %s87
    %s91 = sphi 0, %s90
    %s107 = sphi 0, %s91
  $region4: #{network_forward.2} parent=0 // loop_header_branch
    %12 = sbr.rel (%p10) target = $region8
  $region5: #{network_forward.2} parent=0 // loop_body
    %s14 = ssub.s32 %s9, 1
    %s15 = ssub.s32 %s9, 2
    %s16 = sadd.s32 %s9, 1
    %s17 = ssub.s32 %s9, %s16
    %p18 = scmp.eq.s32.totalorder %s17, 0
    %s20 = sadd.s32 %s19, 1
    %s21 = scalar_select %p18, %s19, %s20
    %p24 = pneg %p18
    %p25 = scmp.eq.s32.totalorder %s9, 1
    %p26 = por %p24, %p25
    %p27 = scmp.ne.s32.totalorder %s19, %s22
    %p28 = scmp.eq.s32.totalorder %s9, 0
    %p29 = por %p27, %p28
    %p30 = scmp.ne.s32.totalorder %s19, %s22
    %p31 = scmp.eq.s32.totalorder %s14, 1
    %p32 = por %p30, %p31
    %p33 = scmp.ne.s32.totalorder %s22, %s23
    %p34 = scmp.eq.s32.totalorder %s14, 0
    %p35 = por %p33, %p34
    %p36 = scmp.ne.s32.totalorder %s22, %s23
    %p37 = scmp.eq.s32.totalorder %s15, 1
    %p38 = por %p36, %p37
    %p40 = scmp.ne.s32.totalorder %s23, %s39
    %p41 = scmp.eq.s32.totalorder %s15, 0
    %p42 = por %p40, %p41
    %s44 = sadd.s32 %s43, 1
    %p47 = scmp.eq.s32.totalorder %s9, 1
    %p48 = scmp.ne.s32.totalorder %s43, %s45
    %p49 = scmp.eq.s32.totalorder %s9, 0
    %p50 = por %p48, %p49
    %p51 = scmp.ne.s32.totalorder %s43, %s45
    %p52 = scmp.eq.s32.totalorder %s14, 1
    %p53 = por %p51, %p52
    %p54 = scmp.ne.s32.totalorder %s45, %s46
    %p55 = scmp.eq.s32.totalorder %s14, 0
    %p56 = por %p54, %p55
    %p57 = scmp.ne.s32.totalorder %s45, %s46
    %p58 = scmp.eq.s32.totalorder %s15, 1
    %p59 = por %p57, %p58
    %p61 = scmp.ne.s32.totalorder %s46, %s60
    %p62 = scmp.eq.s32.totalorder %s15, 0
    %p63 = por %p61, %p62
    %s65 = sadd.s32 %s64, 1
    %p68 = scmp.eq.s32.totalorder %s9, 1
    %p69 = scmp.ne.s32.totalorder %s64, %s66
    %p70 = scmp.eq.s32.totalorder %s9, 0
    %p71 = por %p69, %p70
    %p72 = scmp.ne.s32.totalorder %s64, %s66
    %p73 = scmp.eq.s32.totalorder %s14, 1
    %p74 = por %p72, %p73
    %p75 = scmp.ne.s32.totalorder %s66, %s67
    %p76 = scmp.eq.s32.totalorder %s14, 0
    %p77 = por %p75, %p76
    %p78 = scmp.ne.s32.totalorder %s66, %s67
    %p79 = scmp.eq.s32.totalorder %s15, 1
    %p80 = por %p78, %p79
    %p82 = scmp.ne.s32.totalorder %s67, %s81
    %p83 = scmp.eq.s32.totalorder %s15, 0
    %p84 = por %p82, %p83
    %s85 = ssub.s32 %s9, %s16
    %p86 = scmp.eq.s32.totalorder %s85, 0
    %s88 = sadd.s32 %s87, 1
    %s89 = scalar_select %p86, %s87, %s88
    %p92 = pneg %p86
    %p93 = scmp.eq.s32.totalorder %s9, 1
    %p94 = por %p92, %p93
    %p95 = scmp.ne.s32.totalorder %s87, %s90
    %p96 = scmp.eq.s32.totalorder %s9, 0
    %p97 = por %p95, %p96
    %p98 = scmp.ne.s32.totalorder %s87, %s90
    %p99 = scmp.eq.s32.totalorder %s14, 1
    %p100 = por %p98, %p99
    %p101 = scmp.ne.s32.totalorder %s90, %s91
    %p102 = scmp.eq.s32.totalorder %s14, 0
    %p103 = por %p101, %p102
    %p104 = scmp.ne.s32.totalorder %s90, %s91
    %p105 = scmp.eq.s32.totalorder %s15, 1
    %p106 = por %p104, %p105
    %p108 = scmp.ne.s32.totalorder %s91, %s107
    %p109 = scmp.eq.s32.totalorder %s15, 0
    %p110 = por %p108, %p109
    %p111 = scmp.le.s32.totalorder 1, %s9
    %p112 = scmp.lt.s32.totalorder %s9, 3
    %p113 = pnand %p111, %p112
    %p114 = pneg %p113
    // Predicated region
    $region9: #{network_forward.2} parent=5 // pred_check
      _
    $region10: #{network_forward.2} parent=5 // pred_check_branch
      %116 = sbr.rel (%p113) target = $region12
    $region11: #{network_forward.2} parent=5 // pred_region
      %s117 = ssub.s32 %s9, 1
      // Predicated region
      $region13: #{network_forward.2} parent=11 // pred_check
        %p118 = pneg %p56
      $region14: #{network_forward.2} parent=11 // pred_check_branch
        %120 = sbr.rel (%p118) target = $region16
      $region15: #{network_forward.2} parent=11 // pred_region
        _
      $region16: #{network_forward.2} parent=11 // pred_fallthru
        _
      // Predicated region
      $region17: #{network_forward.2} parent=11 // pred_check
        %p121 = pneg %p77
      $region18: #{network_forward.2} parent=11 // pred_check_branch
        %123 = sbr.rel (%p121) target = $region20
      $region19: #{network_forward.2} parent=11 // pred_region
        _
      $region20: #{network_forward.2} parent=11 // pred_fallthru
        _
    $region12: #{network_forward.2} parent=5 // pred_fallthru
      _
    %p124 = scmp.lt.s32.totalorder %s9, 2
    // Predicated region
    $region21: #{network_forward.2} parent=5 // pred_check
      %p125 = pneg %p124
    $region22: #{network_forward.2} parent=5 // pred_check_branch
      %127 = sbr.rel (%p125) target = $region24
    $region23: #{network_forward.2} parent=5 // pred_region
      // Predicated region
      $region25: #{network_forward.2} parent=23 // pred_check
        %p128 = pneg %p29
      $region26: #{network_forward.2} parent=23 // pred_check_branch
        %130 = sbr.rel (%p128) target = $region28
      $region27: #{network_forward.2} parent=23 // pred_region
        %p131 = scmp.lt.s32.totalorder %s9, 1
        %s132 = scalar_select %p131, %s9, 1
        %s133 = smul.addr %s132, 8
        %s134 = smul.addr %s133, 4
        %s135 = scalar_lea.vmem %s0, %s134
      $region28: #{network_forward.2} parent=23 // pred_fallthru
        _
    $region24: #{network_forward.2} parent=5 // pred_fallthru
      _
    %p136 = scmp.le.s32.totalorder 1, %s9
    %p137 = scmp.lt.s32.totalorder %s9, 3
    %p138 = pnand %p136, %p137
    %p139 = pneg %p138
    // Predicated region
    $region29: #{network_forward.2} parent=5 // pred_check
      _
    $region30: #{network_forward.2} parent=5 // pred_check_branch
      %141 = sbr.rel (%p138) target = $region32
    $region31: #{network_forward.2} parent=5 // pred_region
      %s142 = ssub.s32 %s9, 1
      %p143 = scmp.lt.s32.totalorder %s14, 1
      %s144 = scalar_select %p143, %s14, 1
      %s145 = smul.addr %s144, 8
      %s146 = smul.addr %s145, 4
      %s147 = scalar_lea.vmem %s0, %s146
      %p148 = pneg %p35
      %p149 = pneg %p32
      %p150 = pneg %p56
      %p151 = pneg %p53
      %p152 = pneg %p77
      %p153 = pneg %p74
      %p154 = pneg %p103
      %p155 = pneg %p100
      %p156 = scmp.lt.s32.totalorder %s14, 1
      %s157 = scalar_select %p156, %s14, 1
      %s158 = smul.addr %s157, 16
      %s159 = smul.addr %s158, 4
      %s160 = scalar_lea.vmem %s3, %s159
      %p161 = scmp.lt.s32.totalorder %s14, 1
      %s162 = scalar_select %p161, %s14, 1
      %s163 = smul.addr %s162, 8
      %s164 = smul.addr %s163, 4
      %s165 = scalar_lea.vmem %s0, %s164
      %p166 = scmp.lt.s32.totalorder %s14, 1
      %s167 = scalar_select %p166, %s14, 1
      %s168 = smul.addr %s167, 16
      %s169 = smul.addr %s168, 4
      %s170 = scalar_lea.vmem %s3, %s169
      %v172 = vld [vmem:[%s1] sm:$0xf]
      %v173 = vld [vmem:[%s1 + $0x4] sm:$0xf]
      %v174 = vld [vmem:[%s1 + $0x8] sm:$0xf]
      %v175 = vld [vmem:[%s1 + $0xc] sm:$0xf]
      %v176 = vld [vmem:[%s1 + $0x10] sm:$0xf]
      %v177 = vld [vmem:[%s1 + $0x14] sm:$0xf]
      %v178 = vld [vmem:[%s1 + $0x18] sm:$0xf]
      %v179 = vld [vmem:[%s1 + $0x1c] sm:$0xf]
      %v180 = vld [vmem:[%s165] sm:$0xff]
      %v181 = vld [vmem:[%s165 + $0x8] sm:$0xff]
      %v182 = vld [vmem:[%s165 + $0x10] sm:$0xff]
      %v183 = vld [vmem:[%s165 + $0x18] sm:$0x33]
      %v184 = vld [vmem:[%s2] sm:$0xff]
      %v185 = vld [vmem:[%s2 + $0x8] sm:$0xff]
      %v186 = vld [vmem:[%s2 + $0x10] sm:$0xff]
      %v187 = vld [vmem:[%s2 + $0x18] sm:$0xff]
      %v188 = vld [vmem:[%s2 + $0x20] sm:$0xff]
      %v189 = vld [vmem:[%s2 + $0x28] sm:$0xff]
      %v190 = vld [vmem:[%s2 + $0x30] sm:$0xff]
      %v191 = vld [vmem:[%s2 + $0x38] sm:$0xff]
      %193 = vset.pattern.permute.xlu0 0
      %194 = vperm.xlu0 %193, %v184
      %v195 = vpop.permute.xlu0 %194
      %198 = vset.pattern.permute.xlu0 0
      %199 = vperm.xlu0 %198, %v185
      %v200 = vpop.permute.xlu0 %199
      %203 = vset.pattern.permute.xlu0 0
      %204 = vperm.xlu0 %203, %v186
      %v205 = vpop.permute.xlu0 %204
      %208 = vset.pattern.permute.xlu0 0
      %209 = vperm.xlu0 %208, %v187
      %v210 = vpop.permute.xlu0 %209
      %213 = vset.pattern.permute.xlu0 0
      %214 = vperm.xlu0 %213, %v188
      %v215 = vpop.permute.xlu0 %214
      %218 = vset.pattern.permute.xlu0 0
      %219 = vperm.xlu0 %218, %v189
      %v220 = vpop.permute.xlu0 %219
      %223 = vset.pattern.permute.xlu0 0
      %224 = vperm.xlu0 %223, %v190
      %v225 = vpop.permute.xlu0 %224
      %228 = vset.pattern.permute.xlu0 0
      %229 = vperm.xlu0 %228, %v191
      %v230 = vpop.permute.xlu0 %229
      %v240 = vunpack.c.l.b16 %v172
      %v241 = vunpack.c.l.b16 %v173
      %v242 = vunpack.c.l.b16 %v174
      %v243 = vunpack.c.l.b16 %v175
      %v244 = vunpack.c.l.b16 %v176
      %v245 = vunpack.c.l.b16 %v177
      %v246 = vunpack.c.l.b16 %v178
      %v247 = vunpack.c.l.b16 %v179
      %v248 = vpack.c.b16 %v241, %v240
      %v249 = vpack.c.b16 %v243, %v242
      %v250 = vpack.c.b16 %v245, %v244
      %v251 = vpack.c.b16 %v247, %v246
      %v256 = vunpack.c.l.b16 %v180
      %v257 = vunpack.c.h.b16 %v180
      %v258 = vunpack.c.l.b16 %v181
      %v259 = vunpack.c.h.b16 %v181
      %v260 = vunpack.c.l.b16 %v182
      %v261 = vunpack.c.h.b16 %v182
      %v262 = vunpack.c.l.b16 %v183
      %v263 = vunpack.c.h.b16 %v183
      %v264 = vpack.c.b16 %v258, %v256
      %v265 = vpack.c.b16 %v259, %v257
      %v266 = vpack.c.b16 %v262, %v260
      %v267 = vpack.c.b16 %v263, %v261
      %vm270 = vcmask 220160
      %v272 = vsel %vm270, %v248, 0
      %v275 = vsel %vm270, %v249, 0
      %v278 = vsel %vm270, %v250, 0
      %v281 = vsel %vm270, %v251, 0
      %vm283 = vcmask 1044480
      %vm284 = vcmask 1045504
      %v285 = vsel %vm283, 4294967295, 65535
      %v286 = vsel %vm284, %v285, 0
      %v288 = vand.u32 %v266, %v286
      %v291 = vand.u32 %v267, %v286
      %293 = vmatprep.subr.bf16.mxu0 %v265
      %294 = vmatpush1.bf16.msra.mxu0 %v264
      %295 = vmatprep.subr.bf16.mxu0 %v291
      %296 = vmatpush1.bf16.msra.mxu0 %v288
      %297 = vmatprep.subr.bf16.mxu0 0
      %298 = vmatpush1.bf16.msra.mxu0 0
      %299 = vmatprep.subr.bf16.mxu0 0
      %300 = vmatpush1.bf16.msra.mxu0 0
      %301 = vmatprep.subr.bf16.mxu0 0
      %302 = vmatpush1.bf16.msra.mxu0 0
      %303 = vmatprep.subr.bf16.mxu0 0
      %304 = vmatpush1.bf16.msra.mxu0 0
      %305 = vmatprep.subr.bf16.mxu0 0
      %306 = vmatpush1.bf16.msra.mxu0 0
      %307 = vmatprep.subr.bf16.mxu0 0
      %308 = vmatpush1.bf16.msra.mxu0 0
      %309 = vmatprep.subr.bf16.mxu0 0
      %310 = vmatpush1.bf16.msra.mxu0 0
      %311 = vmatprep.subr.bf16.mxu0 0
      %312 = vmatpush1.bf16.msra.mxu0 0
      %313 = vmatprep.subr.bf16.mxu0 0
      %314 = vmatpush1.bf16.msra.mxu0 0
      %315 = vmatprep.subr.bf16.mxu0 0
      %316 = vmatpush1.bf16.msra.mxu0 0
      %317 = vmatprep.subr.bf16.mxu0 0
      %318 = vmatpush1.bf16.msra.mxu0 0
      %319 = vmatprep.subr.bf16.mxu0 0
      %320 = vmatpush1.bf16.msra.mxu0 0
      %321 = vmatprep.subr.bf16.mxu0 0
      %322 = vmatpush1.bf16.msra.mxu0 0
      %323 = vmatprep.subr.bf16.mxu0 0
      %324 = vmatpush1.bf16.msra.mxu0 0
      %325 = vmatprep.mubr.bf16.mxu0 0
      %326 = vmatmul.mubr.bf16.gmra.mrb[0].mxu0 %v272
      %v327 = vpop.f32.mrb[0].mxu0
      %v328 = vadd.f32 %v195, %v327
      %v329 = vpop.f32.mrb[0].mxu0
      %v330 = vadd.f32 %v195, %v329
      %v331 = vpop.f32.mrb[0].mxu0
      %v332 = vadd.f32 %v200, %v331
      %v333 = vpop.f32.mrb[0].mxu0
      %v334 = vadd.f32 %v200, %v333
      %335 = vmatprep.mubr.bf16.mxu0 0
      %336 = vmatmul.mubr.bf16.gmra.mrb[0].mxu0 %v275
      %v337 = vpop.f32.mrb[0].mxu0
      %v338 = vadd.f32 %v205, %v337
      %v339 = vpop.f32.mrb[0].mxu0
      %v340 = vadd.f32 %v205, %v339
      %v341 = vpop.f32.mrb[0].mxu0
      %v342 = vadd.f32 %v210, %v341
      %v343 = vpop.f32.mrb[0].mxu0
      %v344 = vadd.f32 %v210, %v343
      %345 = vmatprep.mubr.bf16.mxu0 0
      %346 = vmatmul.mubr.bf16.gmra.mrb[0].mxu0 %v278
      %v347 = vpop.f32.mrb[0].mxu0
      %v348 = vadd.f32 %v215, %v347
      %v349 = vpop.f32.mrb[0].mxu0
      %v350 = vadd.f32 %v215, %v349
      %v351 = vpop.f32.mrb[0].mxu0
      %v352 = vadd.f32 %v220, %v351
      %v353 = vpop.f32.mrb[0].mxu0
      %v354 = vadd.f32 %v220, %v353
      %355 = vmatprep.mubr.bf16.mxu0 0
      %356 = vmatmul.mubr.bf16.gmra.mrb[0].mxu0 %v281
      %v357 = vpop.f32.mrb[0].mxu0
      %v358 = vadd.f32 %v225, %v357
      %v359 = vpop.f32.mrb[0].mxu0
      %v360 = vadd.f32 %v225, %v359
      %v361 = vpop.f32.mrb[0].mxu0
      %v362 = vadd.f32 %v230, %v361
      %v363 = vpop.f32.mrb[0].mxu0
      %v364 = vadd.f32 %v230, %v363
      %365 = vdwg.mxu0
      %v366 = vmax.f32 %v328, 0.0
      %v367 = vmax.f32 %v330, 0.0
      %v368 = vmax.f32 %v332, 0.0
      %v369 = vmax.f32 %v334, 0.0
      %v370 = vmax.f32 %v338, 0.0
      %v371 = vmax.f32 %v340, 0.0
      %v372 = vmax.f32 %v342, 0.0
      %v373 = vmax.f32 %v344, 0.0
      %v374 = vmax.f32 %v348, 0.0
      %v375 = vmax.f32 %v350, 0.0
      %v376 = vmax.f32 %v352, 0.0
      %v377 = vmax.f32 %v354, 0.0
      %v378 = vmax.f32 %v358, 0.0
      %v379 = vmax.f32 %v360, 0.0
      %v380 = vmax.f32 %v362, 0.0
      %v381 = vmax.f32 %v364, 0.0
      %v382 = vpack.c.bf16 %v368, %v366
      %v383 = vpack.c.bf16 %v369, %v367
      %v384 = vpack.c.bf16 %v372, %v370
      %v385 = vpack.c.bf16 %v373, %v371
      %v386 = vpack.c.bf16 %v376, %v374
      %v387 = vpack.c.bf16 %v377, %v375
      %v388 = vpack.c.bf16 %v380, %v378
      %v389 = vpack.c.bf16 %v381, %v379
      %v398 = vunpack.c.l.b16 %v382
      %v399 = vunpack.c.l.b16 %v383
      %v400 = vunpack.c.h.b16 %v382
      %v401 = vunpack.c.h.b16 %v383
      %v402 = vunpack.c.l.b16 %v384
      %v403 = vunpack.c.l.b16 %v385
      %v404 = vunpack.c.h.b16 %v384
      %v405 = vunpack.c.h.b16 %v385
      %v406 = vunpack.c.l.b16 %v386
      %v407 = vunpack.c.l.b16 %v387
      %v408 = vunpack.c.h.b16 %v386
      %v409 = vunpack.c.h.b16 %v387
      %v410 = vunpack.c.l.b16 %v388
      %v411 = vunpack.c.l.b16 %v389
      %v412 = vunpack.c.h.b16 %v388
      %v413 = vunpack.c.h.b16 %v389
      %v414 = vpack.c.b16 %v399, %v398
      %v415 = vpack.c.b16 %v401, %v400
      %v416 = vpack.c.b16 %v403, %v402
      %v417 = vpack.c.b16 %v405, %v404
      %v418 = vpack.c.b16 %v407, %v406
      %v419 = vpack.c.b16 %v409, %v408
      %v420 = vpack.c.b16 %v411, %v410
      %v421 = vpack.c.b16 %v413, %v412
      %430 = vst [vmem:[%s170] sm:$0xff] %v414
      %431 = vst [vmem:[%s170 + $0x8] sm:$0xff] %v415
      %432 = vst [vmem:[%s170 + $0x10] sm:$0xff] %v416
      %433 = vst [vmem:[%s170 + $0x18] sm:$0xff] %v417
      %434 = vst [vmem:[%s170 + $0x20] sm:$0xff] %v418
      %435 = vst [vmem:[%s170 + $0x28] sm:$0xff] %v419
      %436 = vst [vmem:[%s170 + $0x30] sm:$0xff] %v420
      %437 = vst [vmem:[%s170 + $0x38] sm:$0xff] %v421
      %p438 = scmp.lt.s32.totalorder %s14, 1
      %s439 = scalar_select %p438, %s14, 1
      %s440 = smul.addr %s439, 16
      %s441 = smul.addr %s440, 4
      %s442 = scalar_lea.vmem %s3, %s441
      // Predicated region
      $region33: #{network_forward.2} parent=31 // pred_check
        %p443 = pneg %p100
      $region34: #{network_forward.2} parent=31 // pred_check_branch
        %445 = sbr.rel (%p443) target = $region36
      $region35: #{network_forward.2} parent=31 // pred_region
        _
      $region36: #{network_forward.2} parent=31 // pred_fallthru
        _
    $region32: #{network_forward.2} parent=5 // pred_fallthru
      _
    %p446 = scmp.le.s32.totalorder 2, %s9
    // Predicated region
    $region37: #{network_forward.2} parent=5 // pred_check
      %p447 = pneg %p446
    $region38: #{network_forward.2} parent=5 // pred_check_branch
      %449 = sbr.rel (%p447) target = $region40
    $region39: #{network_forward.2} parent=5 // pred_region
      %s450 = ssub.s32 %s9, 2
      // Predicated region
      $region41: #{network_forward.2} parent=39 // pred_check
        %p451 = pneg %p106
      $region42: #{network_forward.2} parent=39 // pred_check_branch
        %453 = sbr.rel (%p451) target = $region44
      $region43: #{network_forward.2} parent=39 // pred_region
        %p454 = scmp.lt.s32.totalorder %s15, 1
        %s455 = scalar_select %p454, %s15, 1
        %s456 = smul.addr %s455, 16
        %s457 = smul.addr %s456, 4
        %s458 = scalar_lea.vmem %s3, %s457
      $region44: #{network_forward.2} parent=39 // pred_fallthru
        _
    $region40: #{network_forward.2} parent=5 // pred_fallthru
      _
  $region6: #{network_forward.2} parent=0 // loop_footer
    %s13 = sadd.s32 1, %s9
  $region7: #{network_forward.2} parent=0 // loop_footer_branch
    %8 = sbr.rel target = $region3
  $region8: #{network_forward.2} parent=0 // loop_exit
    _

// kernel: network_forward.3
$region0: #{network_forward.3}
  #allocation0 [shape = 'u32[]', space=smem, size = 0x4, offset = 0x4, fixed_abs, tag = 'smem constant byte address 0x4 - core index']
  #allocation1 [shape = 'u32[144,128]{1,0:T(1,128)}', space=vmem, size = 0x12000, scoped, tag = 'internal scratch']
  #allocation2 [shape = 'f32[2,64]{1,0:T(2,128)}', space=vmem, size = 0x400, scoped, tag = 'scratch operand']
  %s0 = inlined_call_operand.vmem [shape: bf16[2,16384], index: 0, kind: input, shape index: {}]
  %s1 = inlined_call_operand.vmem [shape: bf16[2,16384,64], index: 1, kind: input, shape index: {}]
  %s2 = inlined_call_operand.vmem [shape: f32[2,1,64], index: 2, kind: input, shape index: {}]
  %s3 = inlined_call_operand.vmem [shape: f32[128,10], index: 3, kind: input, shape index: {}]
  %s4 = inlined_call_operand.vmem [shape: f32[2,2,10], index: 4, kind: output, shape index: {}]
  %s5 = sld [smem:[#allocation0]]
  $region57: #{network_forward.3} parent=0
    _
  %s7 = ssub.s32 1, %s5
  %s8 = scalar_select 0, %s7, %s5
  loop: start=0, step=1, limit=6
  $region2: #{network_forward.3} parent=0 // loop_pre_header
    _
  $region3: #{network_forward.3} parent=0 // loop_header
    %s10 = sphi 0, %s14
    %p11 = scmp.ge.s32.totalorder %s10, 6
    %s17 = sphi 0, %s29
    %s18 = sphi 0, %s25
    %s19 = sphi 0, %s17
    %s20 = sphi 0, %s18
    %s21 = sphi 0, %s19
    %s22 = sphi 0, %s20
    %s32 = sphi 0, %s34
    %s35 = sphi 0, %s32
    %s36 = sphi 0, %s35
    %s52 = sphi 0, %s36
    %s60 = sphi 0, %s62
    %s63 = sphi 0, %s60
    %s64 = sphi 0, %s63
    %s80 = sphi 0, %s64
    %s86 = sphi 0, %s88
    %s89 = sphi 0, %s86
    %s90 = sphi 0, %s89
    %s106 = sphi 0, %s90
    %s112 = sphi 0, %s114
    %s115 = sphi 0, %s112
    %s116 = sphi 0, %s115
    %s132 = sphi 0, %s116
    %s138 = sphi 0, %s140
    %s141 = sphi 0, %s138
    %s142 = sphi 0, %s141
    %s158 = sphi 0, %s142
  $region4: #{network_forward.3} parent=0 // loop_header_branch
    %13 = sbr.rel (%p11) target = $region8
  $region5: #{network_forward.3} parent=0 // loop_body
    %s15 = ssub.s32 %s10, 1
    %s16 = ssub.s32 %s10, 2
    %s23 = sadd.s32 1, %s18
    %p24 = scmp.ge.s32.totalorder %s23, 2
    %s25 = scalar_select %p24, 0, %s23
    %s26 = sadd.s32 1, %s17
    %s27 = scalar_select %p24, %s26, %s17
    %p28 = scmp.ge.s32.totalorder %s27, 2
    %s29 = scalar_select %p28, 0, %s27
    %s30 = ssub.s32 %s18, %s25
    %p31 = scmp.eq.s32.totalorder %s30, 0
    %s33 = sadd.s32 %s32, 1
    %s34 = scalar_select %p31, %s32, %s33
    %p37 = pneg %p31
    %p38 = scmp.eq.s32.totalorder %s10, 3
    %p39 = por %p37, %p38
    %p40 = scmp.ne.s32.totalorder %s32, %s35
    %p41 = scmp.eq.s32.totalorder %s10, 0
    %p42 = por %p40, %p41
    %p43 = scmp.ne.s32.totalorder %s32, %s35
    %p44 = scmp.eq.s32.totalorder %s15, 3
    %p45 = por %p43, %p44
    %p46 = scmp.ne.s32.totalorder %s35, %s36
    %p47 = scmp.eq.s32.totalorder %s15, 0
    %p48 = por %p46, %p47
    %p49 = scmp.ne.s32.totalorder %s35, %s36
    %p50 = scmp.eq.s32.totalorder %s16, 3
    %p51 = por %p49, %p50
    %p53 = scmp.ne.s32.totalorder %s36, %s52
    %p54 = scmp.eq.s32.totalorder %s16, 0
    %p55 = por %p53, %p54
    %s56 = ssub.s32 %s17, %s29
    %s57 = ssub.s32 %s18, %s25
    %s58 = sor.u32 %s56, %s57
    %p59 = scmp.eq.s32.totalorder %s58, 0
    %s61 = sadd.s32 %s60, 1
    %s62 = scalar_select %p59, %s60, %s61
    %p65 = pneg %p59
    %p66 = scmp.eq.s32.totalorder %s10, 3
    %p67 = por %p65, %p66
    %p68 = scmp.ne.s32.totalorder %s60, %s63
    %p69 = scmp.eq.s32.totalorder %s10, 0
    %p70 = por %p68, %p69
    %p71 = scmp.ne.s32.totalorder %s60, %s63
    %p72 = scmp.eq.s32.totalorder %s15, 3
    %p73 = por %p71, %p72
    %p74 = scmp.ne.s32.totalorder %s63, %s64
    %p75 = scmp.eq.s32.totalorder %s15, 0
    %p76 = por %p74, %p75
    %p77 = scmp.ne.s32.totalorder %s63, %s64
    %p78 = scmp.eq.s32.totalorder %s16, 3
    %p79 = por %p77, %p78
    %p81 = scmp.ne.s32.totalorder %s64, %s80
    %p82 = scmp.eq.s32.totalorder %s16, 0
    %p83 = por %p81, %p82
    %s84 = ssub.s32 %s17, %s29
    %p85 = scmp.eq.s32.totalorder %s84, 0
    %s87 = sadd.s32 %s86, 1
    %s88 = scalar_select %p85, %s86, %s87
    %p91 = pneg %p85
    %p92 = scmp.eq.s32.totalorder %s10, 3
    %p93 = por %p91, %p92
    %p94 = scmp.ne.s32.totalorder %s86, %s89
    %p95 = scmp.eq.s32.totalorder %s10, 0
    %p96 = por %p94, %p95
    %p97 = scmp.ne.s32.totalorder %s86, %s89
    %p98 = scmp.eq.s32.totalorder %s15, 3
    %p99 = por %p97, %p98
    %p100 = scmp.ne.s32.totalorder %s89, %s90
    %p101 = scmp.eq.s32.totalorder %s15, 0
    %p102 = por %p100, %p101
    %p103 = scmp.ne.s32.totalorder %s89, %s90
    %p104 = scmp.eq.s32.totalorder %s16, 3
    %p105 = por %p103, %p104
    %p107 = scmp.ne.s32.totalorder %s90, %s106
    %p108 = scmp.eq.s32.totalorder %s16, 0
    %p109 = por %p107, %p108
    %s110 = ssub.s32 %s17, %s29
    %p111 = scmp.eq.s32.totalorder %s110, 0
    %s113 = sadd.s32 %s112, 1
    %s114 = scalar_select %p111, %s112, %s113
    %p117 = pneg %p111
    %p118 = scmp.eq.s32.totalorder %s10, 3
    %p119 = por %p117, %p118
    %p120 = scmp.ne.s32.totalorder %s112, %s115
    %p121 = scmp.eq.s32.totalorder %s10, 0
    %p122 = por %p120, %p121
    %p123 = scmp.ne.s32.totalorder %s112, %s115
    %p124 = scmp.eq.s32.totalorder %s15, 3
    %p125 = por %p123, %p124
    %p126 = scmp.ne.s32.totalorder %s115, %s116
    %p127 = scmp.eq.s32.totalorder %s15, 0
    %p128 = por %p126, %p127
    %p129 = scmp.ne.s32.totalorder %s115, %s116
    %p130 = scmp.eq.s32.totalorder %s16, 3
    %p131 = por %p129, %p130
    %p133 = scmp.ne.s32.totalorder %s116, %s132
    %p134 = scmp.eq.s32.totalorder %s16, 0
    %p135 = por %p133, %p134
    %s136 = ssub.s32 %s17, %s29
    %p137 = scmp.eq.s32.totalorder %s136, 0
    %s139 = sadd.s32 %s138, 1
    %s140 = scalar_select %p137, %s138, %s139
    %p143 = pneg %p137
    %p144 = scmp.eq.s32.totalorder %s10, 3
    %p145 = por %p143, %p144
    %p146 = scmp.ne.s32.totalorder %s138, %s141
    %p147 = scmp.eq.s32.totalorder %s10, 0
    %p148 = por %p146, %p147
    %p149 = scmp.ne.s32.totalorder %s138, %s141
    %p150 = scmp.eq.s32.totalorder %s15, 3
    %p151 = por %p149, %p150
    %p152 = scmp.ne.s32.totalorder %s141, %s142
    %p153 = scmp.eq.s32.totalorder %s15, 0
    %p154 = por %p152, %p153
    %p155 = scmp.ne.s32.totalorder %s141, %s142
    %p156 = scmp.eq.s32.totalorder %s16, 3
    %p157 = por %p155, %p156
    %p159 = scmp.ne.s32.totalorder %s142, %s158
    %p160 = scmp.eq.s32.totalorder %s16, 0
    %p161 = por %p159, %p160
    %p162 = scmp.le.s32.totalorder 1, %s10
    %p163 = scmp.lt.s32.totalorder %s10, 5
    %p164 = pnand %p162, %p163
    %p165 = pneg %p164
    // Predicated region
    $region9: #{network_forward.3} parent=5 // pred_check
      _
    $region10: #{network_forward.3} parent=5 // pred_check_branch
      %167 = sbr.rel (%p164) target = $region12
    $region11: #{network_forward.3} parent=5 // pred_region
      %s168 = ssub.s32 %s10, 1
    $region12: #{network_forward.3} parent=5 // pred_fallthru
      _
    %p169 = scmp.lt.s32.totalorder %s10, 4
    // Predicated region
    $region13: #{network_forward.3} parent=5 // pred_check
      %p170 = pneg %p169
    $region14: #{network_forward.3} parent=5 // pred_check_branch
      %172 = sbr.rel (%p170) target = $region16
    $region15: #{network_forward.3} parent=5 // pred_region
      // Predicated region
      $region17: #{network_forward.3} parent=15 // pred_check
        %p173 = pneg %p42
      $region18: #{network_forward.3} parent=15 // pred_check_branch
        %175 = sbr.rel (%p173) target = $region20
      $region19: #{network_forward.3} parent=15 // pred_region
        %s176 = smul.u32 64, %s18
        %p177 = scmp.lt.s32.totalorder %s176, 127
        %s178 = scalar_select %p177, %s176, 127
        %s179 = scalar_lea.vmem %s0, %s178
        %s180 = smul.u32 64, %s18
      $region20: #{network_forward.3} parent=15 // pred_fallthru
        _
      // Predicated region
      $region21: #{network_forward.3} parent=15 // pred_check
        %p181 = pneg %p70
      $region22: #{network_forward.3} parent=15 // pred_check_branch
        %183 = sbr.rel (%p181) target = $region24
      $region23: #{network_forward.3} parent=15 // pred_region
        %s184 = smul.u32 1024, %s18
        %p185 = scmp.lt.s32.totalorder %s17, 1
        %s186 = scalar_select %p185, %s17, 1
        %p187 = scmp.lt.s32.totalorder %s184, 2047
        %s188 = scalar_select %p187, %s184, 2047
        %s189 = smul.addr %s186, 2048
        %s190 = sadd.s32 %s188, %s189
        %s191 = smul.addr %s190, 4
        %s192 = scalar_lea.vmem %s1, %s191
        %s193 = smul.u32 1024, %s18
      $region24: #{network_forward.3} parent=15 // pred_fallthru
        _
      // Predicated region
      $region25: #{network_forward.3} parent=15 // pred_check
        %p194 = pneg %p96
      $region26: #{network_forward.3} parent=15 // pred_check_branch
        %196 = sbr.rel (%p194) target = $region28
      $region27: #{network_forward.3} parent=15 // pred_region
        %p197 = scmp.lt.s32.totalorder %s17, 1
        %s198 = scalar_select %p197, %s17, 1
        %s199 = scalar_lea.vmem %s2, %s198
      $region28: #{network_forward.3} parent=15 // pred_fallthru
        _
      // Predicated region
      $region29: #{network_forward.3} parent=15 // pred_check
        %p200 = pneg %p122
      $region30: #{network_forward.3} parent=15 // pred_check_branch
        %202 = sbr.rel (%p200) target = $region32
      $region31: #{network_forward.3} parent=15 // pred_region
        %s203 = smul.u32 8, %s17
        %p204 = scmp.lt.s32.totalorder %s203, 15
        %s205 = scalar_select %p204, %s203, 15
        %s206 = smul.addr %s205, 8
        %s207 = scalar_lea.vmem %s3, %s206
        %s208 = smul.u32 8, %s17
      $region32: #{network_forward.3} parent=15 // pred_fallthru
        _
    $region16: #{network_forward.3} parent=5 // pred_fallthru
      _
    %p209 = scmp.le.s32.totalorder 1, %s10
    %p210 = scmp.lt.s32.totalorder %s10, 5
    %p211 = pnand %p209, %p210
    %p212 = pneg %p211
    // Predicated region
    $region33: #{network_forward.3} parent=5 // pred_check
      _
    $region34: #{network_forward.3} parent=5 // pred_check_branch
      %214 = sbr.rel (%p211) target = $region36
    $region35: #{network_forward.3} parent=5 // pred_region
      %s215 = ssub.s32 %s10, 1
      %s216 = smul.u32 64, %s20
      %p217 = scmp.lt.s32.totalorder %s216, 127
      %s218 = scalar_select %p217, %s216, 127
      %s219 = scalar_lea.vmem %s0, %s218
      %p220 = pneg %p48
      %p221 = pneg %p45
      %s222 = smul.u32 1024, %s20
      %p223 = scmp.lt.s32.totalorder %s19, 1
      %s224 = scalar_select %p223, %s19, 1
      %p225 = scmp.lt.s32.totalorder %s222, 2047
      %s226 = scalar_select %p225, %s222, 2047
      %s227 = smul.addr %s224, 2048
      %s228 = sadd.s32 %s226, %s227
      %s229 = smul.addr %s228, 4
      %s230 = scalar_lea.vmem %s1, %s229
      %p231 = pneg %p76
      %p232 = pneg %p73
      %p233 = scmp.lt.s32.totalorder %s19, 1
      %s234 = scalar_select %p233, %s19, 1
      %s235 = scalar_lea.vmem %s2, %s234
      %p236 = pneg %p102
      %p237 = pneg %p99
      %s238 = smul.u32 8, %s19
      %p239 = scmp.lt.s32.totalorder %s238, 15
      %s240 = scalar_select %p239, %s238, 15
      %s241 = smul.addr %s240, 8
      %s242 = scalar_lea.vmem %s3, %s241
      %p243 = pneg %p128
      %p244 = pneg %p125
      %p245 = pneg %p154
      %p246 = pneg %p151
      %p247 = scmp.lt.s32.totalorder %s19, 1
      %s248 = scalar_select %p247, %s19, 1
      %s249 = smul.addr %s248, 2
      %s250 = scalar_lea.vmem %s4, %s249
      %s251 = smul.u32 64, %s20
      %p252 = scmp.lt.s32.totalorder %s251, 127
      %s253 = scalar_select %p252, %s251, 127
      %s254 = scalar_lea.vmem %s0, %s253
      %s255 = smul.u32 64, %s20
      %s256 = smul.u32 1024, %s20
      %p257 = scmp.lt.s32.totalorder %s19, 1
      %s258 = scalar_select %p257, %s19, 1
      %p259 = scmp.lt.s32.totalorder %s256, 2047
      %s260 = scalar_select %p259, %s256, 2047
      %s261 = smul.addr %s258, 2048
      %s262 = sadd.s32 %s260, %s261
      %s263 = smul.addr %s262, 4
      %s264 = scalar_lea.vmem %s1, %s263
      %s265 = smul.u32 1024, %s20
      %p266 = scmp.lt.s32.totalorder %s19, 1
      %s267 = scalar_select %p266, %s19, 1
      %s268 = scalar_lea.vmem %s2, %s267
      %s269 = smul.u32 8, %s19
      %p270 = scmp.lt.s32.totalorder %s269, 15
      %s271 = scalar_select %p270, %s269, 15
      %s272 = smul.addr %s271, 8
      %s273 = scalar_lea.vmem %s3, %s272
      %s274 = smul.u32 8, %s19
      %p275 = scmp.lt.s32.totalorder %s19, 1
      %s276 = scalar_select %p275, %s19, 1
      %s277 = smul.addr %s276, 2
      %s278 = scalar_lea.vmem %s4, %s277
      %p280 = scmp.eq.s32.totalorder %s20, 0
      // Predicated region
      $region37: #{network_forward.3} parent=35 // pred_check
        %p281 = pneg %p280
      $region38: #{network_forward.3} parent=35 // pred_check_branch
        %283 = sbr.rel (%p281) target = $region40
      $region39: #{network_forward.3} parent=35 // pred_region
        %vm284 = vcmask 517120
        %285 = vst.msk [vmem:[#allocation2] sm:$0x3] %vm284, 0.0
      $region40: #{network_forward.3} parent=35 // pred_fallthru
        _
      %v286 = vld [vmem:[#allocation2] sm:$0x3]
      %v287 = vld [vmem:[%s254] sm:$0xff]
      %v288 = vld [vmem:[%s254 + $0x8] sm:$0xff]
      %v289 = vld [vmem:[%s254 + $0x10] sm:$0xff]
      %v290 = vld [vmem:[%s254 + $0x18] sm:$0xff]
      %v291 = vld [vmem:[%s254 + $0x20] sm:$0xff]
      %v292 = vld [vmem:[%s254 + $0x28] sm:$0xff]
      %v293 = vld [vmem:[%s254 + $0x30] sm:$0xff]
      %v294 = vld [vmem:[%s254 + $0x38] sm:$0xff]
      %v295 = vld [vmem:[%s264] sm:$0xf]
      %v296 = vld [vmem:[%s264 + $0x4] sm:$0xf]
      %v297 = vld [vmem:[%s264 + $0x8] sm:$0xf]
      %v298 = vld [vmem:[%s264 + $0xc] sm:$0xf]
      %v299 = vld [vmem:[%s264 + $0x10] sm:$0xf]
      %v300 = vld [vmem:[%s264 + $0x14] sm:$0xf]
      %v301 = vld [vmem:[%s264 + $0x18] sm:$0xf]
      %v302 = vld [vmem:[%s264 + $0x1c] sm:$0xf]
      %v303 = vld [vmem:[%s264 + $0x20] sm:$0xf]
      %v304 = vld [vmem:[%s264 + $0x24] sm:$0xf]
      %v305 = vld [vmem:[%s264 + $0x28] sm:$0xf]
      %v306 = vld [vmem:[%s264 + $0x2c] sm:$0xf]
      %v307 = vld [vmem:[%s264 + $0x30] sm:$0xf]
      %v308 = vld [vmem:[%s264 + $0x34] sm:$0xf]
      %v309 = vld [vmem:[%s264 + $0x38] sm:$0xf]
      %v310 = vld [vmem:[%s264 + $0x3c] sm:$0xf]
      %v311 = vld [vmem:[%s264 + $0x40] sm:$0xf]
      %v312 = vld [vmem:[%s264 + $0x44] sm:$0xf]
      %v313 = vld [vmem:[%s264 + $0x48] sm:$0xf]
      %v314 = vld [vmem:[%s264 + $0x4c] sm:$0xf]
      %v315 = vld [vmem:[%s264 + $0x50] sm:$0xf]
      %v316 = vld [vmem:[%s264 + $0x54] sm:$0xf]
      %v317 = vld [vmem:[%s264 + $0x58] sm:$0xf]
      %v318 = vld [vmem:[%s264 + $0x5c] sm:$0xf]
      %v319 = vld [vmem:[%s264 + $0x60] sm:$0xf]
      %v320 = vld [vmem:[%s264 + $0x64] sm:$0xf]
      %v321 = vld [vmem:[%s264 + $0x68] sm:$0xf]
      %v322 = vld [vmem:[%s264 + $0x6c] sm:$0xf]
      %v323 = vld [vmem:[%s264 + $0x70] sm:$0xf]
      %v324 = vld [vmem:[%s264 + $0x74] sm:$0xf]
      %v325 = vld [vmem:[%s264 + $0x78] sm:$0xf]
      %v326 = vld [vmem:[%s264 + $0x7c] sm:$0xf]
      %v327 = vld [vmem:[%s264 + $0x80] sm:$0xf]
      %v328 = vld [vmem:[%s264 + $0x84] sm:$0xf]
      %v329 = vld [vmem:[%s264 + $0x88] sm:$0xf]
      %v330 = vld [vmem:[%s264 + $0x8c] sm:$0xf]
      %v331 = vld [vmem:[%s264 + $0x90] sm:$0xf]
      %v332 = vld [vmem:[%s264 + $0x94] sm:$0xf]
      %v333 = vld [vmem:[%s264 + $0x98] sm:$0xf]
      %v334 = vld [vmem:[%s264 + $0x9c] sm:$0xf]
      %v335 = vld [vmem:[%s264 + $0xa0] sm:$0xf]
      %v336 = vld [vmem:[%s264 + $0xa4] sm:$0xf]
      %v337 = vld [vmem:[%s264 + $0xa8] sm:$0xf]
      %v338 = vld [vmem:[%s264 + $0xac] sm:$0xf]
      %v339 = vld [vmem:[%s264 + $0xb0] sm:$0xf]
      %v340 = vld [vmem:[%s264 + $0xb4] sm:$0xf]
      %v341 = vld [vmem:[%s264 + $0xb8] sm:$0xf]
      %v342 = vld [vmem:[%s264 + $0xbc] sm:$0xf]
      %v343 = vld [vmem:[%s264 + $0xc0] sm:$0xf]
      %v344 = vld [vmem:[%s264 + $0xc4] sm:$0xf]
      %v345 = vld [vmem:[%s264 + $0xc8] sm:$0xf]
      %v346 = vld [vmem:[%s264 + $0xcc] sm:$0xf]
      %v347 = vld [vmem:[%s264 + $0xd0] sm:$0xf]
      %v348 = vld [vmem:[%s264 + $0xd4] sm:$0xf]
      %v349 = vld [vmem:[%s264 + $0xd8] sm:$0xf]
      %v350 = vld [vmem:[%s264 + $0xdc] sm:$0xf]
      %v351 = vld [vmem:[%s264 + $0xe0] sm:$0xf]
      %v352 = vld [vmem:[%s264 + $0xe4] sm:$0xf]
      %v353 = vld [vmem:[%s264 + $0xe8] sm:$0xf]
      %v354 = vld [vmem:[%s264 + $0xec] sm:$0xf]
      %v355 = vld [vmem:[%s264 + $0xf0] sm:$0xf]
      %v356 = vld [vmem:[%s264 + $0xf4] sm:$0xf]
      %v357 = vld [vmem:[%s264 + $0xf8] sm:$0xf]
      %v358 = vld [vmem:[%s264 + $0xfc] sm:$0xf]
      %v359 = vld [vmem:[%s264 + $0x100] sm:$0xf]
      %v360 = vld [vmem:[%s264 + $0x104] sm:$0xf]
      %v361 = vld [vmem:[%s264 + $0x108] sm:$0xf]
      %v362 = vld [vmem:[%s264 + $0x10c] sm:$0xf]
      %v363 = vld [vmem:[%s264 + $0x110] sm:$0xf]
      %v364 = vld [vmem:[%s264 + $0x114] sm:$0xf]
      %v365 = vld [vmem:[%s264 + $0x118] sm:$0xf]
      %v366 = vld [vmem:[%s264 + $0x11c] sm:$0xf]
      %v367 = vld [vmem:[%s264 + $0x120] sm:$0xf]
      %v368 = vld [vmem:[%s264 + $0x124] sm:$0xf]
      %v369 = vld [vmem:[%s264 + $0x128] sm:$0xf]
      %v370 = vld [vmem:[%s264 + $0x12c] sm:$0xf]
      %v371 = vld [vmem:[%s264 + $0x130] sm:$0xf]
      %v372 = vld [vmem:[%s264 + $0x134] sm:$0xf]
      %v373 = vld [vmem:[%s264 + $0x138] sm:$0xf]
      %v374 = vld [vmem:[%s264 + $0x13c] sm:$0xf]
      %v375 = vld [vmem:[%s264 + $0x140] sm:$0xf]
      %v376 = vld [vmem:[%s264 + $0x144] sm:$0xf]
      %v377 = vld [vmem:[%s264 + $0x148] sm:$0xf]
      %v378 = vld [vmem:[%s264 + $0x14c] sm:$0xf]
      %v379 = vld [vmem:[%s264 + $0x150] sm:$0xf]
      %v380 = vld [vmem:[%s264 + $0x154] sm:$0xf]
      %v381 = vld [vmem:[%s264 + $0x158] sm:$0xf]
      %v382 = vld [vmem:[%s264 + $0x15c] sm:$0xf]
      %v383 = vld [vmem:[%s264 + $0x160] sm:$0xf]
      %v384 = vld [vmem:[%s264 + $0x164] sm:$0xf]
      %v385 = vld [vmem:[%s264 + $0x168] sm:$0xf]
      %v386 = vld [vmem:[%s264 + $0x16c] sm:$0xf]
      %v387 = vld [vmem:[%s264 + $0x170] sm:$0xf]
      %v388 = vld [vmem:[%s264 + $0x174] sm:$0xf]
      %v389 = vld [vmem:[%s264 + $0x178] sm:$0xf]
      %v390 = vld [vmem:[%s264 + $0x17c] sm:$0xf]
      %v391 = vld [vmem:[%s264 + $0x180] sm:$0xf]
      %v392 = vld [vmem:[%s264 + $0x184] sm:$0xf]
      %v393 = vld [vmem:[%s264 + $0x188] sm:$0xf]
      %v394 = vld [vmem:[%s264 + $0x18c] sm:$0xf]
      %v395 = vld [vmem:[%s264 + $0x190] sm:$0xf]
      %v396 = vld [vmem:[%s264 + $0x194] sm:$0xf]
      %v397 = vld [vmem:[%s264 + $0x198] sm:$0xf]
      %v398 = vld [vmem:[%s264 + $0x19c] sm:$0xf]
      %v399 = vld [vmem:[%s264 + $0x1a0] sm:$0xf]
      %v400 = vld [vmem:[%s264 + $0x1a4] sm:$0xf]
      %v401 = vld [vmem:[%s264 + $0x1a8] sm:$0xf]
      %v402 = vld [vmem:[%s264 + $0x1ac] sm:$0xf]
      %v403 = vld [vmem:[%s264 + $0x1b0] sm:$0xf]
      %v404 = vld [vmem:[%s264 + $0x1b4] sm:$0xf]
      %v405 = vld [vmem:[%s264 + $0x1b8] sm:$0xf]
      %v406 = vld [vmem:[%s264 + $0x1bc] sm:$0xf]
      %v407 = vld [vmem:[%s264 + $0x1c0] sm:$0xf]
      %v408 = vld [vmem:[%s264 + $0x1c4] sm:$0xf]
      %v409 = vld [vmem:[%s264 + $0x1c8] sm:$0xf]
      %v410 = vld [vmem:[%s264 + $0x1cc] sm:$0xf]
      %v411 = vld [vmem:[%s264 + $0x1d0] sm:$0xf]
      %v412 = vld [vmem:[%s264 + $0x1d4] sm:$0xf]
      %v413 = vld [vmem:[%s264 + $0x1d8] sm:$0xf]
      %v414 = vld [vmem:[%s264 + $0x1dc] sm:$0xf]
      %v415 = vld [vmem:[%s264 + $0x1e0] sm:$0xf]
      %v416 = vld [vmem:[%s264 + $0x1e4] sm:$0xf]
      %v417 = vld [vmem:[%s264 + $0x1e8] sm:$0xf]
      %v418 = vld [vmem:[%s264 + $0x1ec] sm:$0xf]
      %v419 = vld [vmem:[%s264 + $0x1f0] sm:$0xf]
      %v420 = vld [vmem:[%s264 + $0x1f4] sm:$0xf]
      %v421 = vld [vmem:[%s264 + $0x1f8] sm:$0xf]
      %v422 = vld [vmem:[%s264 + $0x1fc] sm:$0xf]
      %v423 = vld [vmem:[%s264 + $0x200] sm:$0xf]
      %v424 = vld [vmem:[%s264 + $0x204] sm:$0xf]
      %v425 = vld [vmem:[%s264 + $0x208] sm:$0xf]
      %v426 = vld [vmem:[%s264 + $0x20c] sm:$0xf]
      %v427 = vld [vmem:[%s264 + $0x210] sm:$0xf]
      %v428 = vld [vmem:[%s264 + $0x214] sm:$0xf]
      %v429 = vld [vmem:[%s264 + $0x218] sm:$0xf]
      %v430 = vld [vmem:[%s264 + $0x21c] sm:$0xf]
      %v431 = vld [vmem:[%s264 + $0x220] sm:$0xf]
      %v432 = vld [vmem:[%s264 + $0x224] sm:$0xf]
      %v433 = vld [vmem:[%s264 + $0x228] sm:$0xf]
      %v434 = vld [vmem:[%s264 + $0x22c] sm:$0xf]
      %v435 = vld [vmem:[%s264 + $0x230] sm:$0xf]
      %v436 = vld [vmem:[%s264 + $0x234] sm:$0xf]
      %v437 = vld [vmem:[%s264 + $0x238] sm:$0xf]
      %v438 = vld [vmem:[%s264 + $0x23c] sm:$0xf]
      %v439 = vld [vmem:[%s264 + $0x240] sm:$0xf]
      %v440 = vld [vmem:[%s264 + $0x244] sm:$0xf]
      %v441 = vld [vmem:[%s264 + $0x248] sm:$0xf]
      %v442 = vld [vmem:[%s264 + $0x24c] sm:$0xf]
      %v443 = vld [vmem:[%s264 + $0x250] sm:$0xf]
      %v444 = vld [vmem:[%s264 + $0x254] sm:$0xf]
      %v445 = vld [vmem:[%s264 + $0x258] sm:$0xf]
      %v446 = vld [vmem:[%s264 + $0x25c] sm:$0xf]
      %v447 = vld [vmem:[%s264 + $0x260] sm:$0xf]
      %v448 = vld [vmem:[%s264 + $0x264] sm:$0xf]
      %v449 = vld [vmem:[%s264 + $0x268] sm:$0xf]
      %v450 = vld [vmem:[%s264 + $0x26c] sm:$0xf]
      %v451 = vld [vmem:[%s264 + $0x270] sm:$0xf]
      %v452 = vld [vmem:[%s264 + $0x274] sm:$0xf]
      %v453 = vld [vmem:[%s264 + $0x278] sm:$0xf]
      %v454 = vld [vmem:[%s264 + $0x27c] sm:$0xf]
      %v455 = vld [vmem:[%s264 + $0x280] sm:$0xf]
      %v456 = vld [vmem:[%s264 + $0x284] sm:$0xf]
      %v457 = vld [vmem:[%s264 + $0x288] sm:$0xf]
      %v458 = vld [vmem:[%s264 + $0x28c] sm:$0xf]
      %v459 = vld [vmem:[%s264 + $0x290] sm:$0xf]
      %v460 = vld [vmem:[%s264 + $0x294] sm:$0xf]
      %v461 = vld [vmem:[%s264 + $0x298] sm:$0xf]
      %v462 = vld [vmem:[%s264 + $0x29c] sm:$0xf]
      %v463 = vld [vmem:[%s264 + $0x2a0] sm:$0xf]
      %v464 = vld [vmem:[%s264 + $0x2a4] sm:$0xf]
      %v465 = vld [vmem:[%s264 + $0x2a8] sm:$0xf]
      %v466 = vld [vmem:[%s264 + $0x2ac] sm:$0xf]
      %v467 = vld [vmem:[%s264 + $0x2b0] sm:$0xf]
      %v468 = vld [vmem:[%s264 + $0x2b4] sm:$0xf]
      %v469 = vld [vmem:[%s264 + $0x2b8] sm:$0xf]
      %v470 = vld [vmem:[%s264 + $0x2bc] sm:$0xf]
      %v471 = vld [vmem:[%s264 + $0x2c0] sm:$0xf]
      %v472 = vld [vmem:[%s264 + $0x2c4] sm:$0xf]
      %v473 = vld [vmem:[%s264 + $0x2c8] sm:$0xf]
      %v474 = vld [vmem:[%s264 + $0x2cc] sm:$0xf]
      %v475 = vld [vmem:[%s264 + $0x2d0] sm:$0xf]
      %v476 = vld [vmem:[%s264 + $0x2d4] sm:$0xf]
      %v477 = vld [vmem:[%s264 + $0x2d8] sm:$0xf]
      %v478 = vld [vmem:[%s264 + $0x2dc] sm:$0xf]
      %v479 = vld [vmem:[%s264 + $0x2e0] sm:$0xf]
      %v480 = vld [vmem:[%s264 + $0x2e4] sm:$0xf]
      %v481 = vld [vmem:[%s264 + $0x2e8] sm:$0xf]
      %v482 = vld [vmem:[%s264 + $0x2ec] sm:$0xf]
      %v483 = vld [vmem:[%s264 + $0x2f0] sm:$0xf]
      %v484 = vld [vmem:[%s264 + $0x2f4] sm:$0xf]
      %v485 = vld [vmem:[%s264 + $0x2f8] sm:$0xf]
      %v486 = vld [vmem:[%s264 + $0x2fc] sm:$0xf]
      %v487 = vld [vmem:[%s264 + $0x300] sm:$0xf]
      %v488 = vld [vmem:[%s264 + $0x304] sm:$0xf]
      %v489 = vld [vmem:[%s264 + $0x308] sm:$0xf]
      %v490 = vld [vmem:[%s264 + $0x30c] sm:$0xf]
      %v491 = vld [vmem:[%s264 + $0x310] sm:$0xf]
      %v492 = vld [vmem:[%s264 + $0x314] sm:$0xf]
      %v493 = vld [vmem:[%s264 + $0x318] sm:$0xf]
      %v494 = vld [vmem:[%s264 + $0x31c] sm:$0xf]
      %v495 = vld [vmem:[%s264 + $0x320] sm:$0xf]
      %v496 = vld [vmem:[%s264 + $0x324] sm:$0xf]
      %v497 = vld [vmem:[%s264 + $0x328] sm:$0xf]
      %v498 = vld [vmem:[%s264 + $0x32c] sm:$0xf]
      %v499 = vld [vmem:[%s264 + $0x330] sm:$0xf]
      %v500 = vld [vmem:[%s264 + $0x334] sm:$0xf]
      %v501 = vld [vmem:[%s264 + $0x338] sm:$0xf]
      %v502 = vld [vmem:[%s264 + $0x33c] sm:$0xf]
      %v503 = vld [vmem:[%s264 + $0x340] sm:$0xf]
      %v504 = vld [vmem:[%s264 + $0x344] sm:$0xf]
      %v505 = vld [vmem:[%s264 + $0x348] sm:$0xf]
      %v506 = vld [vmem:[%s264 + $0x34c] sm:$0xf]
      %v507 = vld [vmem:[%s264 + $0x350] sm:$0xf]
      %v508 = vld [vmem:[%s264 + $0x354] sm:$0xf]
      %v509 = vld [vmem:[%s264 + $0x358] sm:$0xf]
      %v510 = vld [vmem:[%s264 + $0x35c] sm:$0xf]
      %v511 = vld [vmem:[%s264 + $0x360] sm:$0xf]
      %v512 = vld [vmem:[%s264 + $0x364] sm:$0xf]
      %v513 = vld [vmem:[%s264 + $0x368] sm:$0xf]
      %v514 = vld [vmem:[%s264 + $0x36c] sm:$0xf]
      %v515 = vld [vmem:[%s264 + $0x370] sm:$0xf]
      %v516 = vld [vmem:[%s264 + $0x374] sm:$0xf]
      %v517 = vld [vmem:[%s264 + $0x378] sm:$0xf]
      %v518 = vld [vmem:[%s264 + $0x37c] sm:$0xf]
      %v519 = vld [vmem:[%s264 + $0x380] sm:$0xf]
      %v520 = vld [vmem:[%s264 + $0x384] sm:$0xf]
      %v521 = vld [vmem:[%s264 + $0x388] sm:$0xf]
      %v522 = vld [vmem:[%s264 + $0x38c] sm:$0xf]
      %v523 = vld [vmem:[%s264 + $0x390] sm:$0xf]
      %v524 = vld [vmem:[%s264 + $0x394] sm:$0xf]
      %v525 = vld [vmem:[%s264 + $0x398] sm:$0xf]
      %v526 = vld [vmem:[%s264 + $0x39c] sm:$0xf]
      %v527 = vld [vmem:[%s264 + $0x3a0] sm:$0xf]
      %v528 = vld [vmem:[%s264 + $0x3a4] sm:$0xf]
      %v529 = vld [vmem:[%s264 + $0x3a8] sm:$0xf]
      %v530 = vld [vmem:[%s264 + $0x3ac] sm:$0xf]
      %v531 = vld [vmem:[%s264 + $0x3b0] sm:$0xf]
      %v532 = vld [vmem:[%s264 + $0x3b4] sm:$0xf]
      %v533 = vld [vmem:[%s264 + $0x3b8] sm:$0xf]
      %v534 = vld [vmem:[%s264 + $0x3bc] sm:$0xf]
      %v535 = vld [vmem:[%s264 + $0x3c0] sm:$0xf]
      %v536 = vld [vmem:[%s264 + $0x3c4] sm:$0xf]
      %v537 = vld [vmem:[%s264 + $0x3c8] sm:$0xf]
      %v538 = vld [vmem:[%s264 + $0x3cc] sm:$0xf]
      %v539 = vld [vmem:[%s264 + $0x3d0] sm:$0xf]
      %v540 = vld [vmem:[%s264 + $0x3d4] sm:$0xf]
      %v541 = vld [vmem:[%s264 + $0x3d8] sm:$0xf]
      %v542 = vld [vmem:[%s264 + $0x3dc] sm:$0xf]
      %v543 = vld [vmem:[%s264 + $0x3e0] sm:$0xf]
      %v544 = vld [vmem:[%s264 + $0x3e4] sm:$0xf]
      %v545 = vld [vmem:[%s264 + $0x3e8] sm:$0xf]
      %v546 = vld [vmem:[%s264 + $0x3ec] sm:$0xf]
      %v547 = vld [vmem:[%s264 + $0x3f0] sm:$0xf]
      %v548 = vld [vmem:[%s264 + $0x3f4] sm:$0xf]
      %v549 = vld [vmem:[%s264 + $0x3f8] sm:$0xf]
      %v550 = vld [vmem:[%s264 + $0x3fc] sm:$0xf]
      %v551 = vld [vmem:[%s264 + $0x400] sm:$0xf]
      %v552 = vld [vmem:[%s264 + $0x404] sm:$0xf]
      %v553 = vld [vmem:[%s264 + $0x408] sm:$0xf]
      %v554 = vld [vmem:[%s264 + $0x40c] sm:$0xf]
      %v555 = vld [vmem:[%s264 + $0x410] sm:$0xf]
      %v556 = vld [vmem:[%s264 + $0x414] sm:$0xf]
      %v557 = vld [vmem:[%s264 + $0x418] sm:$0xf]
      %v558 = vld [vmem:[%s264 + $0x41c] sm:$0xf]
      %v559 = vld [vmem:[%s264 + $0x420] sm:$0xf]
      %v560 = vld [vmem:[%s264 + $0x424] sm:$0xf]
      %v561 = vld [vmem:[%s264 + $0x428] sm:$0xf]
      %v562 = vld [vmem:[%s264 + $0x42c] sm:$0xf]
      %v563 = vld [vmem:[%s264 + $0x430] sm:$0xf]
      %v564 = vld [vmem:[%s264 + $0x434] sm:$0xf]
      %v565 = vld [vmem:[%s264 + $0x438] sm:$0xf]
      %v566 = vld [vmem:[%s264 + $0x43c] sm:$0xf]
      %v567 = vld [vmem:[%s264 + $0x440] sm:$0xf]
      %v568 = vld [vmem:[%s264 + $0x444] sm:$0xf]
      %v569 = vld [vmem:[%s264 + $0x448] sm:$0xf]
      %v570 = vld [vmem:[%s264 + $0x44c] sm:$0xf]
      %v571 = vld [vmem:[%s264 + $0x450] sm:$0xf]
      %v572 = vld [vmem:[%s264 + $0x454] sm:$0xf]
      %v573 = vld [vmem:[%s264 + $0x458] sm:$0xf]
      %v574 = vld [vmem:[%s264 + $0x45c] sm:$0xf]
      %v575 = vld [vmem:[%s264 + $0x460] sm:$0xf]
      %v576 = vld [vmem:[%s264 + $0x464] sm:$0xf]
      %v577 = vld [vmem:[%s264 + $0x468] sm:$0xf]
      %v578 = vld [vmem:[%s264 + $0x46c] sm:$0xf]
      %v579 = vld [vmem:[%s264 + $0x470] sm:$0xf]
      %v580 = vld [vmem:[%s264 + $0x474] sm:$0xf]
      %v581 = vld [vmem:[%s264 + $0x478] sm:$0xf]
      %v582 = vld [vmem:[%s264 + $0x47c] sm:$0xf]
      %v583 = vld [vmem:[%s264 + $0x480] sm:$0xf]
      %v584 = vld [vmem:[%s264 + $0x484] sm:$0xf]
      %v585 = vld [vmem:[%s264 + $0x488] sm:$0xf]
      %v586 = vld [vmem:[%s264 + $0x48c] sm:$0xf]
      %v587 = vld [vmem:[%s264 + $0x490] sm:$0xf]
      %v588 = vld [vmem:[%s264 + $0x494] sm:$0xf]
      %v589 = vld [vmem:[%s264 + $0x498] sm:$0xf]
      %v590 = vld [vmem:[%s264 + $0x49c] sm:$0xf]
      %v591 = vld [vmem:[%s264 + $0x4a0] sm:$0xf]
      %v592 = vld [vmem:[%s264 + $0x4a4] sm:$0xf]
      %v593 = vld [vmem:[%s264 + $0x4a8] sm:$0xf]
      %v594 = vld [vmem:[%s264 + $0x4ac] sm:$0xf]
      %v595 = vld [vmem:[%s264 + $0x4b0] sm:$0xf]
      %v596 = vld [vmem:[%s264 + $0x4b4] sm:$0xf]
      %v597 = vld [vmem:[%s264 + $0x4b8] sm:$0xf]
      %v598 = vld [vmem:[%s264 + $0x4bc] sm:$0xf]
      %v599 = vld [vmem:[%s264 + $0x4c0] sm:$0xf]
      %v600 = vld [vmem:[%s264 + $0x4c4] sm:$0xf]
      %v601 = vld [vmem:[%s264 + $0x4c8] sm:$0xf]
      %v602 = vld [vmem:[%s264 + $0x4cc] sm:$0xf]
      %v603 = vld [vmem:[%s264 + $0x4d0] sm:$0xf]
      %v604 = vld [vmem:[%s264 + $0x4d4] sm:$0xf]
      %v605 = vld [vmem:[%s264 + $0x4d8] sm:$0xf]
      %v606 = vld [vmem:[%s264 + $0x4dc] sm:$0xf]
      %v607 = vld [vmem:[%s264 + $0x4e0] sm:$0xf]
      %v608 = vld [vmem:[%s264 + $0x4e4] sm:$0xf]
      %v609 = vld [vmem:[%s264 + $0x4e8] sm:$0xf]
      %v610 = vld [vmem:[%s264 + $0x4ec] sm:$0xf]
      %v611 = vld [vmem:[%s264 + $0x4f0] sm:$0xf]
      %v612 = vld [vmem:[%s264 + $0x4f4] sm:$0xf]
      %v613 = vld [vmem:[%s264 + $0x4f8] sm:$0xf]
      %v614 = vld [vmem:[%s264 + $0x4fc] sm:$0xf]
      %v615 = vld [vmem:[%s264 + $0x500] sm:$0xf]
      %v616 = vld [vmem:[%s264 + $0x504] sm:$0xf]
      %v617 = vld [vmem:[%s264 + $0x508] sm:$0xf]
      %v618 = vld [vmem:[%s264 + $0x50c] sm:$0xf]
      %v619 = vld [vmem:[%s264 + $0x510] sm:$0xf]
      %v620 = vld [vmem:[%s264 + $0x514] sm:$0xf]
      %v621 = vld [vmem:[%s264 + $0x518] sm:$0xf]
      %v622 = vld [vmem:[%s264 + $0x51c] sm:$0xf]
      %v623 = vld [vmem:[%s264 + $0x520] sm:$0xf]
      %v624 = vld [vmem:[%s264 + $0x524] sm:$0xf]
      %v625 = vld [vmem:[%s264 + $0x528] sm:$0xf]
      %v626 = vld [vmem:[%s264 + $0x52c] sm:$0xf]
      %v627 = vld [vmem:[%s264 + $0x530] sm:$0xf]
      %v628 = vld [vmem:[%s264 + $0x534] sm:$0xf]
      %v629 = vld [vmem:[%s264 + $0x538] sm:$0xf]
      %v630 = vld [vmem:[%s264 + $0x53c] sm:$0xf]
      %v631 = vld [vmem:[%s264 + $0x540] sm:$0xf]
      %v632 = vld [vmem:[%s264 + $0x544] sm:$0xf]
      %v633 = vld [vmem:[%s264 + $0x548] sm:$0xf]
      %v634 = vld [vmem:[%s264 + $0x54c] sm:$0xf]
      %v635 = vld [vmem:[%s264 + $0x550] sm:$0xf]
      %v636 = vld [vmem:[%s264 + $0x554] sm:$0xf]
      %v637 = vld [vmem:[%s264 + $0x558] sm:$0xf]
      %v638 = vld [vmem:[%s264 + $0x55c] sm:$0xf]
      %v639 = vld [vmem:[%s264 + $0x560] sm:$0xf]
      %v640 = vld [vmem:[%s264 + $0x564] sm:$0xf]
      %v641 = vld [vmem:[%s264 + $0x568] sm:$0xf]
      %v642 = vld [vmem:[%s264 + $0x56c] sm:$0xf]
      %v643 = vld [vmem:[%s264 + $0x570] sm:$0xf]
      %v644 = vld [vmem:[%s264 + $0x574] sm:$0xf]
      %v645 = vld [vmem:[%s264 + $0x578] sm:$0xf]
      %v646 = vld [vmem:[%s264 + $0x57c] sm:$0xf]
      %v647 = vld [vmem:[%s264 + $0x580] sm:$0xf]
      %v648 = vld [vmem:[%s264 + $0x584] sm:$0xf]
      %v649 = vld [vmem:[%s264 + $0x588] sm:$0xf]
      %v650 = vld [vmem:[%s264 + $0x58c] sm:$0xf]
      %v651 = vld [vmem:[%s264 + $0x590] sm:$0xf]
      %v652 = vld [vmem:[%s264 + $0x594] sm:$0xf]
      %v653 = vld [vmem:[%s264 + $0x598] sm:$0xf]
      %v654 = vld [vmem:[%s264 + $0x59c] sm:$0xf]
      %v655 = vld [vmem:[%s264 + $0x5a0] sm:$0xf]
      %v656 = vld [vmem:[%s264 + $0x5a4] sm:$0xf]
      %v657 = vld [vmem:[%s264 + $0x5a8] sm:$0xf]
      %v658 = vld [vmem:[%s264 + $0x5ac] sm:$0xf]
      %v659 = vld [vmem:[%s264 + $0x5b0] sm:$0xf]
      %v660 = vld [vmem:[%s264 + $0x5b4] sm:$0xf]
      %v661 = vld [vmem:[%s264 + $0x5b8] sm:$0xf]
      %v662 = vld [vmem:[%s264 + $0x5bc] sm:$0xf]
      %v663 = vld [vmem:[%s264 + $0x5c0] sm:$0xf]
      %v664 = vld [vmem:[%s264 + $0x5c4] sm:$0xf]
      %v665 = vld [vmem:[%s264 + $0x5c8] sm:$0xf]
      %v666 = vld [vmem:[%s264 + $0x5cc] sm:$0xf]
      %v667 = vld [vmem:[%s264 + $0x5d0] sm:$0xf]
      %v668 = vld [vmem:[%s264 + $0x5d4] sm:$0xf]
      %v669 = vld [vmem:[%s264 + $0x5d8] sm:$0xf]
      %v670 = vld [vmem:[%s264 + $0x5dc] sm:$0xf]
      %v671 = vld [vmem:[%s264 + $0x5e0] sm:$0xf]
      %v672 = vld [vmem:[%s264 + $0x5e4] sm:$0xf]
      %v673 = vld [vmem:[%s264 + $0x5e8] sm:$0xf]
      %v674 = vld [vmem:[%s264 + $0x5ec] sm:$0xf]
      %v675 = vld [vmem:[%s264 + $0x5f0] sm:$0xf]
      %v676 = vld [vmem:[%s264 + $0x5f4] sm:$0xf]
      %v677 = vld [vmem:[%s264 + $0x5f8] sm:$0xf]
      %v678 = vld [vmem:[%s264 + $0x5fc] sm:$0xf]
      %v679 = vld [vmem:[%s264 + $0x600] sm:$0xf]
      %v680 = vld [vmem:[%s264 + $0x604] sm:$0xf]
      %v681 = vld [vmem:[%s264 + $0x608] sm:$0xf]
      %v682 = vld [vmem:[%s264 + $0x60c] sm:$0xf]
      %v683 = vld [vmem:[%s264 + $0x610] sm:$0xf]
      %v684 = vld [vmem:[%s264 + $0x614] sm:$0xf]
      %v685 = vld [vmem:[%s264 + $0x618] sm:$0xf]
      %v686 = vld [vmem:[%s264 + $0x61c] sm:$0xf]
      %v687 = vld [vmem:[%s264 + $0x620] sm:$0xf]
      %v688 = vld [vmem:[%s264 + $0x624] sm:$0xf]
      %v689 = vld [vmem:[%s264 + $0x628] sm:$0xf]
      %v690 = vld [vmem:[%s264 + $0x62c] sm:$0xf]
      %v691 = vld [vmem:[%s264 + $0x630] sm:$0xf]
      %v692 = vld [vmem:[%s264 + $0x634] sm:$0xf]
      %v693 = vld [vmem:[%s264 + $0x638] sm:$0xf]
      %v694 = vld [vmem:[%s264 + $0x63c] sm:$0xf]
      %v695 = vld [vmem:[%s264 + $0x640] sm:$0xf]
      %v696 = vld [vmem:[%s264 + $0x644] sm:$0xf]
      %v697 = vld [vmem:[%s264 + $0x648] sm:$0xf]
      %v698 = vld [vmem:[%s264 + $0x64c] sm:$0xf]
      %v699 = vld [vmem:[%s264 + $0x650] sm:$0xf]
      %v700 = vld [vmem:[%s264 + $0x654] sm:$0xf]
      %v701 = vld [vmem:[%s264 + $0x658] sm:$0xf]
      %v702 = vld [vmem:[%s264 + $0x65c] sm:$0xf]
      %v703 = vld [vmem:[%s264 + $0x660] sm:$0xf]
      %v704 = vld [vmem:[%s264 + $0x664] sm:$0xf]
      %v705 = vld [vmem:[%s264 + $0x668] sm:$0xf]
      %v706 = vld [vmem:[%s264 + $0x66c] sm:$0xf]
      %v707 = vld [vmem:[%s264 + $0x670] sm:$0xf]
      %v708 = vld [vmem:[%s264 + $0x674] sm:$0xf]
      %v709 = vld [vmem:[%s264 + $0x678] sm:$0xf]
      %v710 = vld [vmem:[%s264 + $0x67c] sm:$0xf]
      %v711 = vld [vmem:[%s264 + $0x680] sm:$0xf]
      %v712 = vld [vmem:[%s264 + $0x684] sm:$0xf]
      %v713 = vld [vmem:[%s264 + $0x688] sm:$0xf]
      %v714 = vld [vmem:[%s264 + $0x68c] sm:$0xf]
      %v715 = vld [vmem:[%s264 + $0x690] sm:$0xf]
      %v716 = vld [vmem:[%s264 + $0x694] sm:$0xf]
      %v717 = vld [vmem:[%s264 + $0x698] sm:$0xf]
      %v718 = vld [vmem:[%s264 + $0x69c] sm:$0xf]
      %v719 = vld [vmem:[%s264 + $0x6a0] sm:$0xf]
      %v720 = vld [vmem:[%s264 + $0x6a4] sm:$0xf]
      %v721 = vld [vmem:[%s264 + $0x6a8] sm:$0xf]
      %v722 = vld [vmem:[%s264 + $0x6ac] sm:$0xf]
      %v723 = vld [vmem:[%s264 + $0x6b0] sm:$0xf]
      %v724 = vld [vmem:[%s264 + $0x6b4] sm:$0xf]
      %v725 = vld [vmem:[%s264 + $0x6b8] sm:$0xf]
      %v726 = vld [vmem:[%s264 + $0x6bc] sm:$0xf]
      %v727 = vld [vmem:[%s264 + $0x6c0] sm:$0xf]
      %v728 = vld [vmem:[%s264 + $0x6c4] sm:$0xf]
      %v729 = vld [vmem:[%s264 + $0x6c8] sm:$0xf]
      %v730 = vld [vmem:[%s264 + $0x6cc] sm:$0xf]
      %v731 = vld [vmem:[%s264 + $0x6d0] sm:$0xf]
      %v732 = vld [vmem:[%s264 + $0x6d4] sm:$0xf]
      %v733 = vld [vmem:[%s264 + $0x6d8] sm:$0xf]
      %v734 = vld [vmem:[%s264 + $0x6dc] sm:$0xf]
      %v735 = vld [vmem:[%s264 + $0x6e0] sm:$0xf]
      %v736 = vld [vmem:[%s264 + $0x6e4] sm:$0xf]
      %v737 = vld [vmem:[%s264 + $0x6e8] sm:$0xf]
      %v738 = vld [vmem:[%s264 + $0x6ec] sm:$0xf]
      %v739 = vld [vmem:[%s264 + $0x6f0] sm:$0xf]
      %v740 = vld [vmem:[%s264 + $0x6f4] sm:$0xf]
      %v741 = vld [vmem:[%s264 + $0x6f8] sm:$0xf]
      %v742 = vld [vmem:[%s264 + $0x6fc] sm:$0xf]
      %v743 = vld [vmem:[%s264 + $0x700] sm:$0xf]
      %v744 = vld [vmem:[%s264 + $0x704] sm:$0xf]
      %v745 = vld [vmem:[%s264 + $0x708] sm:$0xf]
      %v746 = vld [vmem:[%s264 + $0x70c] sm:$0xf]
      %v747 = vld [vmem:[%s264 + $0x710] sm:$0xf]
      %v748 = vld [vmem:[%s264 + $0x714] sm:$0xf]
      %v749 = vld [vmem:[%s264 + $0x718] sm:$0xf]
      %v750 = vld [vmem:[%s264 + $0x71c] sm:$0xf]
      %v751 = vld [vmem:[%s264 + $0x720] sm:$0xf]
      %v752 = vld [vmem:[%s264 + $0x724] sm:$0xf]
      %v753 = vld [vmem:[%s264 + $0x728] sm:$0xf]
      %v754 = vld [vmem:[%s264 + $0x72c] sm:$0xf]
      %v755 = vld [vmem:[%s264 + $0x730] sm:$0xf]
      %v756 = vld [vmem:[%s264 + $0x734] sm:$0xf]
      %v757 = vld [vmem:[%s264 + $0x738] sm:$0xf]
      %v758 = vld [vmem:[%s264 + $0x73c] sm:$0xf]
      %v759 = vld [vmem:[%s264 + $0x740] sm:$0xf]
      %v760 = vld [vmem:[%s264 + $0x744] sm:$0xf]
      %v761 = vld [vmem:[%s264 + $0x748] sm:$0xf]
      %v762 = vld [vmem:[%s264 + $0x74c] sm:$0xf]
      %v763 = vld [vmem:[%s264 + $0x750] sm:$0xf]
      %v764 = vld [vmem:[%s264 + $0x754] sm:$0xf]
      %v765 = vld [vmem:[%s264 + $0x758] sm:$0xf]
      %v766 = vld [vmem:[%s264 + $0x75c] sm:$0xf]
      %v767 = vld [vmem:[%s264 + $0x760] sm:$0xf]
      %v768 = vld [vmem:[%s264 + $0x764] sm:$0xf]
      %v769 = vld [vmem:[%s264 + $0x768] sm:$0xf]
      %v770 = vld [vmem:[%s264 + $0x76c] sm:$0xf]
      %v771 = vld [vmem:[%s264 + $0x770] sm:$0xf]
      %v772 = vld [vmem:[%s264 + $0x774] sm:$0xf]
      %v773 = vld [vmem:[%s264 + $0x778] sm:$0xf]
      %v774 = vld [vmem:[%s264 + $0x77c] sm:$0xf]
      %v775 = vld [vmem:[%s264 + $0x780] sm:$0xf]
      %v776 = vld [vmem:[%s264 + $0x784] sm:$0xf]
      %v777 = vld [vmem:[%s264 + $0x788] sm:$0xf]
      %v778 = vld [vmem:[%s264 + $0x78c] sm:$0xf]
      %v779 = vld [vmem:[%s264 + $0x790] sm:$0xf]
      %v780 = vld [vmem:[%s264 + $0x794] sm:$0xf]
      %v781 = vld [vmem:[%s264 + $0x798] sm:$0xf]
      %v782 = vld [vmem:[%s264 + $0x79c] sm:$0xf]
      %v783 = vld [vmem:[%s264 + $0x7a0] sm:$0xf]
      %v784 = vld [vmem:[%s264 + $0x7a4] sm:$0xf]
      %v785 = vld [vmem:[%s264 + $0x7a8] sm:$0xf]
      %v786 = vld [vmem:[%s264 + $0x7ac] sm:$0xf]
      %v787 = vld [vmem:[%s264 + $0x7b0] sm:$0xf]
      %v788 = vld [vmem:[%s264 + $0x7b4] sm:$0xf]
      %v789 = vld [vmem:[%s264 + $0x7b8] sm:$0xf]
      %v790 = vld [vmem:[%s264 + $0x7bc] sm:$0xf]
      %v791 = vld [vmem:[%s264 + $0x7c0] sm:$0xf]
      %v792 = vld [vmem:[%s264 + $0x7c4] sm:$0xf]
      %v793 = vld [vmem:[%s264 + $0x7c8] sm:$0xf]
      %v794 = vld [vmem:[%s264 + $0x7cc] sm:$0xf]
      %v795 = vld [vmem:[%s264 + $0x7d0] sm:$0xf]
      %v796 = vld [vmem:[%s264 + $0x7d4] sm:$0xf]
      %v797 = vld [vmem:[%s264 + $0x7d8] sm:$0xf]
      %v798 = vld [vmem:[%s264 + $0x7dc] sm:$0xf]
      %v799 = vld [vmem:[%s264 + $0x7e0] sm:$0xf]
      %v800 = vld [vmem:[%s264 + $0x7e4] sm:$0xf]
      %v801 = vld [vmem:[%s264 + $0x7e8] sm:$0xf]
      %v802 = vld [vmem:[%s264 + $0x7ec] sm:$0xf]
      %v803 = vld [vmem:[%s264 + $0x7f0] sm:$0xf]
      %v804 = vld [vmem:[%s264 + $0x7f4] sm:$0xf]
      %v805 = vld [vmem:[%s264 + $0x7f8] sm:$0xf]
      %v806 = vld [vmem:[%s264 + $0x7fc] sm:$0xf]
      %v807 = vld [vmem:[%s264 + $0x800] sm:$0xf]
      %v808 = vld [vmem:[%s264 + $0x804] sm:$0xf]
      %v809 = vld [vmem:[%s264 + $0x808] sm:$0xf]
      %v810 = vld [vmem:[%s264 + $0x80c] sm:$0xf]
      %v811 = vld [vmem:[%s264 + $0x810] sm:$0xf]
      %v812 = vld [vmem:[%s264 + $0x814] sm:$0xf]
      %v813 = vld [vmem:[%s264 + $0x818] sm:$0xf]
      %v814 = vld [vmem:[%s264 + $0x81c] sm:$0xf]
      %v815 = vld [vmem:[%s264 + $0x820] sm:$0xf]
      %v816 = vld [vmem:[%s264 + $0x824] sm:$0xf]
      %v817 = vld [vmem:[%s264 + $0x828] sm:$0xf]
      %v818 = vld [vmem:[%s264 + $0x82c] sm:$0xf]
      %v819 = vld [vmem:[%s264 + $0x830] sm:$0xf]
      %v820 = vld [vmem:[%s264 + $0x834] sm:$0xf]
      %v821 = vld [vmem:[%s264 + $0x838] sm:$0xf]
      %v822 = vld [vmem:[%s264 + $0x83c] sm:$0xf]
      %v823 = vld [vmem:[%s264 + $0x840] sm:$0xf]
      %v824 = vld [vmem:[%s264 + $0x844] sm:$0xf]
      %v825 = vld [vmem:[%s264 + $0x848] sm:$0xf]
      %v826 = vld [vmem:[%s264 + $0x84c] sm:$0xf]
      %v827 = vld [vmem:[%s264 + $0x850] sm:$0xf]
      %v828 = vld [vmem:[%s264 + $0x854] sm:$0xf]
      %v829 = vld [vmem:[%s264 + $0x858] sm:$0xf]
      %v830 = vld [vmem:[%s264 + $0x85c] sm:$0xf]
      %v831 = vld [vmem:[%s264 + $0x860] sm:$0xf]
      %v832 = vld [vmem:[%s264 + $0x864] sm:$0xf]
      %v833 = vld [vmem:[%s264 + $0x868] sm:$0xf]
      %v834 = vld [vmem:[%s264 + $0x86c] sm:$0xf]
      %v835 = vld [vmem:[%s264 + $0x870] sm:$0xf]
      %v836 = vld [vmem:[%s264 + $0x874] sm:$0xf]
      %v837 = vld [vmem:[%s264 + $0x878] sm:$0xf]
      %v838 = vld [vmem:[%s264 + $0x87c] sm:$0xf]
      %v839 = vld [vmem:[%s264 + $0x880] sm:$0xf]
      %v840 = vld [vmem:[%s264 + $0x884] sm:$0xf]
      %v841 = vld [vmem:[%s264 + $0x888] sm:$0xf]
      %v842 = vld [vmem:[%s264 + $0x88c] sm:$0xf]
      %v843 = vld [vmem:[%s264 + $0x890] sm:$0xf]
      %v844 = vld [vmem:[%s264 + $0x894] sm:$0xf]
      %v845 = vld [vmem:[%s264 + $0x898] sm:$0xf]
      %v846 = vld [vmem:[%s264 + $0x89c] sm:$0xf]
      %v847 = vld [vmem:[%s264 + $0x8a0] sm:$0xf]
      %v848 = vld [vmem:[%s264 + $0x8a4] sm:$0xf]
      %v849 = vld [vmem:[%s264 + $0x8a8] sm:$0xf]
      %v850 = vld [vmem:[%s264 + $0x8ac] sm:$0xf]
      %v851 = vld [vmem:[%s264 + $0x8b0] sm:$0xf]
      %v852 = vld [vmem:[%s264 + $0x8b4] sm:$0xf]
      %v853 = vld [vmem:[%s264 + $0x8b8] sm:$0xf]
      %v854 = vld [vmem:[%s264 + $0x8bc] sm:$0xf]
      %v855 = vld [vmem:[%s264 + $0x8c0] sm:$0xf]
      %v856 = vld [vmem:[%s264 + $0x8c4] sm:$0xf]
      %v857 = vld [vmem:[%s264 + $0x8c8] sm:$0xf]
      %v858 = vld [vmem:[%s264 + $0x8cc] sm:$0xf]
      %v859 = vld [vmem:[%s264 + $0x8d0] sm:$0xf]
      %v860 = vld [vmem:[%s264 + $0x8d4] sm:$0xf]
      %v861 = vld [vmem:[%s264 + $0x8d8] sm:$0xf]
      %v862 = vld [vmem:[%s264 + $0x8dc] sm:$0xf]
      %v863 = vld [vmem:[%s264 + $0x8e0] sm:$0xf]
      %v864 = vld [vmem:[%s264 + $0x8e4] sm:$0xf]
      %v865 = vld [vmem:[%s264 + $0x8e8] sm:$0xf]
      %v866 = vld [vmem:[%s264 + $0x8ec] sm:$0xf]
      %v867 = vld [vmem:[%s264 + $0x8f0] sm:$0xf]
      %v868 = vld [vmem:[%s264 + $0x8f4] sm:$0xf]
      %v869 = vld [vmem:[%s264 + $0x8f8] sm:$0xf]
      %v870 = vld [vmem:[%s264 + $0x8fc] sm:$0xf]
      %v871 = vld [vmem:[%s264 + $0x900] sm:$0xf]
      %v872 = vld [vmem:[%s264 + $0x904] sm:$0xf]
      %v873 = vld [vmem:[%s264 + $0x908] sm:$0xf]
      %v874 = vld [vmem:[%s264 + $0x90c] sm:$0xf]
      %v875 = vld [vmem:[%s264 + $0x910] sm:$0xf]
      %v876 = vld [vmem:[%s264 + $0x914] sm:$0xf]
      %v877 = vld [vmem:[%s264 + $0x918] sm:$0xf]
      %v878 = vld [vmem:[%s264 + $0x91c] sm:$0xf]
      %v879 = vld [vmem:[%s264 + $0x920] sm:$0xf]
      %v880 = vld [vmem:[%s264 + $0x924] sm:$0xf]
      %v881 = vld [vmem:[%s264 + $0x928] sm:$0xf]
      %v882 = vld [vmem:[%s264 + $0x92c] sm:$0xf]
      %v883 = vld [vmem:[%s264 + $0x930] sm:$0xf]
      %v884 = vld [vmem:[%s264 + $0x934] sm:$0xf]
      %v885 = vld [vmem:[%s264 + $0x938] sm:$0xf]
      %v886 = vld [vmem:[%s264 + $0x93c] sm:$0xf]
      %v887 = vld [vmem:[%s264 + $0x940] sm:$0xf]
      %v888 = vld [vmem:[%s264 + $0x944] sm:$0xf]
      %v889 = vld [vmem:[%s264 + $0x948] sm:$0xf]
      %v890 = vld [vmem:[%s264 + $0x94c] sm:$0xf]
      %v891 = vld [vmem:[%s264 + $0x950] sm:$0xf]
      %v892 = vld [vmem:[%s264 + $0x954] sm:$0xf]
      %v893 = vld [vmem:[%s264 + $0x958] sm:$0xf]
      %v894 = vld [vmem:[%s264 + $0x95c] sm:$0xf]
      %v895 = vld [vmem:[%s264 + $0x960] sm:$0xf]
      %v896 = vld [vmem:[%s264 + $0x964] sm:$0xf]
      %v897 = vld [vmem:[%s264 + $0x968] sm:$0xf]
      %v898 = vld [vmem:[%s264 + $0x96c] sm:$0xf]
      %v899 = vld [vmem:[%s264 + $0x970] sm:$0xf]
      %v900 = vld [vmem:[%s264 + $0x974] sm:$0xf]
      %v901 = vld [vmem:[%s264 + $0x978] sm:$0xf]
      %v902 = vld [vmem:[%s264 + $0x97c] sm:$0xf]
      %v903 = vld [vmem:[%s264 + $0x980] sm:$0xf]
      %v904 = vld [vmem:[%s264 + $0x984] sm:$0xf]
      %v905 = vld [vmem:[%s264 + $0x988] sm:$0xf]
      %v906 = vld [vmem:[%s264 + $0x98c] sm:$0xf]
      %v907 = vld [vmem:[%s264 + $0x990] sm:$0xf]
      %v908 = vld [vmem:[%s264 + $0x994] sm:$0xf]
      %v909 = vld [vmem:[%s264 + $0x998] sm:$0xf]
      %v910 = vld [vmem:[%s264 + $0x99c] sm:$0xf]
      %v911 = vld [vmem:[%s264 + $0x9a0] sm:$0xf]
      %v912 = vld [vmem:[%s264 + $0x9a4] sm:$0xf]
      %v913 = vld [vmem:[%s264 + $0x9a8] sm:$0xf]
      %v914 = vld [vmem:[%s264 + $0x9ac] sm:$0xf]
      %v915 = vld [vmem:[%s264 + $0x9b0] sm:$0xf]
      %v916 = vld [vmem:[%s264 + $0x9b4] sm:$0xf]
      %v917 = vld [vmem:[%s264 + $0x9b8] sm:$0xf]
      %v918 = vld [vmem:[%s264 + $0x9bc] sm:$0xf]
      %v919 = vld [vmem:[%s264 + $0x9c0] sm:$0xf]
      %v920 = vld [vmem:[%s264 + $0x9c4] sm:$0xf]
      %v921 = vld [vmem:[%s264 + $0x9c8] sm:$0xf]
      %v922 = vld [vmem:[%s264 + $0x9cc] sm:$0xf]
      %v923 = vld [vmem:[%s264 + $0x9d0] sm:$0xf]
      %v924 = vld [vmem:[%s264 + $0x9d4] sm:$0xf]
      %v925 = vld [vmem:[%s264 + $0x9d8] sm:$0xf]
      %v926 = vld [vmem:[%s264 + $0x9dc] sm:$0xf]
      %v927 = vld [vmem:[%s264 + $0x9e0] sm:$0xf]
      %v928 = vld [vmem:[%s264 + $0x9e4] sm:$0xf]
      %v929 = vld [vmem:[%s264 + $0x9e8] sm:$0xf]
      %v930 = vld [vmem:[%s264 + $0x9ec] sm:$0xf]
      %v931 = vld [vmem:[%s264 + $0x9f0] sm:$0xf]
      %v932 = vld [vmem:[%s264 + $0x9f4] sm:$0xf]
      %v933 = vld [vmem:[%s264 + $0x9f8] sm:$0xf]
      %v934 = vld [vmem:[%s264 + $0x9fc] sm:$0xf]
      %v935 = vld [vmem:[%s264 + $0xa00] sm:$0xf]
      %v936 = vld [vmem:[%s264 + $0xa04] sm:$0xf]
      %v937 = vld [vmem:[%s264 + $0xa08] sm:$0xf]
      %v938 = vld [vmem:[%s264 + $0xa0c] sm:$0xf]
      %v939 = vld [vmem:[%s264 + $0xa10] sm:$0xf]
      %v940 = vld [vmem:[%s264 + $0xa14] sm:$0xf]
      %v941 = vld [vmem:[%s264 + $0xa18] sm:$0xf]
      %v942 = vld [vmem:[%s264 + $0xa1c] sm:$0xf]
      %v943 = vld [vmem:[%s264 + $0xa20] sm:$0xf]
      %v944 = vld [vmem:[%s264 + $0xa24] sm:$0xf]
      %v945 = vld [vmem:[%s264 + $0xa28] sm:$0xf]
      %v946 = vld [vmem:[%s264 + $0xa2c] sm:$0xf]
      %v947 = vld [vmem:[%s264 + $0xa30] sm:$0xf]
      %v948 = vld [vmem:[%s264 + $0xa34] sm:$0xf]
      %v949 = vld [vmem:[%s264 + $0xa38] sm:$0xf]
      %v950 = vld [vmem:[%s264 + $0xa3c] sm:$0xf]
      %v951 = vld [vmem:[%s264 + $0xa40] sm:$0xf]
      %v952 = vld [vmem:[%s264 + $0xa44] sm:$0xf]
      %v953 = vld [vmem:[%s264 + $0xa48] sm:$0xf]
      %v954 = vld [vmem:[%s264 + $0xa4c] sm:$0xf]
      %v955 = vld [vmem:[%s264 + $0xa50] sm:$0xf]
      %v956 = vld [vmem:[%s264 + $0xa54] sm:$0xf]
      %v957 = vld [vmem:[%s264 + $0xa58] sm:$0xf]
      %v958 = vld [vmem:[%s264 + $0xa5c] sm:$0xf]
      %v959 = vld [vmem:[%s264 + $0xa60] sm:$0xf]
      %v960 = vld [vmem:[%s264 + $0xa64] sm:$0xf]
      %v961 = vld [vmem:[%s264 + $0xa68] sm:$0xf]
      %v962 = vld [vmem:[%s264 + $0xa6c] sm:$0xf]
      %v963 = vld [vmem:[%s264 + $0xa70] sm:$0xf]
      %v964 = vld [vmem:[%s264 + $0xa74] sm:$0xf]
      %v965 = vld [vmem:[%s264 + $0xa78] sm:$0xf]
      %v966 = vld [vmem:[%s264 + $0xa7c] sm:$0xf]
      %v967 = vld [vmem:[%s264 + $0xa80] sm:$0xf]
      %v968 = vld [vmem:[%s264 + $0xa84] sm:$0xf]
      %v969 = vld [vmem:[%s264 + $0xa88] sm:$0xf]
      %v970 = vld [vmem:[%s264 + $0xa8c] sm:$0xf]
      %v971 = vld [vmem:[%s264 + $0xa90] sm:$0xf]
      %v972 = vld [vmem:[%s264 + $0xa94] sm:$0xf]
      %v973 = vld [vmem:[%s264 + $0xa98] sm:$0xf]
      %v974 = vld [vmem:[%s264 + $0xa9c] sm:$0xf]
      %v975 = vld [vmem:[%s264 + $0xaa0] sm:$0xf]
      %v976 = vld [vmem:[%s264 + $0xaa4] sm:$0xf]
      %v977 = vld [vmem:[%s264 + $0xaa8] sm:$0xf]
      %v978 = vld [vmem:[%s264 + $0xaac] sm:$0xf]
      %v979 = vld [vmem:[%s264 + $0xab0] sm:$0xf]
      %v980 = vld [vmem:[%s264 + $0xab4] sm:$0xf]
      %v981 = vld [vmem:[%s264 + $0xab8] sm:$0xf]
      %v982 = vld [vmem:[%s264 + $0xabc] sm:$0xf]
      %v983 = vld [vmem:[%s264 + $0xac0] sm:$0xf]
      %v984 = vld [vmem:[%s264 + $0xac4] sm:$0xf]
      %v985 = vld [vmem:[%s264 + $0xac8] sm:$0xf]
      %v986 = vld [vmem:[%s264 + $0xacc] sm:$0xf]
      %v987 = vld [vmem:[%s264 + $0xad0] sm:$0xf]
      %v988 = vld [vmem:[%s264 + $0xad4] sm:$0xf]
      %v989 = vld [vmem:[%s264 + $0xad8] sm:$0xf]
      %v990 = vld [vmem:[%s264 + $0xadc] sm:$0xf]
      %v991 = vld [vmem:[%s264 + $0xae0] sm:$0xf]
      %v992 = vld [vmem:[%s264 + $0xae4] sm:$0xf]
      %v993 = vld [vmem:[%s264 + $0xae8] sm:$0xf]
      %v994 = vld [vmem:[%s264 + $0xaec] sm:$0xf]
      %v995 = vld [vmem:[%s264 + $0xaf0] sm:$0xf]
      %v996 = vld [vmem:[%s264 + $0xaf4] sm:$0xf]
      %v997 = vld [vmem:[%s264 + $0xaf8] sm:$0xf]
      %v998 = vld [vmem:[%s264 + $0xafc] sm:$0xf]
      %v999 = vld [vmem:[%s264 + $0xb00] sm:$0xf]
      %v1000 = vld [vmem:[%s264 + $0xb04] sm:$0xf]
      %v1001 = vld [vmem:[%s264 + $0xb08] sm:$0xf]
      %v1002 = vld [vmem:[%s264 + $0xb0c] sm:$0xf]
      %v1003 = vld [vmem:[%s264 + $0xb10] sm:$0xf]
      %v1004 = vld [vmem:[%s264 + $0xb14] sm:$0xf]
      %v1005 = vld [vmem:[%s264 + $0xb18] sm:$0xf]
      %v1006 = vld [vmem:[%s264 + $0xb1c] sm:$0xf]
      %v1007 = vld [vmem:[%s264 + $0xb20] sm:$0xf]
      %v1008 = vld [vmem:[%s264 + $0xb24] sm:$0xf]
      %v1009 = vld [vmem:[%s264 + $0xb28] sm:$0xf]
      %v1010 = vld [vmem:[%s264 + $0xb2c] sm:$0xf]
      %v1011 = vld [vmem:[%s264 + $0xb30] sm:$0xf]
      %v1012 = vld [vmem:[%s264 + $0xb34] sm:$0xf]
      %v1013 = vld [vmem:[%s264 + $0xb38] sm:$0xf]
      %v1014 = vld [vmem:[%s264 + $0xb3c] sm:$0xf]
      %v1015 = vld [vmem:[%s264 + $0xb40] sm:$0xf]
      %v1016 = vld [vmem:[%s264 + $0xb44] sm:$0xf]
      %v1017 = vld [vmem:[%s264 + $0xb48] sm:$0xf]
      %v1018 = vld [vmem:[%s264 + $0xb4c] sm:$0xf]
      %v1019 = vld [vmem:[%s264 + $0xb50] sm:$0xf]
      %v1020 = vld [vmem:[%s264 + $0xb54] sm:$0xf]
      %v1021 = vld [vmem:[%s264 + $0xb58] sm:$0xf]
      %v1022 = vld [vmem:[%s264 + $0xb5c] sm:$0xf]
      %v1023 = vld [vmem:[%s264 + $0xb60] sm:$0xf]
      %v1024 = vld [vmem:[%s264 + $0xb64] sm:$0xf]
      %v1025 = vld [vmem:[%s264 + $0xb68] sm:$0xf]
      %v1026 = vld [vmem:[%s264 + $0xb6c] sm:$0xf]
      %v1027 = vld [vmem:[%s264 + $0xb70] sm:$0xf]
      %v1028 = vld [vmem:[%s264 + $0xb74] sm:$0xf]
      %v1029 = vld [vmem:[%s264 + $0xb78] sm:$0xf]
      %v1030 = vld [vmem:[%s264 + $0xb7c] sm:$0xf]
      %v1031 = vld [vmem:[%s264 + $0xb80] sm:$0xf]
      %v1032 = vld [vmem:[%s264 + $0xb84] sm:$0xf]
      %v1033 = vld [vmem:[%s264 + $0xb88] sm:$0xf]
      %v1034 = vld [vmem:[%s264 + $0xb8c] sm:$0xf]
      %v1035 = vld [vmem:[%s264 + $0xb90] sm:$0xf]
      %v1036 = vld [vmem:[%s264 + $0xb94] sm:$0xf]
      %v1037 = vld [vmem:[%s264 + $0xb98] sm:$0xf]
      %v1038 = vld [vmem:[%s264 + $0xb9c] sm:$0xf]
      %v1039 = vld [vmem:[%s264 + $0xba0] sm:$0xf]
      %v1040 = vld [vmem:[%s264 + $0xba4] sm:$0xf]
      %v1041 = vld [vmem:[%s264 + $0xba8] sm:$0xf]
      %v1042 = vld [vmem:[%s264 + $0xbac] sm:$0xf]
      %v1043 = vld [vmem:[%s264 + $0xbb0] sm:$0xf]
      %v1044 = vld [vmem:[%s264 + $0xbb4] sm:$0xf]
      %v1045 = vld [vmem:[%s264 + $0xbb8] sm:$0xf]
      %v1046 = vld [vmem:[%s264 + $0xbbc] sm:$0xf]
      %v1047 = vld [vmem:[%s264 + $0xbc0] sm:$0xf]
      %v1048 = vld [vmem:[%s264 + $0xbc4] sm:$0xf]
      %v1049 = vld [vmem:[%s264 + $0xbc8] sm:$0xf]
      %v1050 = vld [vmem:[%s264 + $0xbcc] sm:$0xf]
      %v1051 = vld [vmem:[%s264 + $0xbd0] sm:$0xf]
      %v1052 = vld [vmem:[%s264 + $0xbd4] sm:$0xf]
      %v1053 = vld [vmem:[%s264 + $0xbd8] sm:$0xf]
      %v1054 = vld [vmem:[%s264 + $0xbdc] sm:$0xf]
      %v1055 = vld [vmem:[%s264 + $0xbe0] sm:$0xf]
      %v1056 = vld [vmem:[%s264 + $0xbe4] sm:$0xf]
      %v1057 = vld [vmem:[%s264 + $0xbe8] sm:$0xf]
      %v1058 = vld [vmem:[%s264 + $0xbec] sm:$0xf]
      %v1059 = vld [vmem:[%s264 + $0xbf0] sm:$0xf]
      %v1060 = vld [vmem:[%s264 + $0xbf4] sm:$0xf]
      %v1061 = vld [vmem:[%s264 + $0xbf8] sm:$0xf]
      %v1062 = vld [vmem:[%s264 + $0xbfc] sm:$0xf]
      %v1063 = vld [vmem:[%s264 + $0xc00] sm:$0xf]
      %v1064 = vld [vmem:[%s264 + $0xc04] sm:$0xf]
      %v1065 = vld [vmem:[%s264 + $0xc08] sm:$0xf]
      %v1066 = vld [vmem:[%s264 + $0xc0c] sm:$0xf]
      %v1067 = vld [vmem:[%s264 + $0xc10] sm:$0xf]
      %v1068 = vld [vmem:[%s264 + $0xc14] sm:$0xf]
      %v1069 = vld [vmem:[%s264 + $0xc18] sm:$0xf]
      %v1070 = vld [vmem:[%s264 + $0xc1c] sm:$0xf]
      %v1071 = vld [vmem:[%s264 + $0xc20] sm:$0xf]
      %v1072 = vld [vmem:[%s264 + $0xc24] sm:$0xf]
      %v1073 = vld [vmem:[%s264 + $0xc28] sm:$0xf]
      %v1074 = vld [vmem:[%s264 + $0xc2c] sm:$0xf]
      %v1075 = vld [vmem:[%s264 + $0xc30] sm:$0xf]
      %v1076 = vld [vmem:[%s264 + $0xc34] sm:$0xf]
      %v1077 = vld [vmem:[%s264 + $0xc38] sm:$0xf]
      %v1078 = vld [vmem:[%s264 + $0xc3c] sm:$0xf]
      %v1079 = vld [vmem:[%s264 + $0xc40] sm:$0xf]
      %v1080 = vld [vmem:[%s264 + $0xc44] sm:$0xf]
      %v1081 = vld [vmem:[%s264 + $0xc48] sm:$0xf]
      %v1082 = vld [vmem:[%s264 + $0xc4c] sm:$0xf]
      %v1083 = vld [vmem:[%s264 + $0xc50] sm:$0xf]
      %v1084 = vld [vmem:[%s264 + $0xc54] sm:$0xf]
      %v1085 = vld [vmem:[%s264 + $0xc58] sm:$0xf]
      %v1086 = vld [vmem:[%s264 + $0xc5c] sm:$0xf]
      %v1087 = vld [vmem:[%s264 + $0xc60] sm:$0xf]
      %v1088 = vld [vmem:[%s264 + $0xc64] sm:$0xf]
      %v1089 = vld [vmem:[%s264 + $0xc68] sm:$0xf]
      %v1090 = vld [vmem:[%s264 + $0xc6c] sm:$0xf]
      %v1091 = vld [vmem:[%s264 + $0xc70] sm:$0xf]
      %v1092 = vld [vmem:[%s264 + $0xc74] sm:$0xf]
      %v1093 = vld [vmem:[%s264 + $0xc78] sm:$0xf]
      %v1094 = vld [vmem:[%s264 + $0xc7c] sm:$0xf]
      %v1095 = vld [vmem:[%s264 + $0xc80] sm:$0xf]
      %v1096 = vld [vmem:[%s264 + $0xc84] sm:$0xf]
      %v1097 = vld [vmem:[%s264 + $0xc88] sm:$0xf]
      %v1098 = vld [vmem:[%s264 + $0xc8c] sm:$0xf]
      %v1099 = vld [vmem:[%s264 + $0xc90] sm:$0xf]
      %v1100 = vld [vmem:[%s264 + $0xc94] sm:$0xf]
      %v1101 = vld [vmem:[%s264 + $0xc98] sm:$0xf]
      %v1102 = vld [vmem:[%s264 + $0xc9c] sm:$0xf]
      %v1103 = vld [vmem:[%s264 + $0xca0] sm:$0xf]
      %v1104 = vld [vmem:[%s264 + $0xca4] sm:$0xf]
      %v1105 = vld [vmem:[%s264 + $0xca8] sm:$0xf]
      %v1106 = vld [vmem:[%s264 + $0xcac] sm:$0xf]
      %v1107 = vld [vmem:[%s264 + $0xcb0] sm:$0xf]
      %v1108 = vld [vmem:[%s264 + $0xcb4] sm:$0xf]
      %v1109 = vld [vmem:[%s264 + $0xcb8] sm:$0xf]
      %v1110 = vld [vmem:[%s264 + $0xcbc] sm:$0xf]
      %v1111 = vld [vmem:[%s264 + $0xcc0] sm:$0xf]
      %v1112 = vld [vmem:[%s264 + $0xcc4] sm:$0xf]
      %v1113 = vld [vmem:[%s264 + $0xcc8] sm:$0xf]
      %v1114 = vld [vmem:[%s264 + $0xccc] sm:$0xf]
      %v1115 = vld [vmem:[%s264 + $0xcd0] sm:$0xf]
      %v1116 = vld [vmem:[%s264 + $0xcd4] sm:$0xf]
      %v1117 = vld [vmem:[%s264 + $0xcd8] sm:$0xf]
      %v1118 = vld [vmem:[%s264 + $0xcdc] sm:$0xf]
      %v1119 = vld [vmem:[%s264 + $0xce0] sm:$0xf]
      %v1120 = vld [vmem:[%s264 + $0xce4] sm:$0xf]
      %v1121 = vld [vmem:[%s264 + $0xce8] sm:$0xf]
      %v1122 = vld [vmem:[%s264 + $0xcec] sm:$0xf]
      %v1123 = vld [vmem:[%s264 + $0xcf0] sm:$0xf]
      %v1124 = vld [vmem:[%s264 + $0xcf4] sm:$0xf]
      %v1125 = vld [vmem:[%s264 + $0xcf8] sm:$0xf]
      %v1126 = vld [vmem:[%s264 + $0xcfc] sm:$0xf]
      %v1127 = vld [vmem:[%s264 + $0xd00] sm:$0xf]
      %v1128 = vld [vmem:[%s264 + $0xd04] sm:$0xf]
      %v1129 = vld [vmem:[%s264 + $0xd08] sm:$0xf]
      %v1130 = vld [vmem:[%s264 + $0xd0c] sm:$0xf]
      %v1131 = vld [vmem:[%s264 + $0xd10] sm:$0xf]
      %v1132 = vld [vmem:[%s264 + $0xd14] sm:$0xf]
      %v1133 = vld [vmem:[%s264 + $0xd18] sm:$0xf]
      %v1134 = vld [vmem:[%s264 + $0xd1c] sm:$0xf]
      %v1135 = vld [vmem:[%s264 + $0xd20] sm:$0xf]
      %v1136 = vld [vmem:[%s264 + $0xd24] sm:$0xf]
      %v1137 = vld [vmem:[%s264 + $0xd28] sm:$0xf]
      %v1138 = vld [vmem:[%s264 + $0xd2c] sm:$0xf]
      %v1139 = vld [vmem:[%s264 + $0xd30] sm:$0xf]
      %v1140 = vld [vmem:[%s264 + $0xd34] sm:$0xf]
      %v1141 = vld [vmem:[%s264 + $0xd38] sm:$0xf]
      %v1142 = vld [vmem:[%s264 + $0xd3c] sm:$0xf]
      %v1143 = vld [vmem:[%s264 + $0xd40] sm:$0xf]
      %v1144 = vld [vmem:[%s264 + $0xd44] sm:$0xf]
      %v1145 = vld [vmem:[%s264 + $0xd48] sm:$0xf]
      %v1146 = vld [vmem:[%s264 + $0xd4c] sm:$0xf]
      %v1147 = vld [vmem:[%s264 + $0xd50] sm:$0xf]
      %v1148 = vld [vmem:[%s264 + $0xd54] sm:$0xf]
      %v1149 = vld [vmem:[%s264 + $0xd58] sm:$0xf]
      %v1150 = vld [vmem:[%s264 + $0xd5c] sm:$0xf]
      %v1151 = vld [vmem:[%s264 + $0xd60] sm:$0xf]
      %v1152 = vld [vmem:[%s264 + $0xd64] sm:$0xf]
      %v1153 = vld [vmem:[%s264 + $0xd68] sm:$0xf]
      %v1154 = vld [vmem:[%s264 + $0xd6c] sm:$0xf]
      %v1155 = vld [vmem:[%s264 + $0xd70] sm:$0xf]
      %v1156 = vld [vmem:[%s264 + $0xd74] sm:$0xf]
      %v1157 = vld [vmem:[%s264 + $0xd78] sm:$0xf]
      %v1158 = vld [vmem:[%s264 + $0xd7c] sm:$0xf]
      %v1159 = vld [vmem:[%s264 + $0xd80] sm:$0xf]
      %v1160 = vld [vmem:[%s264 + $0xd84] sm:$0xf]
      %v1161 = vld [vmem:[%s264 + $0xd88] sm:$0xf]
      %v1162 = vld [vmem:[%s264 + $0xd8c] sm:$0xf]
      %v1163 = vld [vmem:[%s264 + $0xd90] sm:$0xf]
      %v1164 = vld [vmem:[%s264 + $0xd94] sm:$0xf]
      %v1165 = vld [vmem:[%s264 + $0xd98] sm:$0xf]
      %v1166 = vld [vmem:[%s264 + $0xd9c] sm:$0xf]
      %v1167 = vld [vmem:[%s264 + $0xda0] sm:$0xf]
      %v1168 = vld [vmem:[%s264 + $0xda4] sm:$0xf]
      %v1169 = vld [vmem:[%s264 + $0xda8] sm:$0xf]
      %v1170 = vld [vmem:[%s264 + $0xdac] sm:$0xf]
      %v1171 = vld [vmem:[%s264 + $0xdb0] sm:$0xf]
      %v1172 = vld [vmem:[%s264 + $0xdb4] sm:$0xf]
      %v1173 = vld [vmem:[%s264 + $0xdb8] sm:$0xf]
      %v1174 = vld [vmem:[%s264 + $0xdbc] sm:$0xf]
      %v1175 = vld [vmem:[%s264 + $0xdc0] sm:$0xf]
      %v1176 = vld [vmem:[%s264 + $0xdc4] sm:$0xf]
      %v1177 = vld [vmem:[%s264 + $0xdc8] sm:$0xf]
      %v1178 = vld [vmem:[%s264 + $0xdcc] sm:$0xf]
      %v1179 = vld [vmem:[%s264 + $0xdd0] sm:$0xf]
      %v1180 = vld [vmem:[%s264 + $0xdd4] sm:$0xf]
      %v1181 = vld [vmem:[%s264 + $0xdd8] sm:$0xf]
      %v1182 = vld [vmem:[%s264 + $0xddc] sm:$0xf]
      %v1183 = vld [vmem:[%s264 + $0xde0] sm:$0xf]
      %v1184 = vld [vmem:[%s264 + $0xde4] sm:$0xf]
      %v1185 = vld [vmem:[%s264 + $0xde8] sm:$0xf]
      %v1186 = vld [vmem:[%s264 + $0xdec] sm:$0xf]
      %v1187 = vld [vmem:[%s264 + $0xdf0] sm:$0xf]
      %v1188 = vld [vmem:[%s264 + $0xdf4] sm:$0xf]
      %v1189 = vld [vmem:[%s264 + $0xdf8] sm:$0xf]
      %v1190 = vld [vmem:[%s264 + $0xdfc] sm:$0xf]
      %v1191 = vld [vmem:[%s264 + $0xe00] sm:$0xf]
      %v1192 = vld [vmem:[%s264 + $0xe04] sm:$0xf]
      %v1193 = vld [vmem:[%s264 + $0xe08] sm:$0xf]
      %v1194 = vld [vmem:[%s264 + $0xe0c] sm:$0xf]
      %v1195 = vld [vmem:[%s264 + $0xe10] sm:$0xf]
      %v1196 = vld [vmem:[%s264 + $0xe14] sm:$0xf]
      %v1197 = vld [vmem:[%s264 + $0xe18] sm:$0xf]
      %v1198 = vld [vmem:[%s264 + $0xe1c] sm:$0xf]
      %v1199 = vld [vmem:[%s264 + $0xe20] sm:$0xf]
      %v1200 = vld [vmem:[%s264 + $0xe24] sm:$0xf]
      %v1201 = vld [vmem:[%s264 + $0xe28] sm:$0xf]
      %v1202 = vld [vmem:[%s264 + $0xe2c] sm:$0xf]
      %v1203 = vld [vmem:[%s264 + $0xe30] sm:$0xf]
      %v1204 = vld [vmem:[%s264 + $0xe34] sm:$0xf]
      %v1205 = vld [vmem:[%s264 + $0xe38] sm:$0xf]
      %v1206 = vld [vmem:[%s264 + $0xe3c] sm:$0xf]
      %v1207 = vld [vmem:[%s264 + $0xe40] sm:$0xf]
      %v1208 = vld [vmem:[%s264 + $0xe44] sm:$0xf]
      %v1209 = vld [vmem:[%s264 + $0xe48] sm:$0xf]
      %v1210 = vld [vmem:[%s264 + $0xe4c] sm:$0xf]
      %v1211 = vld [vmem:[%s264 + $0xe50] sm:$0xf]
      %v1212 = vld [vmem:[%s264 + $0xe54] sm:$0xf]
      %v1213 = vld [vmem:[%s264 + $0xe58] sm:$0xf]
      %v1214 = vld [vmem:[%s264 + $0xe5c] sm:$0xf]
      %v1215 = vld [vmem:[%s264 + $0xe60] sm:$0xf]
      %v1216 = vld [vmem:[%s264 + $0xe64] sm:$0xf]
      %v1217 = vld [vmem:[%s264 + $0xe68] sm:$0xf]
      %v1218 = vld [vmem:[%s264 + $0xe6c] sm:$0xf]
      %v1219 = vld [vmem:[%s264 + $0xe70] sm:$0xf]
      %v1220 = vld [vmem:[%s264 + $0xe74] sm:$0xf]
      %v1221 = vld [vmem:[%s264 + $0xe78] sm:$0xf]
      %v1222 = vld [vmem:[%s264 + $0xe7c] sm:$0xf]
      %v1223 = vld [vmem:[%s264 + $0xe80] sm:$0xf]
      %v1224 = vld [vmem:[%s264 + $0xe84] sm:$0xf]
      %v1225 = vld [vmem:[%s264 + $0xe88] sm:$0xf]
      %v1226 = vld [vmem:[%s264 + $0xe8c] sm:$0xf]
      %v1227 = vld [vmem:[%s264 + $0xe90] sm:$0xf]
      %v1228 = vld [vmem:[%s264 + $0xe94] sm:$0xf]
      %v1229 = vld [vmem:[%s264 + $0xe98] sm:$0xf]
      %v1230 = vld [vmem:[%s264 + $0xe9c] sm:$0xf]
      %v1231 = vld [vmem:[%s264 + $0xea0] sm:$0xf]
      %v1232 = vld [vmem:[%s264 + $0xea4] sm:$0xf]
      %v1233 = vld [vmem:[%s264 + $0xea8] sm:$0xf]
      %v1234 = vld [vmem:[%s264 + $0xeac] sm:$0xf]
      %v1235 = vld [vmem:[%s264 + $0xeb0] sm:$0xf]
      %v1236 = vld [vmem:[%s264 + $0xeb4] sm:$0xf]
      %v1237 = vld [vmem:[%s264 + $0xeb8] sm:$0xf]
      %v1238 = vld [vmem:[%s264 + $0xebc] sm:$0xf]
      %v1239 = vld [vmem:[%s264 + $0xec0] sm:$0xf]
      %v1240 = vld [vmem:[%s264 + $0xec4] sm:$0xf]
      %v1241 = vld [vmem:[%s264 + $0xec8] sm:$0xf]
      %v1242 = vld [vmem:[%s264 + $0xecc] sm:$0xf]
      %v1243 = vld [vmem:[%s264 + $0xed0] sm:$0xf]
      %v1244 = vld [vmem:[%s264 + $0xed4] sm:$0xf]
      %v1245 = vld [vmem:[%s264 + $0xed8] sm:$0xf]
      %v1246 = vld [vmem:[%s264 + $0xedc] sm:$0xf]
      %v1247 = vld [vmem:[%s264 + $0xee0] sm:$0xf]
      %v1248 = vld [vmem:[%s264 + $0xee4] sm:$0xf]
      %v1249 = vld [vmem:[%s264 + $0xee8] sm:$0xf]
      %v1250 = vld [vmem:[%s264 + $0xeec] sm:$0xf]
      %v1251 = vld [vmem:[%s264 + $0xef0] sm:$0xf]
      %v1252 = vld [vmem:[%s264 + $0xef4] sm:$0xf]
      %v1253 = vld [vmem:[%s264 + $0xef8] sm:$0xf]
      %v1254 = vld [vmem:[%s264 + $0xefc] sm:$0xf]
      %v1255 = vld [vmem:[%s264 + $0xf00] sm:$0xf]
      %v1256 = vld [vmem:[%s264 + $0xf04] sm:$0xf]
      %v1257 = vld [vmem:[%s264 + $0xf08] sm:$0xf]
      %v1258 = vld [vmem:[%s264 + $0xf0c] sm:$0xf]
      %v1259 = vld [vmem:[%s264 + $0xf10] sm:$0xf]
      %v1260 = vld [vmem:[%s264 + $0xf14] sm:$0xf]
      %v1261 = vld [vmem:[%s264 + $0xf18] sm:$0xf]
      %v1262 = vld [vmem:[%s264 + $0xf1c] sm:$0xf]
      %v1263 = vld [vmem:[%s264 + $0xf20] sm:$0xf]
      %v1264 = vld [vmem:[%s264 + $0xf24] sm:$0xf]
      %v1265 = vld [vmem:[%s264 + $0xf28] sm:$0xf]
      %v1266 = vld [vmem:[%s264 + $0xf2c] sm:$0xf]
      %v1267 = vld [vmem:[%s264 + $0xf30] sm:$0xf]
      %v1268 = vld [vmem:[%s264 + $0xf34] sm:$0xf]
      %v1269 = vld [vmem:[%s264 + $0xf38] sm:$0xf]
      %v1270 = vld [vmem:[%s264 + $0xf3c] sm:$0xf]
      %v1271 = vld [vmem:[%s264 + $0xf40] sm:$0xf]
      %v1272 = vld [vmem:[%s264 + $0xf44] sm:$0xf]
      %v1273 = vld [vmem:[%s264 + $0xf48] sm:$0xf]
      %v1274 = vld [vmem:[%s264 + $0xf4c] sm:$0xf]
      %v1275 = vld [vmem:[%s264 + $0xf50] sm:$0xf]
      %v1276 = vld [vmem:[%s264 + $0xf54] sm:$0xf]
      %v1277 = vld [vmem:[%s264 + $0xf58] sm:$0xf]
      %v1278 = vld [vmem:[%s264 + $0xf5c] sm:$0xf]
      %v1279 = vld [vmem:[%s264 + $0xf60] sm:$0xf]
      %v1280 = vld [vmem:[%s264 + $0xf64] sm:$0xf]
      %v1281 = vld [vmem:[%s264 + $0xf68] sm:$0xf]
      %v1282 = vld [vmem:[%s264 + $0xf6c] sm:$0xf]
      %v1283 = vld [vmem:[%s264 + $0xf70] sm:$0xf]
      %v1284 = vld [vmem:[%s264 + $0xf74] sm:$0xf]
      %v1285 = vld [vmem:[%s264 + $0xf78] sm:$0xf]
      %v1286 = vld [vmem:[%s264 + $0xf7c] sm:$0xf]
      %v1287 = vld [vmem:[%s264 + $0xf80] sm:$0xf]
      %v1288 = vld [vmem:[%s264 + $0xf84] sm:$0xf]
      %v1289 = vld [vmem:[%s264 + $0xf88] sm:$0xf]
      %v1290 = vld [vmem:[%s264 + $0xf8c] sm:$0xf]
      %v1291 = vld [vmem:[%s264 + $0xf90] sm:$0xf]
      %v1292 = vld [vmem:[%s264 + $0xf94] sm:$0xf]
      %v1293 = vld [vmem:[%s264 + $0xf98] sm:$0xf]
      %v1294 = vld [vmem:[%s264 + $0xf9c] sm:$0xf]
      %v1295 = vld [vmem:[%s264 + $0xfa0] sm:$0xf]
      %v1296 = vld [vmem:[%s264 + $0xfa4] sm:$0xf]
      %v1297 = vld [vmem:[%s264 + $0xfa8] sm:$0xf]
      %v1298 = vld [vmem:[%s264 + $0xfac] sm:$0xf]
      %v1299 = vld [vmem:[%s264 + $0xfb0] sm:$0xf]
      %v1300 = vld [vmem:[%s264 + $0xfb4] sm:$0xf]
      %v1301 = vld [vmem:[%s264 + $0xfb8] sm:$0xf]
      %v1302 = vld [vmem:[%s264 + $0xfbc] sm:$0xf]
      %v1303 = vld [vmem:[%s264 + $0xfc0] sm:$0xf]
      %v1304 = vld [vmem:[%s264 + $0xfc4] sm:$0xf]
      %v1305 = vld [vmem:[%s264 + $0xfc8] sm:$0xf]
      %v1306 = vld [vmem:[%s264 + $0xfcc] sm:$0xf]
      %v1307 = vld [vmem:[%s264 + $0xfd0] sm:$0xf]
      %v1308 = vld [vmem:[%s264 + $0xfd4] sm:$0xf]
      %v1309 = vld [vmem:[%s264 + $0xfd8] sm:$0xf]
      %v1310 = vld [vmem:[%s264 + $0xfdc] sm:$0xf]
      %v1311 = vld [vmem:[%s264 + $0xfe0] sm:$0xf]
      %v1312 = vld [vmem:[%s264 + $0xfe4] sm:$0xf]
      %v1313 = vld [vmem:[%s264 + $0xfe8] sm:$0xf]
      %v1314 = vld [vmem:[%s264 + $0xfec] sm:$0xf]
      %v1315 = vld [vmem:[%s264 + $0xff0] sm:$0xf]
      %v1316 = vld [vmem:[%s264 + $0xff4] sm:$0xf]
      %v1317 = vld [vmem:[%s264 + $0xff8] sm:$0xf]
      %v1318 = vld [vmem:[%s264 + $0xffc] sm:$0xf]
      %v1327 = vcombine.high %v287, %v287
      %v1329 = vunpack.c.l.s4 1966171168
      %v1330 = vunpack.c.0.s8 %v1329
      %v1331 = vlaneseq
      %v1332 = vshrl.u32 %v1331, 7
      %v1333 = vsub.s32 %v1330, %v1332
      %v1334 = vrot.slane %v287, %v1333
      %v1336 = vunpack.c.l.s4 1966171168
      %v1337 = vunpack.c.0.s8 %v1336
      %v1338 = vlaneseq
      %v1339 = vshrl.u32 %v1338, 7
      %v1340 = vsub.s32 %v1337, %v1339
      %v1341 = vrot.slane %v1327, %v1340
      %v1342 = vcombine.high %v1334, %v1334
      %v1343 = vcombine.high %v1341, %v1341
      %v1345 = vunpack.c.l.s4 1966171168
      %v1346 = vunpack.c.0.s8 %v1345
      %v1347 = vlaneseq
      %v1348 = vshrl.u32 %v1347, 7
      %v1349 = vsub.s32 %v1346, %v1348
      %v1350 = vrot.slane %v1334, %v1349
      %v1352 = vunpack.c.l.s4 1966171168
      %v1353 = vunpack.c.0.s8 %v1352
      %v1354 = vlaneseq
      %v1355 = vshrl.u32 %v1354, 7
      %v1356 = vsub.s32 %v1353, %v1355
      %v1357 = vrot.slane %v1341, %v1356
      %v1359 = vunpack.c.l.s4 1966171168
      %v1360 = vunpack.c.0.s8 %v1359
      %v1361 = vlaneseq
      %v1362 = vshrl.u32 %v1361, 7
      %v1363 = vsub.s32 %v1360, %v1362
      %v1364 = vrot.slane %v1342, %v1363
      %v1366 = vunpack.c.l.s4 1966171168
      %v1367 = vunpack.c.0.s8 %v1366
      %v1368 = vlaneseq
      %v1369 = vshrl.u32 %v1368, 7
      %v1370 = vsub.s32 %v1367, %v1369
      %v1371 = vrot.slane %v1343, %v1370
      %v1372 = vcombine.high %v1350, %v1350
      %v1373 = vcombine.high %v1357, %v1357
      %v1374 = vcombine.high %v1364, %v1364
      %v1375 = vcombine.high %v1371, %v1371
      %v1376 = vcombine.high %v288, %v288
      %v1378 = vunpack.c.l.s4 1966171168
      %v1379 = vunpack.c.0.s8 %v1378
      %v1380 = vlaneseq
      %v1381 = vshrl.u32 %v1380, 7
      %v1382 = vsub.s32 %v1379, %v1381
      %v1383 = vrot.slane %v288, %v1382
      %v1385 = vunpack.c.l.s4 1966171168
      %v1386 = vunpack.c.0.s8 %v1385
      %v1387 = vlaneseq
      %v1388 = vshrl.u32 %v1387, 7
      %v1389 = vsub.s32 %v1386, %v1388
      %v1390 = vrot.slane %v1376, %v1389
      %v1391 = vcombine.high %v1383, %v1383
      %v1392 = vcombine.high %v1390, %v1390
      %v1394 = vunpack.c.l.s4 1966171168
      %v1395 = vunpack.c.0.s8 %v1394
      %v1396 = vlaneseq
      %v1397 = vshrl.u32 %v1396, 7
      %v1398 = vsub.s32 %v1395, %v1397
      %v1399 = vrot.slane %v1383, %v1398
      %v1401 = vunpack.c.l.s4 1966171168
      %v1402 = vunpack.c.0.s8 %v1401
      %v1403 = vlaneseq
      %v1404 = vshrl.u32 %v1403, 7
      %v1405 = vsub.s32 %v1402, %v1404
      %v1406 = vrot.slane %v1390, %v1405
      %v1408 = vunpack.c.l.s4 1966171168
      %v1409 = vunpack.c.0.s8 %v1408
      %v1410 = vlaneseq
      %v1411 = vshrl.u32 %v1410, 7
      %v1412 = vsub.s32 %v1409, %v1411
      %v1413 = vrot.slane %v1391, %v1412
      %v1415 = vunpack.c.l.s4 1966171168
      %v1416 = vunpack.c.0.s8 %v1415
      %v1417 = vlaneseq
      %v1418 = vshrl.u32 %v1417, 7
      %v1419 = vsub.s32 %v1416, %v1418
      %v1420 = vrot.slane %v1392, %v1419
      %v1421 = vcombine.high %v1399, %v1399
      %v1422 = vcombine.high %v1406, %v1406
      %v1423 = vcombine.high %v1413, %v1413
      %v1424 = vcombine.high %v1420, %v1420
      %v1425 = vcombine.high %v289, %v289
      %v1427 = vunpack.c.l.s4 1966171168
      %v1428 = vunpack.c.0.s8 %v1427
      %v1429 = vlaneseq
      %v1430 = vshrl.u32 %v1429, 7
      %v1431 = vsub.s32 %v1428, %v1430
      %v1432 = vrot.slane %v289, %v1431
      %v1434 = vunpack.c.l.s4 1966171168
      %v1435 = vunpack.c.0.s8 %v1434
      %v1436 = vlaneseq
      %v1437 = vshrl.u32 %v1436, 7
      %v1438 = vsub.s32 %v1435, %v1437
      %v1439 = vrot.slane %v1425, %v1438
      %v1440 = vcombine.high %v1432, %v1432
      %v1441 = vcombine.high %v1439, %v1439
      %v1443 = vunpack.c.l.s4 1966171168
      %v1444 = vunpack.c.0.s8 %v1443
      %v1445 = vlaneseq
      %v1446 = vshrl.u32 %v1445, 7
      %v1447 = vsub.s32 %v1444, %v1446
      %v1448 = vrot.slane %v1432, %v1447
      %v1450 = vunpack.c.l.s4 1966171168
      %v1451 = vunpack.c.0.s8 %v1450
      %v1452 = vlaneseq
      %v1453 = vshrl.u32 %v1452, 7
      %v1454 = vsub.s32 %v1451, %v1453
      %v1455 = vrot.slane %v1439, %v1454
      %v1457 = vunpack.c.l.s4 1966171168
      %v1458 = vunpack.c.0.s8 %v1457
      %v1459 = vlaneseq
      %v1460 = vshrl.u32 %v1459, 7
      %v1461 = vsub.s32 %v1458, %v1460
      %v1462 = vrot.slane %v1440, %v1461
      %v1464 = vunpack.c.l.s4 1966171168
      %v1465 = vunpack.c.0.s8 %v1464
      %v1466 = vlaneseq
      %v1467 = vshrl.u32 %v1466, 7
      %v1468 = vsub.s32 %v1465, %v1467
      %v1469 = vrot.slane %v1441, %v1468
      %v1470 = vcombine.high %v1448, %v1448
      %v1471 = vcombine.high %v1455, %v1455
      %v1472 = vcombine.high %v1462, %v1462
      %v1473 = vcombine.high %v1469, %v1469
      %v1474 = vcombine.high %v290, %v290
      %v1476 = vunpack.c.l.s4 1966171168
      %v1477 = vunpack.c.0.s8 %v1476
      %v1478 = vlaneseq
      %v1479 = vshrl.u32 %v1478, 7
      %v1480 = vsub.s32 %v1477, %v1479
      %v1481 = vrot.slane %v290, %v1480
      %v1483 = vunpack.c.l.s4 1966171168
      %v1484 = vunpack.c.0.s8 %v1483
      %v1485 = vlaneseq
      %v1486 = vshrl.u32 %v1485, 7
      %v1487 = vsub.s32 %v1484, %v1486
      %v1488 = vrot.slane %v1474, %v1487
      %v1489 = vcombine.high %v1481, %v1481
      %v1490 = vcombine.high %v1488, %v1488
      %v1492 = vunpack.c.l.s4 1966171168
      %v1493 = vunpack.c.0.s8 %v1492
      %v1494 = vlaneseq
      %v1495 = vshrl.u32 %v1494, 7
      %v1496 = vsub.s32 %v1493, %v1495
      %v1497 = vrot.slane %v1481, %v1496
      %v1499 = vunpack.c.l.s4 1966171168
      %v1500 = vunpack.c.0.s8 %v1499
      %v1501 = vlaneseq
      %v1502 = vshrl.u32 %v1501, 7
      %v1503 = vsub.s32 %v1500, %v1502
      %v1504 = vrot.slane %v1488, %v1503
      %v1506 = vunpack.c.l.s4 1966171168
      %v1507 = vunpack.c.0.s8 %v1506
      %v1508 = vlaneseq
      %v1509 = vshrl.u32 %v1508, 7
      %v1510 = vsub.s32 %v1507, %v1509
      %v1511 = vrot.slane %v1489, %v1510
      %v1513 = vunpack.c.l.s4 1966171168
      %v1514 = vunpack.c.0.s8 %v1513
      %v1515 = vlaneseq
      %v1516 = vshrl.u32 %v1515, 7
      %v1517 = vsub.s32 %v1514, %v1516
      %v1518 = vrot.slane %v1490, %v1517
      %v1519 = vcombine.high %v1497, %v1497
      %v1520 = vcombine.high %v1504, %v1504
      %v1521 = vcombine.high %v1511, %v1511
      %v1522 = vcombine.high %v1518, %v1518
      %v1523 = vcombine.high %v291, %v291
      %v1525 = vunpack.c.l.s4 1966171168
      %v1526 = vunpack.c.0.s8 %v1525
      %v1527 = vlaneseq
      %v1528 = vshrl.u32 %v1527, 7
      %v1529 = vsub.s32 %v1526, %v1528
      %v1530 = vrot.slane %v291, %v1529
      %v1532 = vunpack.c.l.s4 1966171168
      %v1533 = vunpack.c.0.s8 %v1532
      %v1534 = vlaneseq
      %v1535 = vshrl.u32 %v1534, 7
      %v1536 = vsub.s32 %v1533, %v1535
      %v1537 = vrot.slane %v1523, %v1536
      %v1538 = vcombine.high %v1530, %v1530
      %v1539 = vcombine.high %v1537, %v1537
      %v1541 = vunpack.c.l.s4 1966171168
      %v1542 = vunpack.c.0.s8 %v1541
      %v1543 = vlaneseq
      %v1544 = vshrl.u32 %v1543, 7
      %v1545 = vsub.s32 %v1542, %v1544
      %v1546 = vrot.slane %v1530, %v1545
      %v1548 = vunpack.c.l.s4 1966171168
      %v1549 = vunpack.c.0.s8 %v1548
      %v1550 = vlaneseq
      %v1551 = vshrl.u32 %v1550, 7
      %v1552 = vsub.s32 %v1549, %v1551
      %v1553 = vrot.slane %v1537, %v1552
      %v1555 = vunpack.c.l.s4 1966171168
      %v1556 = vunpack.c.0.s8 %v1555
      %v1557 = vlaneseq
      %v1558 = vshrl.u32 %v1557, 7
      %v1559 = vsub.s32 %v1556, %v1558
      %v1560 = vrot.slane %v1538, %v1559
      %v1562 = vunpack.c.l.s4 1966171168
      %v1563 = vunpack.c.0.s8 %v1562
      %v1564 = vlaneseq
      %v1565 = vshrl.u32 %v1564, 7
      %v1566 = vsub.s32 %v1563, %v1565
      %v1567 = vrot.slane %v1539, %v1566
      %v1568 = vcombine.high %v1546, %v1546
      %v1569 = vcombine.high %v1553, %v1553
      %v1570 = vcombine.high %v1560, %v1560
      %v1571 = vcombine.high %v1567, %v1567
      %v1572 = vcombine.high %v292, %v292
      %v1574 = vunpack.c.l.s4 1966171168
      %v1575 = vunpack.c.0.s8 %v1574
      %v1576 = vlaneseq
      %v1577 = vshrl.u32 %v1576, 7
      %v1578 = vsub.s32 %v1575, %v1577
      %v1579 = vrot.slane %v292, %v1578
      %v1581 = vunpack.c.l.s4 1966171168
      %v1582 = vunpack.c.0.s8 %v1581
      %v1583 = vlaneseq
      %v1584 = vshrl.u32 %v1583, 7
      %v1585 = vsub.s32 %v1582, %v1584
      %v1586 = vrot.slane %v1572, %v1585
      %v1587 = vcombine.high %v1579, %v1579
      %v1588 = vcombine.high %v1586, %v1586
      %v1590 = vunpack.c.l.s4 1966171168
      %v1591 = vunpack.c.0.s8 %v1590
      %v1592 = vlaneseq
      %v1593 = vshrl.u32 %v1592, 7
      %v1594 = vsub.s32 %v1591, %v1593
      %v1595 = vrot.slane %v1579, %v1594
      %v1597 = vunpack.c.l.s4 1966171168
      %v1598 = vunpack.c.0.s8 %v1597
      %v1599 = vlaneseq
      %v1600 = vshrl.u32 %v1599, 7
      %v1601 = vsub.s32 %v1598, %v1600
      %v1602 = vrot.slane %v1586, %v1601
      %v1604 = vunpack.c.l.s4 1966171168
      %v1605 = vunpack.c.0.s8 %v1604
      %v1606 = vlaneseq
      %v1607 = vshrl.u32 %v1606, 7
      %v1608 = vsub.s32 %v1605, %v1607
      %v1609 = vrot.slane %v1587, %v1608
      %v1611 = vunpack.c.l.s4 1966171168
      %v1612 = vunpack.c.0.s8 %v1611
      %v1613 = vlaneseq
      %v1614 = vshrl.u32 %v1613, 7
      %v1615 = vsub.s32 %v1612, %v1614
      %v1616 = vrot.slane %v1588, %v1615
      %v1617 = vcombine.high %v1595, %v1595
      %v1618 = vcombine.high %v1602, %v1602
      %v1619 = vcombine.high %v1609, %v1609
      %v1620 = vcombine.high %v1616, %v1616
      %v1621 = vcombine.high %v293, %v293
      %v1623 = vunpack.c.l.s4 1966171168
      %v1624 = vunpack.c.0.s8 %v1623
      %v1625 = vlaneseq
      %v1626 = vshrl.u32 %v1625, 7
      %v1627 = vsub.s32 %v1624, %v1626
      %v1628 = vrot.slane %v293, %v1627
      %v1630 = vunpack.c.l.s4 1966171168
      %v1631 = vunpack.c.0.s8 %v1630
      %v1632 = vlaneseq
      %v1633 = vshrl.u32 %v1632, 7
      %v1634 = vsub.s32 %v1631, %v1633
      %v1635 = vrot.slane %v1621, %v1634
      %v1636 = vcombine.high %v1628, %v1628
      %v1637 = vcombine.high %v1635, %v1635
      %v1639 = vunpack.c.l.s4 1966171168
      %v1640 = vunpack.c.0.s8 %v1639
      %v1641 = vlaneseq
      %v1642 = vshrl.u32 %v1641, 7
      %v1643 = vsub.s32 %v1640, %v1642
      %v1644 = vrot.slane %v1628, %v1643
      %v1646 = vunpack.c.l.s4 1966171168
      %v1647 = vunpack.c.0.s8 %v1646
      %v1648 = vlaneseq
      %v1649 = vshrl.u32 %v1648, 7
      %v1650 = vsub.s32 %v1647, %v1649
      %v1651 = vrot.slane %v1635, %v1650
      %v1653 = vunpack.c.l.s4 1966171168
      %v1654 = vunpack.c.0.s8 %v1653
      %v1655 = vlaneseq
      %v1656 = vshrl.u32 %v1655, 7
      %v1657 = vsub.s32 %v1654, %v1656
      %v1658 = vrot.slane %v1636, %v1657
      %v1660 = vunpack.c.l.s4 1966171168
      %v1661 = vunpack.c.0.s8 %v1660
      %v1662 = vlaneseq
      %v1663 = vshrl.u32 %v1662, 7
      %v1664 = vsub.s32 %v1661, %v1663
      %v1665 = vrot.slane %v1637, %v1664
      %v1666 = vcombine.high %v1644, %v1644
      %v1667 = vcombine.high %v1651, %v1651
      %v1668 = vcombine.high %v1658, %v1658
      %v1669 = vcombine.high %v1665, %v1665
      %v1670 = vcombine.high %v294, %v294
      %v1672 = vunpack.c.l.s4 1966171168
      %v1673 = vunpack.c.0.s8 %v1672
      %v1674 = vlaneseq
      %v1675 = vshrl.u32 %v1674, 7
      %v1676 = vsub.s32 %v1673, %v1675
      %v1677 = vrot.slane %v294, %v1676
      %v1679 = vunpack.c.l.s4 1966171168
      %v1680 = vunpack.c.0.s8 %v1679
      %v1681 = vlaneseq
      %v1682 = vshrl.u32 %v1681, 7
      %v1683 = vsub.s32 %v1680, %v1682
      %v1684 = vrot.slane %v1670, %v1683
      %v1685 = vcombine.high %v1677, %v1677
      %v1686 = vcombine.high %v1684, %v1684
      %v1688 = vunpack.c.l.s4 1966171168
      %v1689 = vunpack.c.0.s8 %v1688
      %v1690 = vlaneseq
      %v1691 = vshrl.u32 %v1690, 7
      %v1692 = vsub.s32 %v1689, %v1691
      %v1693 = vrot.slane %v1677, %v1692
      %v1695 = vunpack.c.l.s4 1966171168
      %v1696 = vunpack.c.0.s8 %v1695
      %v1697 = vlaneseq
      %v1698 = vshrl.u32 %v1697, 7
      %v1699 = vsub.s32 %v1696, %v1698
      %v1700 = vrot.slane %v1684, %v1699
      %v1702 = vunpack.c.l.s4 1966171168
      %v1703 = vunpack.c.0.s8 %v1702
      %v1704 = vlaneseq
      %v1705 = vshrl.u32 %v1704, 7
      %v1706 = vsub.s32 %v1703, %v1705
      %v1707 = vrot.slane %v1685, %v1706
      %v1709 = vunpack.c.l.s4 1966171168
      %v1710 = vunpack.c.0.s8 %v1709
      %v1711 = vlaneseq
      %v1712 = vshrl.u32 %v1711, 7
      %v1713 = vsub.s32 %v1710, %v1712
      %v1714 = vrot.slane %v1686, %v1713
      %v1715 = vcombine.high %v1693, %v1693
      %v1716 = vcombine.high %v1700, %v1700
      %v1717 = vcombine.high %v1707, %v1707
      %v1718 = vcombine.high %v1714, %v1714
      %v2807 = vunpack.c.l.b16 %v295
      %v2808 = vunpack.c.l.b16 %v296
      %v2809 = vunpack.c.l.b16 %v297
      %v2810 = vunpack.c.l.b16 %v298
      %v2811 = vunpack.c.l.b16 %v299
      %v2812 = vunpack.c.l.b16 %v300
      %v2813 = vunpack.c.l.b16 %v301
      %v2814 = vunpack.c.l.b16 %v302
      %v2815 = vunpack.c.l.b16 %v303
      %v2816 = vunpack.c.l.b16 %v304
      %v2817 = vunpack.c.l.b16 %v305
      %v2818 = vunpack.c.l.b16 %v306
      %v2819 = vunpack.c.l.b16 %v307
      %v2820 = vunpack.c.l.b16 %v308
      %v2821 = vunpack.c.l.b16 %v309
      %v2822 = vunpack.c.l.b16 %v310
      %v2823 = vunpack.c.l.b16 %v311
      %v2824 = vunpack.c.l.b16 %v312
      %v2825 = vunpack.c.l.b16 %v313
      %v2826 = vunpack.c.l.b16 %v314
      %v2827 = vunpack.c.l.b16 %v315
      %v2828 = vunpack.c.l.b16 %v316
      %v2829 = vunpack.c.l.b16 %v317
      %v2830 = vunpack.c.l.b16 %v318
      %v2831 = vunpack.c.l.b16 %v319
      %v2832 = vunpack.c.l.b16 %v320
      %v2833 = vunpack.c.l.b16 %v321
      %v2834 = vunpack.c.l.b16 %v322
      %v2835 = vunpack.c.l.b16 %v323
      %v2836 = vunpack.c.l.b16 %v324
      %v2837 = vunpack.c.l.b16 %v325
      %v2838 = vunpack.c.l.b16 %v326
      %v2839 = vunpack.c.l.b16 %v327
      %v2840 = vunpack.c.l.b16 %v328
      %v2841 = vunpack.c.l.b16 %v329
      %v2842 = vunpack.c.l.b16 %v330
      %v2843 = vunpack.c.l.b16 %v331
      %v2844 = vunpack.c.l.b16 %v332
      %v2845 = vunpack.c.l.b16 %v333
      %v2846 = vunpack.c.l.b16 %v334
      %v2847 = vunpack.c.l.b16 %v335
      %v2848 = vunpack.c.l.b16 %v336
      %v2849 = vunpack.c.l.b16 %v337
      %v2850 = vunpack.c.l.b16 %v338
      %v2851 = vunpack.c.l.b16 %v339
      %v2852 = vunpack.c.l.b16 %v340
      %v2853 = vunpack.c.l.b16 %v341
      %v2854 = vunpack.c.l.b16 %v342
      %v2855 = vunpack.c.l.b16 %v343
      %v2856 = vunpack.c.l.b16 %v344
      %v2857 = vunpack.c.l.b16 %v345
      %v2858 = vunpack.c.l.b16 %v346
      %v2859 = vunpack.c.l.b16 %v347
      %v2860 = vunpack.c.l.b16 %v348
      %v2861 = vunpack.c.l.b16 %v349
      %v2862 = vunpack.c.l.b16 %v350
      %v2863 = vunpack.c.l.b16 %v351
      %v2864 = vunpack.c.l.b16 %v352
      %v2865 = vunpack.c.l.b16 %v353
      %v2866 = vunpack.c.l.b16 %v354
      %v2867 = vunpack.c.l.b16 %v355
      %v2868 = vunpack.c.l.b16 %v356
      %v2869 = vunpack.c.l.b16 %v357
      %v2870 = vunpack.c.l.b16 %v358
      %v2871 = vunpack.c.l.b16 %v359
      %v2872 = vunpack.c.l.b16 %v360
      %v2873 = vunpack.c.l.b16 %v361
      %v2874 = vunpack.c.l.b16 %v362
      %v2875 = vunpack.c.l.b16 %v363
      %v2876 = vunpack.c.l.b16 %v364
      %v2877 = vunpack.c.l.b16 %v365
      %v2878 = vunpack.c.l.b16 %v366
      %v2879 = vunpack.c.l.b16 %v367
      %v2880 = vunpack.c.l.b16 %v368
      %v2881 = vunpack.c.l.b16 %v369
      %v2882 = vunpack.c.l.b16 %v370
      %v2883 = vunpack.c.l.b16 %v371
      %v2884 = vunpack.c.l.b16 %v372
      %v2885 = vunpack.c.l.b16 %v373
      %v2886 = vunpack.c.l.b16 %v374
      %v2887 = vunpack.c.l.b16 %v375
      %v2888 = vunpack.c.l.b16 %v376
      %v2889 = vunpack.c.l.b16 %v377
      %v2890 = vunpack.c.l.b16 %v378
      %v2891 = vunpack.c.l.b16 %v379
      %v2892 = vunpack.c.l.b16 %v380
      %v2893 = vunpack.c.l.b16 %v381
      %v2894 = vunpack.c.l.b16 %v382
      %v2895 = vunpack.c.l.b16 %v383
      %v2896 = vunpack.c.l.b16 %v384
      %v2897 = vunpack.c.l.b16 %v385
      %v2898 = vunpack.c.l.b16 %v386
      %v2899 = vunpack.c.l.b16 %v387
      %v2900 = vunpack.c.l.b16 %v388
      %v2901 = vunpack.c.l.b16 %v389
      %v2902 = vunpack.c.l.b16 %v390
      %v2903 = vunpack.c.l.b16 %v391
      %v2904 = vunpack.c.l.b16 %v392
      %v2905 = vunpack.c.l.b16 %v393
      %v2906 = vunpack.c.l.b16 %v394
      %v2907 = vunpack.c.l.b16 %v395
      %v2908 = vunpack.c.l.b16 %v396
      %v2909 = vunpack.c.l.b16 %v397
      %v2910 = vunpack.c.l.b16 %v398
      %v2911 = vunpack.c.l.b16 %v399
      %v2912 = vunpack.c.l.b16 %v400
      %v2913 = vunpack.c.l.b16 %v401
      %v2914 = vunpack.c.l.b16 %v402
      %v2915 = vunpack.c.l.b16 %v403
      %v2916 = vunpack.c.l.b16 %v404
      %v2917 = vunpack.c.l.b16 %v405
      %v2918 = vunpack.c.l.b16 %v406
      %v2919 = vunpack.c.l.b16 %v407
      %v2920 = vunpack.c.l.b16 %v408
      %v2921 = vunpack.c.l.b16 %v409
      %v2922 = vunpack.c.l.b16 %v410
      %v2923 = vunpack.c.l.b16 %v411
      %v2924 = vunpack.c.l.b16 %v412
      %v2925 = vunpack.c.l.b16 %v413
      %v2926 = vunpack.c.l.b16 %v414
      %v2927 = vunpack.c.l.b16 %v415
      %v2928 = vunpack.c.l.b16 %v416
      %v2929 = vunpack.c.l.b16 %v417
      %v2930 = vunpack.c.l.b16 %v418
      %v2931 = vunpack.c.l.b16 %v419
      %v2932 = vunpack.c.l.b16 %v420
      %v2933 = vunpack.c.l.b16 %v421
      %v2934 = vunpack.c.l.b16 %v422
      %v2935 = vunpack.c.l.b16 %v423
      %v2936 = vunpack.c.l.b16 %v424
      %v2937 = vunpack.c.l.b16 %v425
      %v2938 = vunpack.c.l.b16 %v426
      %v2939 = vunpack.c.l.b16 %v427
      %v2940 = vunpack.c.l.b16 %v428
      %v2941 = vunpack.c.l.b16 %v429
      %v2942 = vunpack.c.l.b16 %v430
      %v2943 = vunpack.c.l.b16 %v431
      %v2944 = vunpack.c.l.b16 %v432
      %v2945 = vunpack.c.l.b16 %v433
      %v2946 = vunpack.c.l.b16 %v434
      %v2947 = vunpack.c.l.b16 %v435
      %v2948 = vunpack.c.l.b16 %v436
      %v2949 = vunpack.c.l.b16 %v437
      %v2950 = vunpack.c.l.b16 %v438
      %v2951 = vunpack.c.l.b16 %v439
      %v2952 = vunpack.c.l.b16 %v440
      %v2953 = vunpack.c.l.b16 %v441
      %v2954 = vunpack.c.l.b16 %v442
      %v2955 = vunpack.c.l.b16 %v443
      %v2956 = vunpack.c.l.b16 %v444
      %v2957 = vunpack.c.l.b16 %v445
      %v2958 = vunpack.c.l.b16 %v446
      %v2959 = vunpack.c.l.b16 %v447
      %v2960 = vunpack.c.l.b16 %v448
      %v2961 = vunpack.c.l.b16 %v449
      %v2962 = vunpack.c.l.b16 %v450
      %v2963 = vunpack.c.l.b16 %v451
      %v2964 = vunpack.c.l.b16 %v452
      %v2965 = vunpack.c.l.b16 %v453
      %v2966 = vunpack.c.l.b16 %v454
      %v2967 = vunpack.c.l.b16 %v455
      %v2968 = vunpack.c.l.b16 %v456
      %v2969 = vunpack.c.l.b16 %v457
      %v2970 = vunpack.c.l.b16 %v458
      %v2971 = vunpack.c.l.b16 %v459
      %v2972 = vunpack.c.l.b16 %v460
      %v2973 = vunpack.c.l.b16 %v461
      %v2974 = vunpack.c.l.b16 %v462
      %v2975 = vunpack.c.l.b16 %v463
      %v2976 = vunpack.c.l.b16 %v464
      %v2977 = vunpack.c.l.b16 %v465
      %v2978 = vunpack.c.l.b16 %v466
      %v2979 = vunpack.c.l.b16 %v467
      %v2980 = vunpack.c.l.b16 %v468
      %v2981 = vunpack.c.l.b16 %v469
      %v2982 = vunpack.c.l.b16 %v470
      %v2983 = vunpack.c.l.b16 %v471
      %v2984 = vunpack.c.l.b16 %v472
      %v2985 = vunpack.c.l.b16 %v473
      %v2986 = vunpack.c.l.b16 %v474
      %v2987 = vunpack.c.l.b16 %v475
      %v2988 = vunpack.c.l.b16 %v476
      %v2989 = vunpack.c.l.b16 %v477
      %v2990 = vunpack.c.l.b16 %v478
      %v2991 = vunpack.c.l.b16 %v479
      %v2992 = vunpack.c.l.b16 %v480
      %v2993 = vunpack.c.l.b16 %v481
      %v2994 = vunpack.c.l.b16 %v482
      %v2995 = vunpack.c.l.b16 %v483
      %v2996 = vunpack.c.l.b16 %v484
      %v2997 = vunpack.c.l.b16 %v485
      %v2998 = vunpack.c.l.b16 %v486
      %v2999 = vunpack.c.l.b16 %v487
      %v3000 = vunpack.c.l.b16 %v488
      %v3001 = vunpack.c.l.b16 %v489
      %v3002 = vunpack.c.l.b16 %v490
      %v3003 = vunpack.c.l.b16 %v491
      %v3004 = vunpack.c.l.b16 %v492
      %v3005 = vunpack.c.l.b16 %v493
      %v3006 = vunpack.c.l.b16 %v494
      %v3007 = vunpack.c.l.b16 %v495
      %v3008 = vunpack.c.l.b16 %v496
      %v3009 = vunpack.c.l.b16 %v497
      %v3010 = vunpack.c.l.b16 %v498
      %v3011 = vunpack.c.l.b16 %v499
      %v3012 = vunpack.c.l.b16 %v500
      %v3013 = vunpack.c.l.b16 %v501
      %v3014 = vunpack.c.l.b16 %v502
      %v3015 = vunpack.c.l.b16 %v503
      %v3016 = vunpack.c.l.b16 %v504
      %v3017 = vunpack.c.l.b16 %v505
      %v3018 = vunpack.c.l.b16 %v506
      %v3019 = vunpack.c.l.b16 %v507
      %v3020 = vunpack.c.l.b16 %v508
      %v3021 = vunpack.c.l.b16 %v509
      %v3022 = vunpack.c.l.b16 %v510
      %v3023 = vunpack.c.l.b16 %v511
      %v3024 = vunpack.c.l.b16 %v512
      %v3025 = vunpack.c.l.b16 %v513
      %v3026 = vunpack.c.l.b16 %v514
      %v3027 = vunpack.c.l.b16 %v515
      %v3028 = vunpack.c.l.b16 %v516
      %v3029 = vunpack.c.l.b16 %v517
      %v3030 = vunpack.c.l.b16 %v518
      %v3031 = vunpack.c.l.b16 %v519
      %v3032 = vunpack.c.l.b16 %v520
      %v3033 = vunpack.c.l.b16 %v521
      %v3034 = vunpack.c.l.b16 %v522
      %v3035 = vunpack.c.l.b16 %v523
      %v3036 = vunpack.c.l.b16 %v524
      %v3037 = vunpack.c.l.b16 %v525
      %v3038 = vunpack.c.l.b16 %v526
      %v3039 = vunpack.c.l.b16 %v527
      %v3040 = vunpack.c.l.b16 %v528
      %v3041 = vunpack.c.l.b16 %v529
      %v3042 = vunpack.c.l.b16 %v530
      %v3043 = vunpack.c.l.b16 %v531
      %v3044 = vunpack.c.l.b16 %v532
      %v3045 = vunpack.c.l.b16 %v533
      %v3046 = vunpack.c.l.b16 %v534
      %v3047 = vunpack.c.l.b16 %v535
      %v3048 = vunpack.c.l.b16 %v536
      %v3049 = vunpack.c.l.b16 %v537
      %v3050 = vunpack.c.l.b16 %v538
      %v3051 = vunpack.c.l.b16 %v539
      %v3052 = vunpack.c.l.b16 %v540
      %v3053 = vunpack.c.l.b16 %v541
      %v3054 = vunpack.c.l.b16 %v542
      %v3055 = vunpack.c.l.b16 %v543
      %v3056 = vunpack.c.l.b16 %v544
      %v3057 = vunpack.c.l.b16 %v545
      %v3058 = vunpack.c.l.b16 %v546
      %v3059 = vunpack.c.l.b16 %v547
      %v3060 = vunpack.c.l.b16 %v548
      %v3061 = vunpack.c.l.b16 %v549
      %v3062 = vunpack.c.l.b16 %v550
      %v3063 = vunpack.c.l.b16 %v551
      %v3064 = vunpack.c.l.b16 %v552
      %v3065 = vunpack.c.l.b16 %v553
      %v3066 = vunpack.c.l.b16 %v554
      %v3067 = vunpack.c.l.b16 %v555
      %v3068 = vunpack.c.l.b16 %v556
      %v3069 = vunpack.c.l.b16 %v557
      %v3070 = vunpack.c.l.b16 %v558
      %v3071 = vunpack.c.l.b16 %v559
      %v3072 = vunpack.c.l.b16 %v560
      %v3073 = vunpack.c.l.b16 %v561
      %v3074 = vunpack.c.l.b16 %v562
      %v3075 = vunpack.c.l.b16 %v563
      %v3076 = vunpack.c.l.b16 %v564
      %v3077 = vunpack.c.l.b16 %v565
      %v3078 = vunpack.c.l.b16 %v566
      %v3079 = vunpack.c.l.b16 %v567
      %v3080 = vunpack.c.l.b16 %v568
      %v3081 = vunpack.c.l.b16 %v569
      %v3082 = vunpack.c.l.b16 %v570
      %v3083 = vunpack.c.l.b16 %v571
      %v3084 = vunpack.c.l.b16 %v572
      %v3085 = vunpack.c.l.b16 %v573
      %v3086 = vunpack.c.l.b16 %v574
      %v3087 = vunpack.c.l.b16 %v575
      %v3088 = vunpack.c.l.b16 %v576
      %v3089 = vunpack.c.l.b16 %v577
      %v3090 = vunpack.c.l.b16 %v578
      %v3091 = vunpack.c.l.b16 %v579
      %v3092 = vunpack.c.l.b16 %v580
      %v3093 = vunpack.c.l.b16 %v581
      %v3094 = vunpack.c.l.b16 %v582
      %v3095 = vunpack.c.l.b16 %v583
      %v3096 = vunpack.c.l.b16 %v584
      %v3097 = vunpack.c.l.b16 %v585
      %v3098 = vunpack.c.l.b16 %v586
      %v3099 = vunpack.c.l.b16 %v587
      %v3100 = vunpack.c.l.b16 %v588
      %v3101 = vunpack.c.l.b16 %v589
      %v3102 = vunpack.c.l.b16 %v590
      %v3103 = vunpack.c.l.b16 %v591
      %v3104 = vunpack.c.l.b16 %v592
      %v3105 = vunpack.c.l.b16 %v593
      %v3106 = vunpack.c.l.b16 %v594
      %v3107 = vunpack.c.l.b16 %v595
      %v3108 = vunpack.c.l.b16 %v596
      %v3109 = vunpack.c.l.b16 %v597
      %v3110 = vunpack.c.l.b16 %v598
      %v3111 = vunpack.c.l.b16 %v599
      %v3112 = vunpack.c.l.b16 %v600
      %v3113 = vunpack.c.l.b16 %v601
      %v3114 = vunpack.c.l.b16 %v602
      %v3115 = vunpack.c.l.b16 %v603
      %v3116 = vunpack.c.l.b16 %v604
      %v3117 = vunpack.c.l.b16 %v605
      %v3118 = vunpack.c.l.b16 %v606
      %v3119 = vunpack.c.l.b16 %v607
      %v3120 = vunpack.c.l.b16 %v608
      %v3121 = vunpack.c.l.b16 %v609
      %v3122 = vunpack.c.l.b16 %v610
      %v3123 = vunpack.c.l.b16 %v611
      %v3124 = vunpack.c.l.b16 %v612
      %v3125 = vunpack.c.l.b16 %v613
      %v3126 = vunpack.c.l.b16 %v614
      %v3127 = vunpack.c.l.b16 %v615
      %v3128 = vunpack.c.l.b16 %v616
      %v3129 = vunpack.c.l.b16 %v617
      %v3130 = vunpack.c.l.b16 %v618
      %v3131 = vunpack.c.l.b16 %v619
      %v3132 = vunpack.c.l.b16 %v620
      %v3133 = vunpack.c.l.b16 %v621
      %v3134 = vunpack.c.l.b16 %v622
      %v3135 = vunpack.c.l.b16 %v623
      %v3136 = vunpack.c.l.b16 %v624
      %v3137 = vunpack.c.l.b16 %v625
      %v3138 = vunpack.c.l.b16 %v626
      %v3139 = vunpack.c.l.b16 %v627
      %v3140 = vunpack.c.l.b16 %v628
      %v3141 = vunpack.c.l.b16 %v629
      %v3142 = vunpack.c.l.b16 %v630
      %v3143 = vunpack.c.l.b16 %v631
      %v3144 = vunpack.c.l.b16 %v632
      %v3145 = vunpack.c.l.b16 %v633
      %v3146 = vunpack.c.l.b16 %v634
      %v3147 = vunpack.c.l.b16 %v635
      %v3148 = vunpack.c.l.b16 %v636
      %v3149 = vunpack.c.l.b16 %v637
      %v3150 = vunpack.c.l.b16 %v638
      %v3151 = vunpack.c.l.b16 %v639
      %v3152 = vunpack.c.l.b16 %v640
      %v3153 = vunpack.c.l.b16 %v641
      %v3154 = vunpack.c.l.b16 %v642
      %v3155 = vunpack.c.l.b16 %v643
      %v3156 = vunpack.c.l.b16 %v644
      %v3157 = vunpack.c.l.b16 %v645
      %v3158 = vunpack.c.l.b16 %v646
      %v3159 = vunpack.c.l.b16 %v647
      %v3160 = vunpack.c.l.b16 %v648
      %v3161 = vunpack.c.l.b16 %v649
      %v3162 = vunpack.c.l.b16 %v650
      %v3163 = vunpack.c.l.b16 %v651
      %v3164 = vunpack.c.l.b16 %v652
      %v3165 = vunpack.c.l.b16 %v653
      %v3166 = vunpack.c.l.b16 %v654
      %v3167 = vunpack.c.l.b16 %v655
      %v3168 = vunpack.c.l.b16 %v656
      %v3169 = vunpack.c.l.b16 %v657
      %v3170 = vunpack.c.l.b16 %v658
      %v3171 = vunpack.c.l.b16 %v659
      %v3172 = vunpack.c.l.b16 %v660
      %v3173 = vunpack.c.l.b16 %v661
      %v3174 = vunpack.c.l.b16 %v662
      %v3175 = vunpack.c.l.b16 %v663
      %v3176 = vunpack.c.l.b16 %v664
      %v3177 = vunpack.c.l.b16 %v665
      %v3178 = vunpack.c.l.b16 %v666
      %v3179 = vunpack.c.l.b16 %v667
      %v3180 = vunpack.c.l.b16 %v668
      %v3181 = vunpack.c.l.b16 %v669
      %v3182 = vunpack.c.l.b16 %v670
      %v3183 = vunpack.c.l.b16 %v671
      %v3184 = vunpack.c.l.b16 %v672
      %v3185 = vunpack.c.l.b16 %v673
      %v3186 = vunpack.c.l.b16 %v674
      %v3187 = vunpack.c.l.b16 %v675
      %v3188 = vunpack.c.l.b16 %v676
      %v3189 = vunpack.c.l.b16 %v677
      %v3190 = vunpack.c.l.b16 %v678
      %v3191 = vunpack.c.l.b16 %v679
      %v3192 = vunpack.c.l.b16 %v680
      %v3193 = vunpack.c.l.b16 %v681
      %v3194 = vunpack.c.l.b16 %v682
      %v3195 = vunpack.c.l.b16 %v683
      %v3196 = vunpack.c.l.b16 %v684
      %v3197 = vunpack.c.l.b16 %v685
      %v3198 = vunpack.c.l.b16 %v686
      %v3199 = vunpack.c.l.b16 %v687
      %v3200 = vunpack.c.l.b16 %v688
      %v3201 = vunpack.c.l.b16 %v689
      %v3202 = vunpack.c.l.b16 %v690
      %v3203 = vunpack.c.l.b16 %v691
      %v3204 = vunpack.c.l.b16 %v692
      %v3205 = vunpack.c.l.b16 %v693
      %v3206 = vunpack.c.l.b16 %v694
      %v3207 = vunpack.c.l.b16 %v695
      %v3208 = vunpack.c.l.b16 %v696
      %v3209 = vunpack.c.l.b16 %v697
      %v3210 = vunpack.c.l.b16 %v698
      %v3211 = vunpack.c.l.b16 %v699
      %v3212 = vunpack.c.l.b16 %v700
      %v3213 = vunpack.c.l.b16 %v701
      %v3214 = vunpack.c.l.b16 %v702
      %v3215 = vunpack.c.l.b16 %v703
      %v3216 = vunpack.c.l.b16 %v704
      %v3217 = vunpack.c.l.b16 %v705
      %v3218 = vunpack.c.l.b16 %v706
      %v3219 = vunpack.c.l.b16 %v707
      %v3220 = vunpack.c.l.b16 %v708
      %v3221 = vunpack.c.l.b16 %v709
      %v3222 = vunpack.c.l.b16 %v710
      %v3223 = vunpack.c.l.b16 %v711
      %v3224 = vunpack.c.l.b16 %v712
      %v3225 = vunpack.c.l.b16 %v713
      %v3226 = vunpack.c.l.b16 %v714
      %v3227 = vunpack.c.l.b16 %v715
      %v3228 = vunpack.c.l.b16 %v716
      %v3229 = vunpack.c.l.b16 %v717
      %v3230 = vunpack.c.l.b16 %v718
      %v3231 = vunpack.c.l.b16 %v719
      %v3232 = vunpack.c.l.b16 %v720
      %v3233 = vunpack.c.l.b16 %v721
      %v3234 = vunpack.c.l.b16 %v722
      %v3235 = vunpack.c.l.b16 %v723
      %v3236 = vunpack.c.l.b16 %v724
      %v3237 = vunpack.c.l.b16 %v725
      %v3238 = vunpack.c.l.b16 %v726
      %v3239 = vunpack.c.l.b16 %v727
      %v3240 = vunpack.c.l.b16 %v728
      %v3241 = vunpack.c.l.b16 %v729
      %v3242 = vunpack.c.l.b16 %v730
      %v3243 = vunpack.c.l.b16 %v731
      %v3244 = vunpack.c.l.b16 %v732
      %v3245 = vunpack.c.l.b16 %v733
      %v3246 = vunpack.c.l.b16 %v734
      %v3247 = vunpack.c.l.b16 %v735
      %v3248 = vunpack.c.l.b16 %v736
      %v3249 = vunpack.c.l.b16 %v737
      %v3250 = vunpack.c.l.b16 %v738
      %v3251 = vunpack.c.l.b16 %v739
      %v3252 = vunpack.c.l.b16 %v740
      %v3253 = vunpack.c.l.b16 %v741
      %v3254 = vunpack.c.l.b16 %v742
      %v3255 = vunpack.c.l.b16 %v743
      %v3256 = vunpack.c.l.b16 %v744
      %v3257 = vunpack.c.l.b16 %v745
      %v3258 = vunpack.c.l.b16 %v746
      %v3259 = vunpack.c.l.b16 %v747
      %v3260 = vunpack.c.l.b16 %v748
      %v3261 = vunpack.c.l.b16 %v749
      %v3262 = vunpack.c.l.b16 %v750
      %v3263 = vunpack.c.l.b16 %v751
      %v3264 = vunpack.c.l.b16 %v752
      %v3265 = vunpack.c.l.b16 %v753
      %v3266 = vunpack.c.l.b16 %v754
      %v3267 = vunpack.c.l.b16 %v755
      %v3268 = vunpack.c.l.b16 %v756
      %v3269 = vunpack.c.l.b16 %v757
      %v3270 = vunpack.c.l.b16 %v758
      %v3271 = vunpack.c.l.b16 %v759
      %v3272 = vunpack.c.l.b16 %v760
      %v3273 = vunpack.c.l.b16 %v761
      %v3274 = vunpack.c.l.b16 %v762
      %v3275 = vunpack.c.l.b16 %v763
      %v3276 = vunpack.c.l.b16 %v764
      %v3277 = vunpack.c.l.b16 %v765
      %v3278 = vunpack.c.l.b16 %v766
      %v3279 = vunpack.c.l.b16 %v767
      %v3280 = vunpack.c.l.b16 %v768
      %v3281 = vunpack.c.l.b16 %v769
      %v3282 = vunpack.c.l.b16 %v770
      %v3283 = vunpack.c.l.b16 %v771
      %v3284 = vunpack.c.l.b16 %v772
      %v3285 = vunpack.c.l.b16 %v773
      %v3286 = vunpack.c.l.b16 %v774
      %v3287 = vunpack.c.l.b16 %v775
      %v3288 = vunpack.c.l.b16 %v776
      %v3289 = vunpack.c.l.b16 %v777
      %v3290 = vunpack.c.l.b16 %v778
      %v3291 = vunpack.c.l.b16 %v779
      %v3292 = vunpack.c.l.b16 %v780
      %v3293 = vunpack.c.l.b16 %v781
      %v3294 = vunpack.c.l.b16 %v782
      %v3295 = vunpack.c.l.b16 %v783
      %v3296 = vunpack.c.l.b16 %v784
      %v3297 = vunpack.c.l.b16 %v785
      %v3298 = vunpack.c.l.b16 %v786
      %v3299 = vunpack.c.l.b16 %v787
      %v3300 = vunpack.c.l.b16 %v788
      %v3301 = vunpack.c.l.b16 %v789
      %v3302 = vunpack.c.l.b16 %v790
      %v3303 = vunpack.c.l.b16 %v791
      %v3304 = vunpack.c.l.b16 %v792
      %v3305 = vunpack.c.l.b16 %v793
      %v3306 = vunpack.c.l.b16 %v794
      %v3307 = vunpack.c.l.b16 %v795
      %v3308 = vunpack.c.l.b16 %v796
      %v3309 = vunpack.c.l.b16 %v797
      %v3310 = vunpack.c.l.b16 %v798
      %v3311 = vunpack.c.l.b16 %v799
      %v3312 = vunpack.c.l.b16 %v800
      %v3313 = vunpack.c.l.b16 %v801
      %v3314 = vunpack.c.l.b16 %v802
      %v3315 = vunpack.c.l.b16 %v803
      %v3316 = vunpack.c.l.b16 %v804
      %v3317 = vunpack.c.l.b16 %v805
      %v3318 = vunpack.c.l.b16 %v806
      %v3319 = vunpack.c.l.b16 %v807
      %v3320 = vunpack.c.l.b16 %v808
      %v3321 = vunpack.c.l.b16 %v809
      %v3322 = vunpack.c.l.b16 %v810
      %v3323 = vunpack.c.l.b16 %v811
      %v3324 = vunpack.c.l.b16 %v812
      %v3325 = vunpack.c.l.b16 %v813
      %v3326 = vunpack.c.l.b16 %v814
      %v3327 = vunpack.c.l.b16 %v815
      %v3328 = vunpack.c.l.b16 %v816
      %v3329 = vunpack.c.l.b16 %v817
      %v3330 = vunpack.c.l.b16 %v818
      %v3331 = vunpack.c.l.b16 %v819
      %v3332 = vunpack.c.l.b16 %v820
      %v3333 = vunpack.c.l.b16 %v821
      %v3334 = vunpack.c.l.b16 %v822
      %v3335 = vunpack.c.l.b16 %v823
      %v3336 = vunpack.c.l.b16 %v824
      %v3337 = vunpack.c.l.b16 %v825
      %v3338 = vunpack.c.l.b16 %v826
      %v3339 = vunpack.c.l.b16 %v827
      %v3340 = vunpack.c.l.b16 %v828
      %v3341 = vunpack.c.l.b16 %v829
      %v3342 = vunpack.c.l.b16 %v830
      %v3343 = vunpack.c.l.b16 %v831
      %v3344 = vunpack.c.l.b16 %v832
      %v3345 = vunpack.c.l.b16 %v833
      %v3346 = vunpack.c.l.b16 %v834
      %v3347 = vunpack.c.l.b16 %v835
      %v3348 = vunpack.c.l.b16 %v836
      %v3349 = vunpack.c.l.b16 %v837
      %v3350 = vunpack.c.l.b16 %v838
      %v3351 = vunpack.c.l.b16 %v839
      %v3352 = vunpack.c.l.b16 %v840
      %v3353 = vunpack.c.l.b16 %v841
      %v3354 = vunpack.c.l.b16 %v842
      %v3355 = vunpack.c.l.b16 %v843
      %v3356 = vunpack.c.l.b16 %v844
      %v3357 = vunpack.c.l.b16 %v845
      %v3358 = vunpack.c.l.b16 %v846
      %v3359 = vunpack.c.l.b16 %v847
      %v3360 = vunpack.c.l.b16 %v848
      %v3361 = vunpack.c.l.b16 %v849
      %v3362 = vunpack.c.l.b16 %v850
      %v3363 = vunpack.c.l.b16 %v851
      %v3364 = vunpack.c.l.b16 %v852
      %v3365 = vunpack.c.l.b16 %v853
      %v3366 = vunpack.c.l.b16 %v854
      %v3367 = vunpack.c.l.b16 %v855
      %v3368 = vunpack.c.l.b16 %v856
      %v3369 = vunpack.c.l.b16 %v857
      %v3370 = vunpack.c.l.b16 %v858
      %v3371 = vunpack.c.l.b16 %v859
      %v3372 = vunpack.c.l.b16 %v860
      %v3373 = vunpack.c.l.b16 %v861
      %v3374 = vunpack.c.l.b16 %v862
      %v3375 = vunpack.c.l.b16 %v863
      %v3376 = vunpack.c.l.b16 %v864
      %v3377 = vunpack.c.l.b16 %v865
      %v3378 = vunpack.c.l.b16 %v866
      %v3379 = vunpack.c.l.b16 %v867
      %v3380 = vunpack.c.l.b16 %v868
      %v3381 = vunpack.c.l.b16 %v869
      %v3382 = vunpack.c.l.b16 %v870
      %v3383 = vunpack.c.l.b16 %v871
      %v3384 = vunpack.c.l.b16 %v872
      %v3385 = vunpack.c.l.b16 %v873
      %v3386 = vunpack.c.l.b16 %v874
      %v3387 = vunpack.c.l.b16 %v875
      %v3388 = vunpack.c.l.b16 %v876
      %v3389 = vunpack.c.l.b16 %v877
      %v3390 = vunpack.c.l.b16 %v878
      %v3391 = vunpack.c.l.b16 %v879
      %v3392 = vunpack.c.l.b16 %v880
      %v3393 = vunpack.c.l.b16 %v881
      %v3394 = vunpack.c.l.b16 %v882
      %v3395 = vunpack.c.l.b16 %v883
      %v3396 = vunpack.c.l.b16 %v884
      %v3397 = vunpack.c.l.b16 %v885
      %v3398 = vunpack.c.l.b16 %v886
      %v3399 = vunpack.c.l.b16 %v887
      %v3400 = vunpack.c.l.b16 %v888
      %v3401 = vunpack.c.l.b16 %v889
      %v3402 = vunpack.c.l.b16 %v890
      %v3403 = vunpack.c.l.b16 %v891
      %v3404 = vunpack.c.l.b16 %v892
      %v3405 = vunpack.c.l.b16 %v893
      %v3406 = vunpack.c.l.b16 %v894
      %v3407 = vunpack.c.l.b16 %v895
      %v3408 = vunpack.c.l.b16 %v896
      %v3409 = vunpack.c.l.b16 %v897
      %v3410 = vunpack.c.l.b16 %v898
      %v3411 = vunpack.c.l.b16 %v899
      %v3412 = vunpack.c.l.b16 %v900
      %v3413 = vunpack.c.l.b16 %v901
      %v3414 = vunpack.c.l.b16 %v902
      %v3415 = vunpack.c.l.b16 %v903
      %v3416 = vunpack.c.l.b16 %v904
      %v3417 = vunpack.c.l.b16 %v905
      %v3418 = vunpack.c.l.b16 %v906
      %v3419 = vunpack.c.l.b16 %v907
      %v3420 = vunpack.c.l.b16 %v908
      %v3421 = vunpack.c.l.b16 %v909
      %v3422 = vunpack.c.l.b16 %v910
      %v3423 = vunpack.c.l.b16 %v911
      %v3424 = vunpack.c.l.b16 %v912
      %v3425 = vunpack.c.l.b16 %v913
      %v3426 = vunpack.c.l.b16 %v914
      %v3427 = vunpack.c.l.b16 %v915
      %v3428 = vunpack.c.l.b16 %v916
      %v3429 = vunpack.c.l.b16 %v917
      %v3430 = vunpack.c.l.b16 %v918
      %v3431 = vunpack.c.l.b16 %v919
      %v3432 = vunpack.c.l.b16 %v920
      %v3433 = vunpack.c.l.b16 %v921
      %v3434 = vunpack.c.l.b16 %v922
      %v3435 = vunpack.c.l.b16 %v923
      %v3436 = vunpack.c.l.b16 %v924
      %v3437 = vunpack.c.l.b16 %v925
      %v3438 = vunpack.c.l.b16 %v926
      %v3439 = vunpack.c.l.b16 %v927
      %v3440 = vunpack.c.l.b16 %v928
      %v3441 = vunpack.c.l.b16 %v929
      %v3442 = vunpack.c.l.b16 %v930
      %v3443 = vunpack.c.l.b16 %v931
      %v3444 = vunpack.c.l.b16 %v932
      %v3445 = vunpack.c.l.b16 %v933
      %v3446 = vunpack.c.l.b16 %v934
      %v3447 = vunpack.c.l.b16 %v935
      %v3448 = vunpack.c.l.b16 %v936
      %v3449 = vunpack.c.l.b16 %v937
      %v3450 = vunpack.c.l.b16 %v938
      %v3451 = vunpack.c.l.b16 %v939
      %v3452 = vunpack.c.l.b16 %v940
      %v3453 = vunpack.c.l.b16 %v941
      %v3454 = vunpack.c.l.b16 %v942
      %v3455 = vunpack.c.l.b16 %v943
      %v3456 = vunpack.c.l.b16 %v944
      %v3457 = vunpack.c.l.b16 %v945
      %v3458 = vunpack.c.l.b16 %v946
      %v3459 = vunpack.c.l.b16 %v947
      %v3460 = vunpack.c.l.b16 %v948
      %v3461 = vunpack.c.l.b16 %v949
      %v3462 = vunpack.c.l.b16 %v950
      %v3463 = vunpack.c.l.b16 %v951
      %v3464 = vunpack.c.l.b16 %v952
      %v3465 = vunpack.c.l.b16 %v953
      %v3466 = vunpack.c.l.b16 %v954
      %v3467 = vunpack.c.l.b16 %v955
      %v3468 = vunpack.c.l.b16 %v956
      %v3469 = vunpack.c.l.b16 %v957
      %v3470 = vunpack.c.l.b16 %v958
      %v3471 = vunpack.c.l.b16 %v959
      %v3472 = vunpack.c.l.b16 %v960
      %v3473 = vunpack.c.l.b16 %v961
      %v3474 = vunpack.c.l.b16 %v962
      %v3475 = vunpack.c.l.b16 %v963
      %v3476 = vunpack.c.l.b16 %v964
      %v3477 = vunpack.c.l.b16 %v965
      %v3478 = vunpack.c.l.b16 %v966
      %v3479 = vunpack.c.l.b16 %v967
      %v3480 = vunpack.c.l.b16 %v968
      %v3481 = vunpack.c.l.b16 %v969
      %v3482 = vunpack.c.l.b16 %v970
      %v3483 = vunpack.c.l.b16 %v971
      %v3484 = vunpack.c.l.b16 %v972
      %v3485 = vunpack.c.l.b16 %v973
      %v3486 = vunpack.c.l.b16 %v974
      %v3487 = vunpack.c.l.b16 %v975
      %v3488 = vunpack.c.l.b16 %v976
      %v3489 = vunpack.c.l.b16 %v977
      %v3490 = vunpack.c.l.b16 %v978
      %v3491 = vunpack.c.l.b16 %v979
      %v3492 = vunpack.c.l.b16 %v980
      %v3493 = vunpack.c.l.b16 %v981
      %v3494 = vunpack.c.l.b16 %v982
      %v3495 = vunpack.c.l.b16 %v983
      %v3496 = vunpack.c.l.b16 %v984
      %v3497 = vunpack.c.l.b16 %v985
      %v3498 = vunpack.c.l.b16 %v986
      %v3499 = vunpack.c.l.b16 %v987
      %v3500 = vunpack.c.l.b16 %v988
      %v3501 = vunpack.c.l.b16 %v989
      %v3502 = vunpack.c.l.b16 %v990
      %v3503 = vunpack.c.l.b16 %v991
      %v3504 = vunpack.c.l.b16 %v992
      %v3505 = vunpack.c.l.b16 %v993
      %v3506 = vunpack.c.l.b16 %v994
      %v3507 = vunpack.c.l.b16 %v995
      %v3508 = vunpack.c.l.b16 %v996
      %v3509 = vunpack.c.l.b16 %v997
      %v3510 = vunpack.c.l.b16 %v998
      %v3511 = vunpack.c.l.b16 %v999
      %v3512 = vunpack.c.l.b16 %v1000
      %v3513 = vunpack.c.l.b16 %v1001
      %v3514 = vunpack.c.l.b16 %v1002
      %v3515 = vunpack.c.l.b16 %v1003
      %v3516 = vunpack.c.l.b16 %v1004
      %v3517 = vunpack.c.l.b16 %v1005
      %v3518 = vunpack.c.l.b16 %v1006
      %v3519 = vunpack.c.l.b16 %v1007
      %v3520 = vunpack.c.l.b16 %v1008
      %v3521 = vunpack.c.l.b16 %v1009
      %v3522 = vunpack.c.l.b16 %v1010
      %v3523 = vunpack.c.l.b16 %v1011
      %v3524 = vunpack.c.l.b16 %v1012
      %v3525 = vunpack.c.l.b16 %v1013
      %v3526 = vunpack.c.l.b16 %v1014
      %v3527 = vunpack.c.l.b16 %v1015
      %v3528 = vunpack.c.l.b16 %v1016
      %v3529 = vunpack.c.l.b16 %v1017
      %v3530 = vunpack.c.l.b16 %v1018
      %v3531 = vunpack.c.l.b16 %v1019
      %v3532 = vunpack.c.l.b16 %v1020
      %v3533 = vunpack.c.l.b16 %v1021
      %v3534 = vunpack.c.l.b16 %v1022
      %v3535 = vunpack.c.l.b16 %v1023
      %v3536 = vunpack.c.l.b16 %v1024
      %v3537 = vunpack.c.l.b16 %v1025
      %v3538 = vunpack.c.l.b16 %v1026
      %v3539 = vunpack.c.l.b16 %v1027
      %v3540 = vunpack.c.l.b16 %v1028
      %v3541 = vunpack.c.l.b16 %v1029
      %v3542 = vunpack.c.l.b16 %v1030
      %v3543 = vunpack.c.l.b16 %v1031
      %v3544 = vunpack.c.l.b16 %v1032
      %v3545 = vunpack.c.l.b16 %v1033
      %v3546 = vunpack.c.l.b16 %v1034
      %v3547 = vunpack.c.l.b16 %v1035
      %v3548 = vunpack.c.l.b16 %v1036
      %v3549 = vunpack.c.l.b16 %v1037
      %v3550 = vunpack.c.l.b16 %v1038
      %v3551 = vunpack.c.l.b16 %v1039
      %v3552 = vunpack.c.l.b16 %v1040
      %v3553 = vunpack.c.l.b16 %v1041
      %v3554 = vunpack.c.l.b16 %v1042
      %v3555 = vunpack.c.l.b16 %v1043
      %v3556 = vunpack.c.l.b16 %v1044
      %v3557 = vunpack.c.l.b16 %v1045
      %v3558 = vunpack.c.l.b16 %v1046
      %v3559 = vunpack.c.l.b16 %v1047
      %v3560 = vunpack.c.l.b16 %v1048
      %v3561 = vunpack.c.l.b16 %v1049
      %v3562 = vunpack.c.l.b16 %v1050
      %v3563 = vunpack.c.l.b16 %v1051
      %v3564 = vunpack.c.l.b16 %v1052
      %v3565 = vunpack.c.l.b16 %v1053
      %v3566 = vunpack.c.l.b16 %v1054
      %v3567 = vunpack.c.l.b16 %v1055
      %v3568 = vunpack.c.l.b16 %v1056
      %v3569 = vunpack.c.l.b16 %v1057
      %v3570 = vunpack.c.l.b16 %v1058
      %v3571 = vunpack.c.l.b16 %v1059
      %v3572 = vunpack.c.l.b16 %v1060
      %v3573 = vunpack.c.l.b16 %v1061
      %v3574 = vunpack.c.l.b16 %v1062
      %v3575 = vunpack.c.l.b16 %v1063
      %v3576 = vunpack.c.l.b16 %v1064
      %v3577 = vunpack.c.l.b16 %v1065
      %v3578 = vunpack.c.l.b16 %v1066
      %v3579 = vunpack.c.l.b16 %v1067
      %v3580 = vunpack.c.l.b16 %v1068
      %v3581 = vunpack.c.l.b16 %v1069
      %v3582 = vunpack.c.l.b16 %v1070
      %v3583 = vunpack.c.l.b16 %v1071
      %v3584 = vunpack.c.l.b16 %v1072
      %v3585 = vunpack.c.l.b16 %v1073
      %v3586 = vunpack.c.l.b16 %v1074
      %v3587 = vunpack.c.l.b16 %v1075
      %v3588 = vunpack.c.l.b16 %v1076
      %v3589 = vunpack.c.l.b16 %v1077
      %v3590 = vunpack.c.l.b16 %v1078
      %v3591 = vunpack.c.l.b16 %v1079
      %v3592 = vunpack.c.l.b16 %v1080
      %v3593 = vunpack.c.l.b16 %v1081
      %v3594 = vunpack.c.l.b16 %v1082
      %v3595 = vunpack.c.l.b16 %v1083
      %v3596 = vunpack.c.l.b16 %v1084
      %v3597 = vunpack.c.l.b16 %v1085
      %v3598 = vunpack.c.l.b16 %v1086
      %v3599 = vunpack.c.l.b16 %v1087
      %v3600 = vunpack.c.l.b16 %v1088
      %v3601 = vunpack.c.l.b16 %v1089
      %v3602 = vunpack.c.l.b16 %v1090
      %v3603 = vunpack.c.l.b16 %v1091
      %v3604 = vunpack.c.l.b16 %v1092
      %v3605 = vunpack.c.l.b16 %v1093
      %v3606 = vunpack.c.l.b16 %v1094
      %v3607 = vunpack.c.l.b16 %v1095
      %v3608 = vunpack.c.l.b16 %v1096
      %v3609 = vunpack.c.l.b16 %v1097
      %v3610 = vunpack.c.l.b16 %v1098
      %v3611 = vunpack.c.l.b16 %v1099
      %v3612 = vunpack.c.l.b16 %v1100
      %v3613 = vunpack.c.l.b16 %v1101
      %v3614 = vunpack.c.l.b16 %v1102
      %v3615 = vunpack.c.l.b16 %v1103
      %v3616 = vunpack.c.l.b16 %v1104
      %v3617 = vunpack.c.l.b16 %v1105
      %v3618 = vunpack.c.l.b16 %v1106
      %v3619 = vunpack.c.l.b16 %v1107
      %v3620 = vunpack.c.l.b16 %v1108
      %v3621 = vunpack.c.l.b16 %v1109
      %v3622 = vunpack.c.l.b16 %v1110
      %v3623 = vunpack.c.l.b16 %v1111
      %v3624 = vunpack.c.l.b16 %v1112
      %v3625 = vunpack.c.l.b16 %v1113
      %v3626 = vunpack.c.l.b16 %v1114
      %v3627 = vunpack.c.l.b16 %v1115
      %v3628 = vunpack.c.l.b16 %v1116
      %v3629 = vunpack.c.l.b16 %v1117
      %v3630 = vunpack.c.l.b16 %v1118
      %v3631 = vunpack.c.l.b16 %v1119
      %v3632 = vunpack.c.l.b16 %v1120
      %v3633 = vunpack.c.l.b16 %v1121
      %v3634 = vunpack.c.l.b16 %v1122
      %v3635 = vunpack.c.l.b16 %v1123
      %v3636 = vunpack.c.l.b16 %v1124
      %v3637 = vunpack.c.l.b16 %v1125
      %v3638 = vunpack.c.l.b16 %v1126
      %v3639 = vunpack.c.l.b16 %v1127
      %v3640 = vunpack.c.l.b16 %v1128
      %v3641 = vunpack.c.l.b16 %v1129
      %v3642 = vunpack.c.l.b16 %v1130
      %v3643 = vunpack.c.l.b16 %v1131
      %v3644 = vunpack.c.l.b16 %v1132
      %v3645 = vunpack.c.l.b16 %v1133
      %v3646 = vunpack.c.l.b16 %v1134
      %v3647 = vunpack.c.l.b16 %v1135
      %v3648 = vunpack.c.l.b16 %v1136
      %v3649 = vunpack.c.l.b16 %v1137
      %v3650 = vunpack.c.l.b16 %v1138
      %v3651 = vunpack.c.l.b16 %v1139
      %v3652 = vunpack.c.l.b16 %v1140
      %v3653 = vunpack.c.l.b16 %v1141
      %v3654 = vunpack.c.l.b16 %v1142
      %v3655 = vunpack.c.l.b16 %v1143
      %v3656 = vunpack.c.l.b16 %v1144
      %v3657 = vunpack.c.l.b16 %v1145
      %v3658 = vunpack.c.l.b16 %v1146
      %v3659 = vunpack.c.l.b16 %v1147
      %v3660 = vunpack.c.l.b16 %v1148
      %v3661 = vunpack.c.l.b16 %v1149
      %v3662 = vunpack.c.l.b16 %v1150
      %v3663 = vunpack.c.l.b16 %v1151
      %v3664 = vunpack.c.l.b16 %v1152
      %v3665 = vunpack.c.l.b16 %v1153
      %v3666 = vunpack.c.l.b16 %v1154
      %v3667 = vunpack.c.l.b16 %v1155
      %v3668 = vunpack.c.l.b16 %v1156
      %v3669 = vunpack.c.l.b16 %v1157
      %v3670 = vunpack.c.l.b16 %v1158
      %v3671 = vunpack.c.l.b16 %v1159
      %v3672 = vunpack.c.l.b16 %v1160
      %v3673 = vunpack.c.l.b16 %v1161
      %v3674 = vunpack.c.l.b16 %v1162
      %v3675 = vunpack.c.l.b16 %v1163
      %v3676 = vunpack.c.l.b16 %v1164
      %v3677 = vunpack.c.l.b16 %v1165
      %v3678 = vunpack.c.l.b16 %v1166
      %v3679 = vunpack.c.l.b16 %v1167
      %v3680 = vunpack.c.l.b16 %v1168
      %v3681 = vunpack.c.l.b16 %v1169
      %v3682 = vunpack.c.l.b16 %v1170
      %v3683 = vunpack.c.l.b16 %v1171
      %v3684 = vunpack.c.l.b16 %v1172
      %v3685 = vunpack.c.l.b16 %v1173
      %v3686 = vunpack.c.l.b16 %v1174
      %v3687 = vunpack.c.l.b16 %v1175
      %v3688 = vunpack.c.l.b16 %v1176
      %v3689 = vunpack.c.l.b16 %v1177
      %v3690 = vunpack.c.l.b16 %v1178
      %v3691 = vunpack.c.l.b16 %v1179
      %v3692 = vunpack.c.l.b16 %v1180
      %v3693 = vunpack.c.l.b16 %v1181
      %v3694 = vunpack.c.l.b16 %v1182
      %v3695 = vunpack.c.l.b16 %v1183
      %v3696 = vunpack.c.l.b16 %v1184
      %v3697 = vunpack.c.l.b16 %v1185
      %v3698 = vunpack.c.l.b16 %v1186
      %v3699 = vunpack.c.l.b16 %v1187
      %v3700 = vunpack.c.l.b16 %v1188
      %v3701 = vunpack.c.l.b16 %v1189
      %v3702 = vunpack.c.l.b16 %v1190
      %v3703 = vunpack.c.l.b16 %v1191
      %v3704 = vunpack.c.l.b16 %v1192
      %v3705 = vunpack.c.l.b16 %v1193
      %v3706 = vunpack.c.l.b16 %v1194
      %v3707 = vunpack.c.l.b16 %v1195
      %v3708 = vunpack.c.l.b16 %v1196
      %v3709 = vunpack.c.l.b16 %v1197
      %v3710 = vunpack.c.l.b16 %v1198
      %v3711 = vunpack.c.l.b16 %v1199
      %v3712 = vunpack.c.l.b16 %v1200
      %v3713 = vunpack.c.l.b16 %v1201
      %v3714 = vunpack.c.l.b16 %v1202
      %v3715 = vunpack.c.l.b16 %v1203
      %v3716 = vunpack.c.l.b16 %v1204
      %v3717 = vunpack.c.l.b16 %v1205
      %v3718 = vunpack.c.l.b16 %v1206
      %v3719 = vunpack.c.l.b16 %v1207
      %v3720 = vunpack.c.l.b16 %v1208
      %v3721 = vunpack.c.l.b16 %v1209
      %v3722 = vunpack.c.l.b16 %v1210
      %v3723 = vunpack.c.l.b16 %v1211
      %v3724 = vunpack.c.l.b16 %v1212
      %v3725 = vunpack.c.l.b16 %v1213
      %v3726 = vunpack.c.l.b16 %v1214
      %v3727 = vunpack.c.l.b16 %v1215
      %v3728 = vunpack.c.l.b16 %v1216
      %v3729 = vunpack.c.l.b16 %v1217
      %v3730 = vunpack.c.l.b16 %v1218
      %v3731 = vunpack.c.l.b16 %v1219
      %v3732 = vunpack.c.l.b16 %v1220
      %v3733 = vunpack.c.l.b16 %v1221
      %v3734 = vunpack.c.l.b16 %v1222
      %v3735 = vunpack.c.l.b16 %v1223
      %v3736 = vunpack.c.l.b16 %v1224
      %v3737 = vunpack.c.l.b16 %v1225
      %v3738 = vunpack.c.l.b16 %v1226
      %v3739 = vunpack.c.l.b16 %v1227
      %v3740 = vunpack.c.l.b16 %v1228
      %v3741 = vunpack.c.l.b16 %v1229
      %v3742 = vunpack.c.l.b16 %v1230
      %v3743 = vunpack.c.l.b16 %v1231
      %v3744 = vunpack.c.l.b16 %v1232
      %v3745 = vunpack.c.l.b16 %v1233
      %v3746 = vunpack.c.l.b16 %v1234
      %v3747 = vunpack.c.l.b16 %v1235
      %v3748 = vunpack.c.l.b16 %v1236
      %v3749 = vunpack.c.l.b16 %v1237
      %v3750 = vunpack.c.l.b16 %v1238
      %v3751 = vunpack.c.l.b16 %v1239
      %v3752 = vunpack.c.l.b16 %v1240
      %v3753 = vunpack.c.l.b16 %v1241
      %v3754 = vunpack.c.l.b16 %v1242
      %v3755 = vunpack.c.l.b16 %v1243
      %v3756 = vunpack.c.l.b16 %v1244
      %v3757 = vunpack.c.l.b16 %v1245
      %v3758 = vunpack.c.l.b16 %v1246
      %v3759 = vunpack.c.l.b16 %v1247
      %v3760 = vunpack.c.l.b16 %v1248
      %v3761 = vunpack.c.l.b16 %v1249
      %v3762 = vunpack.c.l.b16 %v1250
      %v3763 = vunpack.c.l.b16 %v1251
      %v3764 = vunpack.c.l.b16 %v1252
      %v3765 = vunpack.c.l.b16 %v1253
      %v3766 = vunpack.c.l.b16 %v1254
      %v3767 = vunpack.c.l.b16 %v1255
      %v3768 = vunpack.c.l.b16 %v1256
      %v3769 = vunpack.c.l.b16 %v1257
      %v3770 = vunpack.c.l.b16 %v1258
      %v3771 = vunpack.c.l.b16 %v1259
      %v3772 = vunpack.c.l.b16 %v1260
      %v3773 = vunpack.c.l.b16 %v1261
      %v3774 = vunpack.c.l.b16 %v1262
      %v3775 = vunpack.c.l.b16 %v1263
      %v3776 = vunpack.c.l.b16 %v1264
      %v3777 = vunpack.c.l.b16 %v1265
      %v3778 = vunpack.c.l.b16 %v1266
      %v3779 = vunpack.c.l.b16 %v1267
      %v3780 = vunpack.c.l.b16 %v1268
      %v3781 = vunpack.c.l.b16 %v1269
      %v3782 = vunpack.c.l.b16 %v1270
      %v3783 = vunpack.c.l.b16 %v1271
      %v3784 = vunpack.c.l.b16 %v1272
      %v3785 = vunpack.c.l.b16 %v1273
      %v3786 = vunpack.c.l.b16 %v1274
      %v3787 = vunpack.c.l.b16 %v1275
      %v3788 = vunpack.c.l.b16 %v1276
      %v3789 = vunpack.c.l.b16 %v1277
      %v3790 = vunpack.c.l.b16 %v1278
      %v3791 = vunpack.c.l.b16 %v1279
      %v3792 = vunpack.c.l.b16 %v1280
      %v3793 = vunpack.c.l.b16 %v1281
      %v3794 = vunpack.c.l.b16 %v1282
      %v3795 = vunpack.c.l.b16 %v1283
      %v3796 = vunpack.c.l.b16 %v1284
      %v3797 = vunpack.c.l.b16 %v1285
      %v3798 = vunpack.c.l.b16 %v1286
      %v3799 = vunpack.c.l.b16 %v1287
      %v3800 = vunpack.c.l.b16 %v1288
      %v3801 = vunpack.c.l.b16 %v1289
      %v3802 = vunpack.c.l.b16 %v1290
      %v3803 = vunpack.c.l.b16 %v1291
      %v3804 = vunpack.c.l.b16 %v1292
      %v3805 = vunpack.c.l.b16 %v1293
      %v3806 = vunpack.c.l.b16 %v1294
      %v3807 = vunpack.c.l.b16 %v1295
      %v3808 = vunpack.c.l.b16 %v1296
      %v3809 = vunpack.c.l.b16 %v1297
      %v3810 = vunpack.c.l.b16 %v1298
      %v3811 = vunpack.c.l.b16 %v1299
      %v3812 = vunpack.c.l.b16 %v1300
      %v3813 = vunpack.c.l.b16 %v1301
      %v3814 = vunpack.c.l.b16 %v1302
      %v3815 = vunpack.c.l.b16 %v1303
      %v3816 = vunpack.c.l.b16 %v1304
      %v3817 = vunpack.c.l.b16 %v1305
      %v3818 = vunpack.c.l.b16 %v1306
      %v3819 = vunpack.c.l.b16 %v1307
      %v3820 = vunpack.c.l.b16 %v1308
      %v3821 = vunpack.c.l.b16 %v1309
      %v3822 = vunpack.c.l.b16 %v1310
      %v3823 = vunpack.c.l.b16 %v1311
      %v3824 = vunpack.c.l.b16 %v1312
      %v3825 = vunpack.c.l.b16 %v1313
      %v3826 = vunpack.c.l.b16 %v1314
      %v3827 = vunpack.c.l.b16 %v1315
      %v3828 = vunpack.c.l.b16 %v1316
      %v3829 = vunpack.c.l.b16 %v1317
      %v3830 = vunpack.c.l.b16 %v1318
      %v3831 = vpack.c.b16 %v2808, %v2807
      %v3832 = vpack.c.b16 %v2810, %v2809
      %v3833 = vpack.c.b16 %v2812, %v2811
      %v3834 = vpack.c.b16 %v2814, %v2813
      %v3835 = vpack.c.b16 %v2816, %v2815
      %v3836 = vpack.c.b16 %v2818, %v2817
      %v3837 = vpack.c.b16 %v2820, %v2819
      %v3838 = vpack.c.b16 %v2822, %v2821
      %v3839 = vpack.c.b16 %v2824, %v2823
      %v3840 = vpack.c.b16 %v2826, %v2825
      %v3841 = vpack.c.b16 %v2828, %v2827
      %v3842 = vpack.c.b16 %v2830, %v2829
      %v3843 = vpack.c.b16 %v2832, %v2831
      %v3844 = vpack.c.b16 %v2834, %v2833
      %v3845 = vpack.c.b16 %v2836, %v2835
      %v3846 = vpack.c.b16 %v2838, %v2837
      %v3847 = vpack.c.b16 %v2840, %v2839
      %v3848 = vpack.c.b16 %v2842, %v2841
      %v3849 = vpack.c.b16 %v2844, %v2843
      %v3850 = vpack.c.b16 %v2846, %v2845
      %v3851 = vpack.c.b16 %v2848, %v2847
      %v3852 = vpack.c.b16 %v2850, %v2849
      %v3853 = vpack.c.b16 %v2852, %v2851
      %v3854 = vpack.c.b16 %v2854, %v2853
      %v3855 = vpack.c.b16 %v2856, %v2855
      %v3856 = vpack.c.b16 %v2858, %v2857
      %v3857 = vpack.c.b16 %v2860, %v2859
      %v3858 = vpack.c.b16 %v2862, %v2861
      %v3859 = vpack.c.b16 %v2864, %v2863
      %v3860 = vpack.c.b16 %v2866, %v2865
      %v3861 = vpack.c.b16 %v2868, %v2867
      %v3862 = vpack.c.b16 %v2870, %v2869
      %v3863 = vpack.c.b16 %v2872, %v2871
      %v3864 = vpack.c.b16 %v2874, %v2873
      %v3865 = vpack.c.b16 %v2876, %v2875
      %v3866 = vpack.c.b16 %v2878, %v2877
      %v3867 = vpack.c.b16 %v2880, %v2879
      %v3868 = vpack.c.b16 %v2882, %v2881
      %v3869 = vpack.c.b16 %v2884, %v2883
      %v3870 = vpack.c.b16 %v2886, %v2885
      %v3871 = vpack.c.b16 %v2888, %v2887
      %v3872 = vpack.c.b16 %v2890, %v2889
      %v3873 = vpack.c.b16 %v2892, %v2891
      %v3874 = vpack.c.b16 %v2894, %v2893
      %v3875 = vpack.c.b16 %v2896, %v2895
      %v3876 = vpack.c.b16 %v2898, %v2897
      %v3877 = vpack.c.b16 %v2900, %v2899
      %v3878 = vpack.c.b16 %v2902, %v2901
      %v3879 = vpack.c.b16 %v2904, %v2903
      %v3880 = vpack.c.b16 %v2906, %v2905
      %v3881 = vpack.c.b16 %v2908, %v2907
      %v3882 = vpack.c.b16 %v2910, %v2909
      %v3883 = vpack.c.b16 %v2912, %v2911
      %v3884 = vpack.c.b16 %v2914, %v2913
      %v3885 = vpack.c.b16 %v2916, %v2915
      %v3886 = vpack.c.b16 %v2918, %v2917
      %v3887 = vpack.c.b16 %v2920, %v2919
      %v3888 = vpack.c.b16 %v2922, %v2921
      %v3889 = vpack.c.b16 %v2924, %v2923
      %v3890 = vpack.c.b16 %v2926, %v2925
      %v3891 = vpack.c.b16 %v2928, %v2927
      %v3892 = vpack.c.b16 %v2930, %v2929
      %v3893 = vpack.c.b16 %v2932, %v2931
      %v3894 = vpack.c.b16 %v2934, %v2933
      %v3895 = vpack.c.b16 %v2936, %v2935
      %v3896 = vpack.c.b16 %v2938, %v2937
      %v3897 = vpack.c.b16 %v2940, %v2939
      %v3898 = vpack.c.b16 %v2942, %v2941
      %v3899 = vpack.c.b16 %v2944, %v2943
      %v3900 = vpack.c.b16 %v2946, %v2945
      %v3901 = vpack.c.b16 %v2948, %v2947
      %v3902 = vpack.c.b16 %v2950, %v2949
      %v3903 = vpack.c.b16 %v2952, %v2951
      %v3904 = vpack.c.b16 %v2954, %v2953
      %v3905 = vpack.c.b16 %v2956, %v2955
      %v3906 = vpack.c.b16 %v2958, %v2957
      %v3907 = vpack.c.b16 %v2960, %v2959
      %v3908 = vpack.c.b16 %v2962, %v2961
      %v3909 = vpack.c.b16 %v2964, %v2963
      %v3910 = vpack.c.b16 %v2966, %v2965
      %v3911 = vpack.c.b16 %v2968, %v2967
      %v3912 = vpack.c.b16 %v2970, %v2969
      %v3913 = vpack.c.b16 %v2972, %v2971
      %v3914 = vpack.c.b16 %v2974, %v2973
      %v3915 = vpack.c.b16 %v2976, %v2975
      %v3916 = vpack.c.b16 %v2978, %v2977
      %v3917 = vpack.c.b16 %v2980, %v2979
      %v3918 = vpack.c.b16 %v2982, %v2981
      %v3919 = vpack.c.b16 %v2984, %v2983
      %v3920 = vpack.c.b16 %v2986, %v2985
      %v3921 = vpack.c.b16 %v2988, %v2987
      %v3922 = vpack.c.b16 %v2990, %v2989
      %v3923 = vpack.c.b16 %v2992, %v2991
      %v3924 = vpack.c.b16 %v2994, %v2993
      %v3925 = vpack.c.b16 %v2996, %v2995
      %v3926 = vpack.c.b16 %v2998, %v2997
      %v3927 = vpack.c.b16 %v3000, %v2999
      %v3928 = vpack.c.b16 %v3002, %v3001
      %v3929 = vpack.c.b16 %v3004, %v3003
      %v3930 = vpack.c.b16 %v3006, %v3005
      %v3931 = vpack.c.b16 %v3008, %v3007
      %v3932 = vpack.c.b16 %v3010, %v3009
      %v3933 = vpack.c.b16 %v3012, %v3011
      %v3934 = vpack.c.b16 %v3014, %v3013
      %v3935 = vpack.c.b16 %v3016, %v3015
      %v3936 = vpack.c.b16 %v3018, %v3017
      %v3937 = vpack.c.b16 %v3020, %v3019
      %v3938 = vpack.c.b16 %v3022, %v3021
      %v3939 = vpack.c.b16 %v3024, %v3023
      %v3940 = vpack.c.b16 %v3026, %v3025
      %v3941 = vpack.c.b16 %v3028, %v3027
      %v3942 = vpack.c.b16 %v3030, %v3029
      %v3943 = vpack.c.b16 %v3032, %v3031
      %v3944 = vpack.c.b16 %v3034, %v3033
      %v3945 = vpack.c.b16 %v3036, %v3035
      %v3946 = vpack.c.b16 %v3038, %v3037
      %v3947 = vpack.c.b16 %v3040, %v3039
      %v3948 = vpack.c.b16 %v3042, %v3041
      %v3949 = vpack.c.b16 %v3044, %v3043
      %v3950 = vpack.c.b16 %v3046, %v3045
      %v3951 = vpack.c.b16 %v3048, %v3047
      %v3952 = vpack.c.b16 %v3050, %v3049
      %v3953 = vpack.c.b16 %v3052, %v3051
      %v3954 = vpack.c.b16 %v3054, %v3053
      %v3955 = vpack.c.b16 %v3056, %v3055
      %v3956 = vpack.c.b16 %v3058, %v3057
      %v3957 = vpack.c.b16 %v3060, %v3059
      %v3958 = vpack.c.b16 %v3062, %v3061
      %v3959 = vpack.c.b16 %v3064, %v3063
      %v3960 = vpack.c.b16 %v3066, %v3065
      %v3961 = vpack.c.b16 %v3068, %v3067
      %v3962 = vpack.c.b16 %v3070, %v3069
      %v3963 = vpack.c.b16 %v3072, %v3071
      %v3964 = vpack.c.b16 %v3074, %v3073
      %v3965 = vpack.c.b16 %v3076, %v3075
      %v3966 = vpack.c.b16 %v3078, %v3077
      %v3967 = vpack.c.b16 %v3080, %v3079
      %v3968 = vpack.c.b16 %v3082, %v3081
      %v3969 = vpack.c.b16 %v3084, %v3083
      %v3970 = vpack.c.b16 %v3086, %v3085
      %v3971 = vpack.c.b16 %v3088, %v3087
      %v3972 = vpack.c.b16 %v3090, %v3089
      %v3973 = vpack.c.b16 %v3092, %v3091
      %v3974 = vpack.c.b16 %v3094, %v3093
      %v3975 = vpack.c.b16 %v3096, %v3095
      %v3976 = vpack.c.b16 %v3098, %v3097
      %v3977 = vpack.c.b16 %v3100, %v3099
      %v3978 = vpack.c.b16 %v3102, %v3101
      %v3979 = vpack.c.b16 %v3104, %v3103
      %v3980 = vpack.c.b16 %v3106, %v3105
      %v3981 = vpack.c.b16 %v3108, %v3107
      %v3982 = vpack.c.b16 %v3110, %v3109
      %v3983 = vpack.c.b16 %v3112, %v3111
      %v3984 = vpack.c.b16 %v3114, %v3113
      %v3985 = vpack.c.b16 %v3116, %v3115
      %v3986 = vpack.c.b16 %v3118, %v3117
      %v3987 = vpack.c.b16 %v3120, %v3119
      %v3988 = vpack.c.b16 %v3122, %v3121
      %v3989 = vpack.c.b16 %v3124, %v3123
      %v3990 = vpack.c.b16 %v3126, %v3125
      %v3991 = vpack.c.b16 %v3128, %v3127
      %v3992 = vpack.c.b16 %v3130, %v3129
      %v3993 = vpack.c.b16 %v3132, %v3131
      %v3994 = vpack.c.b16 %v3134, %v3133
      %v3995 = vpack.c.b16 %v3136, %v3135
      %v3996 = vpack.c.b16 %v3138, %v3137
      %v3997 = vpack.c.b16 %v3140, %v3139
      %v3998 = vpack.c.b16 %v3142, %v3141
      %v3999 = vpack.c.b16 %v3144, %v3143
      %v4000 = vpack.c.b16 %v3146, %v3145
      %v4001 = vpack.c.b16 %v3148, %v3147
      %v4002 = vpack.c.b16 %v3150, %v3149
      %v4003 = vpack.c.b16 %v3152, %v3151
      %v4004 = vpack.c.b16 %v3154, %v3153
      %v4005 = vpack.c.b16 %v3156, %v3155
      %v4006 = vpack.c.b16 %v3158, %v3157
      %v4007 = vpack.c.b16 %v3160, %v3159
      %v4008 = vpack.c.b16 %v3162, %v3161
      %v4009 = vpack.c.b16 %v3164, %v3163
      %v4010 = vpack.c.b16 %v3166, %v3165
      %v4011 = vpack.c.b16 %v3168, %v3167
      %v4012 = vpack.c.b16 %v3170, %v3169
      %v4013 = vpack.c.b16 %v3172, %v3171
      %v4014 = vpack.c.b16 %v3174, %v3173
      %v4015 = vpack.c.b16 %v3176, %v3175
      %v4016 = vpack.c.b16 %v3178, %v3177
      %v4017 = vpack.c.b16 %v3180, %v3179
      %v4018 = vpack.c.b16 %v3182, %v3181
      %v4019 = vpack.c.b16 %v3184, %v3183
      %v4020 = vpack.c.b16 %v3186, %v3185
      %v4021 = vpack.c.b16 %v3188, %v3187
      %v4022 = vpack.c.b16 %v3190, %v3189
      %v4023 = vpack.c.b16 %v3192, %v3191
      %v4024 = vpack.c.b16 %v3194, %v3193
      %v4025 = vpack.c.b16 %v3196, %v3195
      %v4026 = vpack.c.b16 %v3198, %v3197
      %v4027 = vpack.c.b16 %v3200, %v3199
      %v4028 = vpack.c.b16 %v3202, %v3201
      %v4029 = vpack.c.b16 %v3204, %v3203
      %v4030 = vpack.c.b16 %v3206, %v3205
      %v4031 = vpack.c.b16 %v3208, %v3207
      %v4032 = vpack.c.b16 %v3210, %v3209
      %v4033 = vpack.c.b16 %v3212, %v3211
      %v4034 = vpack.c.b16 %v3214, %v3213
      %v4035 = vpack.c.b16 %v3216, %v3215
      %v4036 = vpack.c.b16 %v3218, %v3217
      %v4037 = vpack.c.b16 %v3220, %v3219
      %v4038 = vpack.c.b16 %v3222, %v3221
      %v4039 = vpack.c.b16 %v3224, %v3223
      %v4040 = vpack.c.b16 %v3226, %v3225
      %v4041 = vpack.c.b16 %v3228, %v3227
      %v4042 = vpack.c.b16 %v3230, %v3229
      %v4043 = vpack.c.b16 %v3232, %v3231
      %v4044 = vpack.c.b16 %v3234, %v3233
      %v4045 = vpack.c.b16 %v3236, %v3235
      %v4046 = vpack.c.b16 %v3238, %v3237
      %v4047 = vpack.c.b16 %v3240, %v3239
      %v4048 = vpack.c.b16 %v3242, %v3241
      %v4049 = vpack.c.b16 %v3244, %v3243
      %v4050 = vpack.c.b16 %v3246, %v3245
      %v4051 = vpack.c.b16 %v3248, %v3247
      %v4052 = vpack.c.b16 %v3250, %v3249
      %v4053 = vpack.c.b16 %v3252, %v3251
      %v4054 = vpack.c.b16 %v3254, %v3253
      %v4055 = vpack.c.b16 %v3256, %v3255
      %v4056 = vpack.c.b16 %v3258, %v3257
      %v4057 = vpack.c.b16 %v3260, %v3259
      %v4058 = vpack.c.b16 %v3262, %v3261
      %v4059 = vpack.c.b16 %v3264, %v3263
      %v4060 = vpack.c.b16 %v3266, %v3265
      %v4061 = vpack.c.b16 %v3268, %v3267
      %v4062 = vpack.c.b16 %v3270, %v3269
      %v4063 = vpack.c.b16 %v3272, %v3271
      %v4064 = vpack.c.b16 %v3274, %v3273
      %v4065 = vpack.c.b16 %v3276, %v3275
      %v4066 = vpack.c.b16 %v3278, %v3277
      %v4067 = vpack.c.b16 %v3280, %v3279
      %v4068 = vpack.c.b16 %v3282, %v3281
      %v4069 = vpack.c.b16 %v3284, %v3283
      %v4070 = vpack.c.b16 %v3286, %v3285
      %v4071 = vpack.c.b16 %v3288, %v3287
      %v4072 = vpack.c.b16 %v3290, %v3289
      %v4073 = vpack.c.b16 %v3292, %v3291
      %v4074 = vpack.c.b16 %v3294, %v3293
      %v4075 = vpack.c.b16 %v3296, %v3295
      %v4076 = vpack.c.b16 %v3298, %v3297
      %v4077 = vpack.c.b16 %v3300, %v3299
      %v4078 = vpack.c.b16 %v3302, %v3301
      %v4079 = vpack.c.b16 %v3304, %v3303
      %v4080 = vpack.c.b16 %v3306, %v3305
      %v4081 = vpack.c.b16 %v3308, %v3307
      %v4082 = vpack.c.b16 %v3310, %v3309
      %v4083 = vpack.c.b16 %v3312, %v3311
      %v4084 = vpack.c.b16 %v3314, %v3313
      %v4085 = vpack.c.b16 %v3316, %v3315
      %v4086 = vpack.c.b16 %v3318, %v3317
      %v4087 = vpack.c.b16 %v3320, %v3319
      %v4088 = vpack.c.b16 %v3322, %v3321
      %v4089 = vpack.c.b16 %v3324, %v3323
      %v4090 = vpack.c.b16 %v3326, %v3325
      %v4091 = vpack.c.b16 %v3328, %v3327
      %v4092 = vpack.c.b16 %v3330, %v3329
      %v4093 = vpack.c.b16 %v3332, %v3331
      %v4094 = vpack.c.b16 %v3334, %v3333
      %v4095 = vpack.c.b16 %v3336, %v3335
      %v4096 = vpack.c.b16 %v3338, %v3337
      %v4097 = vpack.c.b16 %v3340, %v3339
      %v4098 = vpack.c.b16 %v3342, %v3341
      %v4099 = vpack.c.b16 %v3344, %v3343
      %v4100 = vpack.c.b16 %v3346, %v3345
      %v4101 = vpack.c.b16 %v3348, %v3347
      %v4102 = vpack.c.b16 %v3350, %v3349
      %v4103 = vpack.c.b16 %v3352, %v3351
      %v4104 = vpack.c.b16 %v3354, %v3353
      %v4105 = vpack.c.b16 %v3356, %v3355
      %v4106 = vpack.c.b16 %v3358, %v3357
      %v4107 = vpack.c.b16 %v3360, %v3359
      %v4108 = vpack.c.b16 %v3362, %v3361
      %v4109 = vpack.c.b16 %v3364, %v3363
      %v4110 = vpack.c.b16 %v3366, %v3365
      %v4111 = vpack.c.b16 %v3368, %v3367
      %v4112 = vpack.c.b16 %v3370, %v3369
      %v4113 = vpack.c.b16 %v3372, %v3371
      %v4114 = vpack.c.b16 %v3374, %v3373
      %v4115 = vpack.c.b16 %v3376, %v3375
      %v4116 = vpack.c.b16 %v3378, %v3377
      %v4117 = vpack.c.b16 %v3380, %v3379
      %v4118 = vpack.c.b16 %v3382, %v3381
      %v4119 = vpack.c.b16 %v3384, %v3383
      %v4120 = vpack.c.b16 %v3386, %v3385
      %v4121 = vpack.c.b16 %v3388, %v3387
      %v4122 = vpack.c.b16 %v3390, %v3389
      %v4123 = vpack.c.b16 %v3392, %v3391
      %v4124 = vpack.c.b16 %v3394, %v3393
      %v4125 = vpack.c.b16 %v3396, %v3395
      %v4126 = vpack.c.b16 %v3398, %v3397
      %v4127 = vpack.c.b16 %v3400, %v3399
      %v4128 = vpack.c.b16 %v3402, %v3401
      %v4129 = vpack.c.b16 %v3404, %v3403
      %v4130 = vpack.c.b16 %v3406, %v3405
      %v4131 = vpack.c.b16 %v3408, %v3407
      %v4132 = vpack.c.b16 %v3410, %v3409
      %v4133 = vpack.c.b16 %v3412, %v3411
      %v4134 = vpack.c.b16 %v3414, %v3413
      %v4135 = vpack.c.b16 %v3416, %v3415
      %v4136 = vpack.c.b16 %v3418, %v3417
      %v4137 = vpack.c.b16 %v3420, %v3419
      %v4138 = vpack.c.b16 %v3422, %v3421
      %v4139 = vpack.c.b16 %v3424, %v3423
      %v4140 = vpack.c.b16 %v3426, %v3425
      %v4141 = vpack.c.b16 %v3428, %v3427
      %v4142 = vpack.c.b16 %v3430, %v3429
      %v4143 = vpack.c.b16 %v3432, %v3431
      %v4144 = vpack.c.b16 %v3434, %v3433
      %v4145 = vpack.c.b16 %v3436, %v3435
      %v4146 = vpack.c.b16 %v3438, %v3437
      %v4147 = vpack.c.b16 %v3440, %v3439
      %v4148 = vpack.c.b16 %v3442, %v3441
      %v4149 = vpack.c.b16 %v3444, %v3443
      %v4150 = vpack.c.b16 %v3446, %v3445
      %v4151 = vpack.c.b16 %v3448, %v3447
      %v4152 = vpack.c.b16 %v3450, %v3449
      %v4153 = vpack.c.b16 %v3452, %v3451
      %v4154 = vpack.c.b16 %v3454, %v3453
      %v4155 = vpack.c.b16 %v3456, %v3455
      %v4156 = vpack.c.b16 %v3458, %v3457
      %v4157 = vpack.c.b16 %v3460, %v3459
      %v4158 = vpack.c.b16 %v3462, %v3461
      %v4159 = vpack.c.b16 %v3464, %v3463
      %v4160 = vpack.c.b16 %v3466, %v3465
      %v4161 = vpack.c.b16 %v3468, %v3467
      %v4162 = vpack.c.b16 %v3470, %v3469
      %v4163 = vpack.c.b16 %v3472, %v3471
      %v4164 = vpack.c.b16 %v3474, %v3473
      %v4165 = vpack.c.b16 %v3476, %v3475
      %v4166 = vpack.c.b16 %v3478, %v3477
      %v4167 = vpack.c.b16 %v3480, %v3479
      %v4168 = vpack.c.b16 %v3482, %v3481
      %v4169 = vpack.c.b16 %v3484, %v3483
      %v4170 = vpack.c.b16 %v3486, %v3485
      %v4171 = vpack.c.b16 %v3488, %v3487
      %v4172 = vpack.c.b16 %v3490, %v3489
      %v4173 = vpack.c.b16 %v3492, %v3491
      %v4174 = vpack.c.b16 %v3494, %v3493
      %v4175 = vpack.c.b16 %v3496, %v3495
      %v4176 = vpack.c.b16 %v3498, %v3497
      %v4177 = vpack.c.b16 %v3500, %v3499
      %v4178 = vpack.c.b16 %v3502, %v3501
      %v4179 = vpack.c.b16 %v3504, %v3503
      %v4180 = vpack.c.b16 %v3506, %v3505
      %v4181 = vpack.c.b16 %v3508, %v3507
      %v4182 = vpack.c.b16 %v3510, %v3509
      %v4183 = vpack.c.b16 %v3512, %v3511
      %v4184 = vpack.c.b16 %v3514, %v3513
      %v4185 = vpack.c.b16 %v3516, %v3515
      %v4186 = vpack.c.b16 %v3518, %v3517
      %v4187 = vpack.c.b16 %v3520, %v3519
      %v4188 = vpack.c.b16 %v3522, %v3521
      %v4189 = vpack.c.b16 %v3524, %v3523
      %v4190 = vpack.c.b16 %v3526, %v3525
      %v4191 = vpack.c.b16 %v3528, %v3527
      %v4192 = vpack.c.b16 %v3530, %v3529
      %v4193 = vpack.c.b16 %v3532, %v3531
      %v4194 = vpack.c.b16 %v3534, %v3533
      %v4195 = vpack.c.b16 %v3536, %v3535
      %v4196 = vpack.c.b16 %v3538, %v3537
      %v4197 = vpack.c.b16 %v3540, %v3539
      %v4198 = vpack.c.b16 %v3542, %v3541
      %v4199 = vpack.c.b16 %v3544, %v3543
      %v4200 = vpack.c.b16 %v3546, %v3545
      %v4201 = vpack.c.b16 %v3548, %v3547
      %v4202 = vpack.c.b16 %v3550, %v3549
      %v4203 = vpack.c.b16 %v3552, %v3551
      %v4204 = vpack.c.b16 %v3554, %v3553
      %v4205 = vpack.c.b16 %v3556, %v3555
      %v4206 = vpack.c.b16 %v3558, %v3557
      %v4207 = vpack.c.b16 %v3560, %v3559
      %v4208 = vpack.c.b16 %v3562, %v3561
      %v4209 = vpack.c.b16 %v3564, %v3563
      %v4210 = vpack.c.b16 %v3566, %v3565
      %v4211 = vpack.c.b16 %v3568, %v3567
      %v4212 = vpack.c.b16 %v3570, %v3569
      %v4213 = vpack.c.b16 %v3572, %v3571
      %v4214 = vpack.c.b16 %v3574, %v3573
      %v4215 = vpack.c.b16 %v3576, %v3575
      %v4216 = vpack.c.b16 %v3578, %v3577
      %v4217 = vpack.c.b16 %v3580, %v3579
      %v4218 = vpack.c.b16 %v3582, %v3581
      %v4219 = vpack.c.b16 %v3584, %v3583
      %v4220 = vpack.c.b16 %v3586, %v3585
      %v4221 = vpack.c.b16 %v3588, %v3587
      %v4222 = vpack.c.b16 %v3590, %v3589
      %v4223 = vpack.c.b16 %v3592, %v3591
      %v4224 = vpack.c.b16 %v3594, %v3593
      %v4225 = vpack.c.b16 %v3596, %v3595
      %v4226 = vpack.c.b16 %v3598, %v3597
      %v4227 = vpack.c.b16 %v3600, %v3599
      %v4228 = vpack.c.b16 %v3602, %v3601
      %v4229 = vpack.c.b16 %v3604, %v3603
      %v4230 = vpack.c.b16 %v3606, %v3605
      %v4231 = vpack.c.b16 %v3608, %v3607
      %v4232 = vpack.c.b16 %v3610, %v3609
      %v4233 = vpack.c.b16 %v3612, %v3611
      %v4234 = vpack.c.b16 %v3614, %v3613
      %v4235 = vpack.c.b16 %v3616, %v3615
      %v4236 = vpack.c.b16 %v3618, %v3617
      %v4237 = vpack.c.b16 %v3620, %v3619
      %v4238 = vpack.c.b16 %v3622, %v3621
      %v4239 = vpack.c.b16 %v3624, %v3623
      %v4240 = vpack.c.b16 %v3626, %v3625
      %v4241 = vpack.c.b16 %v3628, %v3627
      %v4242 = vpack.c.b16 %v3630, %v3629
      %v4243 = vpack.c.b16 %v3632, %v3631
      %v4244 = vpack.c.b16 %v3634, %v3633
      %v4245 = vpack.c.b16 %v3636, %v3635
      %v4246 = vpack.c.b16 %v3638, %v3637
      %v4247 = vpack.c.b16 %v3640, %v3639
      %v4248 = vpack.c.b16 %v3642, %v3641
      %v4249 = vpack.c.b16 %v3644, %v3643
      %v4250 = vpack.c.b16 %v3646, %v3645
      %v4251 = vpack.c.b16 %v3648, %v3647
      %v4252 = vpack.c.b16 %v3650, %v3649
      %v4253 = vpack.c.b16 %v3652, %v3651
      %v4254 = vpack.c.b16 %v3654, %v3653
      %v4255 = vpack.c.b16 %v3656, %v3655
      %v4256 = vpack.c.b16 %v3658, %v3657
      %v4257 = vpack.c.b16 %v3660, %v3659
      %v4258 = vpack.c.b16 %v3662, %v3661
      %v4259 = vpack.c.b16 %v3664, %v3663
      %v4260 = vpack.c.b16 %v3666, %v3665
      %v4261 = vpack.c.b16 %v3668, %v3667
      %v4262 = vpack.c.b16 %v3670, %v3669
      %v4263 = vpack.c.b16 %v3672, %v3671
      %v4264 = vpack.c.b16 %v3674, %v3673
      %v4265 = vpack.c.b16 %v3676, %v3675
      %v4266 = vpack.c.b16 %v3678, %v3677
      %v4267 = vpack.c.b16 %v3680, %v3679
      %v4268 = vpack.c.b16 %v3682, %v3681
      %v4269 = vpack.c.b16 %v3684, %v3683
      %v4270 = vpack.c.b16 %v3686, %v3685
      %v4271 = vpack.c.b16 %v3688, %v3687
      %v4272 = vpack.c.b16 %v3690, %v3689
      %v4273 = vpack.c.b16 %v3692, %v3691
      %v4274 = vpack.c.b16 %v3694, %v3693
      %v4275 = vpack.c.b16 %v3696, %v3695
      %v4276 = vpack.c.b16 %v3698, %v3697
      %v4277 = vpack.c.b16 %v3700, %v3699
      %v4278 = vpack.c.b16 %v3702, %v3701
      %v4279 = vpack.c.b16 %v3704, %v3703
      %v4280 = vpack.c.b16 %v3706, %v3705
      %v4281 = vpack.c.b16 %v3708, %v3707
      %v4282 = vpack.c.b16 %v3710, %v3709
      %v4283 = vpack.c.b16 %v3712, %v3711
      %v4284 = vpack.c.b16 %v3714, %v3713
      %v4285 = vpack.c.b16 %v3716, %v3715
      %v4286 = vpack.c.b16 %v3718, %v3717
      %v4287 = vpack.c.b16 %v3720, %v3719
      %v4288 = vpack.c.b16 %v3722, %v3721
      %v4289 = vpack.c.b16 %v3724, %v3723
      %v4290 = vpack.c.b16 %v3726, %v3725
      %v4291 = vpack.c.b16 %v3728, %v3727
      %v4292 = vpack.c.b16 %v3730, %v3729
      %v4293 = vpack.c.b16 %v3732, %v3731
      %v4294 = vpack.c.b16 %v3734, %v3733
      %v4295 = vpack.c.b16 %v3736, %v3735
      %v4296 = vpack.c.b16 %v3738, %v3737
      %v4297 = vpack.c.b16 %v3740, %v3739
      %v4298 = vpack.c.b16 %v3742, %v3741
      %v4299 = vpack.c.b16 %v3744, %v3743
      %v4300 = vpack.c.b16 %v3746, %v3745
      %v4301 = vpack.c.b16 %v3748, %v3747
      %v4302 = vpack.c.b16 %v3750, %v3749
      %v4303 = vpack.c.b16 %v3752, %v3751
      %v4304 = vpack.c.b16 %v3754, %v3753
      %v4305 = vpack.c.b16 %v3756, %v3755
      %v4306 = vpack.c.b16 %v3758, %v3757
      %v4307 = vpack.c.b16 %v3760, %v3759
      %v4308 = vpack.c.b16 %v3762, %v3761
      %v4309 = vpack.c.b16 %v3764, %v3763
      %v4310 = vpack.c.b16 %v3766, %v3765
      %v4311 = vpack.c.b16 %v3768, %v3767
      %v4312 = vpack.c.b16 %v3770, %v3769
      %v4313 = vpack.c.b16 %v3772, %v3771
      %v4314 = vpack.c.b16 %v3774, %v3773
      %v4315 = vpack.c.b16 %v3776, %v3775
      %v4316 = vpack.c.b16 %v3778, %v3777
      %v4317 = vpack.c.b16 %v3780, %v3779
      %v4318 = vpack.c.b16 %v3782, %v3781
      %v4319 = vpack.c.b16 %v3784, %v3783
      %v4320 = vpack.c.b16 %v3786, %v3785
      %v4321 = vpack.c.b16 %v3788, %v3787
      %v4322 = vpack.c.b16 %v3790, %v3789
      %v4323 = vpack.c.b16 %v3792, %v3791
      %v4324 = vpack.c.b16 %v3794, %v3793
      %v4325 = vpack.c.b16 %v3796, %v3795
      %v4326 = vpack.c.b16 %v3798, %v3797
      %v4327 = vpack.c.b16 %v3800, %v3799
      %v4328 = vpack.c.b16 %v3802, %v3801
      %v4329 = vpack.c.b16 %v3804, %v3803
      %v4330 = vpack.c.b16 %v3806, %v3805
      %v4331 = vpack.c.b16 %v3808, %v3807
      %v4332 = vpack.c.b16 %v3810, %v3809
      %v4333 = vpack.c.b16 %v3812, %v3811
      %v4334 = vpack.c.b16 %v3814, %v3813
      %v4335 = vpack.c.b16 %v3816, %v3815
      %v4336 = vpack.c.b16 %v3818, %v3817
      %v4337 = vpack.c.b16 %v3820, %v3819
      %v4338 = vpack.c.b16 %v3822, %v3821
      %v4339 = vpack.c.b16 %v3824, %v3823
      %v4340 = vpack.c.b16 %v3826, %v3825
      %v4341 = vpack.c.b16 %v3828, %v3827
      %v4342 = vpack.c.b16 %v3830, %v3829
      %4855 = vmatprep.subr.bf16.mxu0 0
      %4856 = vmatpush1.bf16.msra.mxu0 %v3831
      %4857 = vmatprep.subr.bf16.mxu0 0
      %4858 = vmatpush1.bf16.msra.mxu0 %v3832
      %4859 = vmatprep.subr.bf16.mxu0 0
      %4860 = vmatpush1.bf16.msra.mxu0 %v3833
      %4861 = vmatprep.subr.bf16.mxu0 0
      %4862 = vmatpush1.bf16.msra.mxu0 %v3834
      %4863 = vmatprep.subr.bf16.mxu0 0
      %4864 = vmatpush1.bf16.msra.mxu0 %v3835
      %4865 = vmatprep.subr.bf16.mxu0 0
      %4866 = vmatpush1.bf16.msra.mxu0 %v3836
      %4867 = vmatprep.subr.bf16.mxu0 0
      %4868 = vmatpush1.bf16.msra.mxu0 %v3837
      %4869 = vmatprep.subr.bf16.mxu0 0
      %4870 = vmatpush1.bf16.msra.mxu0 %v3838
      %4871 = vmatprep.subr.bf16.mxu0 0
      %4872 = vmatpush1.bf16.msra.mxu0 %v3839
      %4873 = vmatprep.subr.bf16.mxu0 0
      %4874 = vmatpush1.bf16.msra.mxu0 %v3840
      %4875 = vmatprep.subr.bf16.mxu0 0
      %4876 = vmatpush1.bf16.msra.mxu0 %v3841
      %4877 = vmatprep.subr.bf16.mxu0 0
      %4878 = vmatpush1.bf16.msra.mxu0 %v3842
      %4879 = vmatprep.subr.bf16.mxu0 0
      %4880 = vmatpush1.bf16.msra.mxu0 %v3843
      %4881 = vmatprep.subr.bf16.mxu0 0
      %4882 = vmatpush1.bf16.msra.mxu0 %v3844
      %4883 = vmatprep.subr.bf16.mxu0 0
      %4884 = vmatpush1.bf16.msra.mxu0 %v3845
      %4885 = vmatprep.subr.bf16.mxu0 0
      %4886 = vmatpush1.bf16.msra.mxu0 %v3846
      %4887 = vmatprep.mubr.bf16.mxu0 %v1364
      %4888 = vmatmul.mubr.bf16.gmra.mrb[0].mxu0 %v1350
      %v4889 = vpop.f32.mrb[0].mxu0
      %v4890 = vadd.f32 0.0, %v4889
      %v4891 = vpop.f32.mrb[0].mxu0
      %v4892 = vpop.f32.mrb[0].mxu0
      %v4893 = vpop.f32.mrb[0].mxu0
      %4894 = vdwg.mxu0
      %4895 = vmatprep.subr.bf16.mxu0 0
      %4896 = vmatpush1.bf16.msra.mxu0 %v3847
      %4897 = vmatprep.subr.bf16.mxu0 0
      %4898 = vmatpush1.bf16.msra.mxu0 %v3848
      %4899 = vmatprep.subr.bf16.mxu0 0
      %4900 = vmatpush1.bf16.msra.mxu0 %v3849
      %4901 = vmatprep.subr.bf16.mxu0 0
      %4902 = vmatpush1.bf16.msra.mxu0 %v3850
      %4903 = vmatprep.subr.bf16.mxu0 0
      %4904 = vmatpush1.bf16.msra.mxu0 %v3851
      %4905 = vmatprep.subr.bf16.mxu0 0
      %4906 = vmatpush1.bf16.msra.mxu0 %v3852
      %4907 = vmatprep.subr.bf16.mxu0 0
      %4908 = vmatpush1.bf16.msra.mxu0 %v3853
      %4909 = vmatprep.subr.bf16.mxu0 0
      %4910 = vmatpush1.bf16.msra.mxu0 %v3854
      %4911 = vmatprep.subr.bf16.mxu0 0
      %4912 = vmatpush1.bf16.msra.mxu0 %v3855
      %4913 = vmatprep.subr.bf16.mxu0 0
      %4914 = vmatpush1.bf16.msra.mxu0 %v3856
      %4915 = vmatprep.subr.bf16.mxu0 0
      %4916 = vmatpush1.bf16.msra.mxu0 %v3857
      %4917 = vmatprep.subr.bf16.mxu0 0
      %4918 = vmatpush1.bf16.msra.mxu0 %v3858
      %4919 = vmatprep.subr.bf16.mxu0 0
      %4920 = vmatpush1.bf16.msra.mxu0 %v3859
      %4921 = vmatprep.subr.bf16.mxu0 0
      %4922 = vmatpush1.bf16.msra.mxu0 %v3860
      %4923 = vmatprep.subr.bf16.mxu0 0
      %4924 = vmatpush1.bf16.msra.mxu0 %v3861
      %4925 = vmatprep.subr.bf16.mxu0 0
      %4926 = vmatpush1.bf16.msra.mxu0 %v3862
      %4927 = vmatprep.mubr.bf16.mxu0 %v1374
      %4928 = vmatmul.mubr.bf16.gmra.mrb[0].mxu0 %v1372
      %v4929 = vpop.f32.mrb[0].mxu0
      %v4930 = vadd.f32 %v4890, %v4929
      %v4931 = vpop.f32.mrb[0].mxu0
      %v4932 = vpop.f32.mrb[0].mxu0
      %v4933 = vpop.f32.mrb[0].mxu0
      %4934 = vdwg.mxu0
      %4935 = vmatprep.subr.bf16.mxu0 0
      %4936 = vmatpush1.bf16.msra.mxu0 %v3863
      %4937 = vmatprep.subr.bf16.mxu0 0
      %4938 = vmatpush1.bf16.msra.mxu0 %v3864
      %4939 = vmatprep.subr.bf16.mxu0 0
      %4940 = vmatpush1.bf16.msra.mxu0 %v3865
      %4941 = vmatprep.subr.bf16.mxu0 0
      %4942 = vmatpush1.bf16.msra.mxu0 %v3866
      %4943 = vmatprep.subr.bf16.mxu0 0
      %4944 = vmatpush1.bf16.msra.mxu0 %v3867
      %4945 = vmatprep.subr.bf16.mxu0 0
      %4946 = vmatpush1.bf16.msra.mxu0 %v3868
      %4947 = vmatprep.subr.bf16.mxu0 0
      %4948 = vmatpush1.bf16.msra.mxu0 %v3869
      %4949 = vmatprep.subr.bf16.mxu0 0
      %4950 = vmatpush1.bf16.msra.mxu0 %v3870
      %4951 = vmatprep.subr.bf16.mxu0 0
      %4952 = vmatpush1.bf16.msra.mxu0 %v3871
      %4953 = vmatprep.subr.bf16.mxu0 0
      %4954 = vmatpush1.bf16.msra.mxu0 %v3872
      %4955 = vmatprep.subr.bf16.mxu0 0
      %4956 = vmatpush1.bf16.msra.mxu0 %v3873
      %4957 = vmatprep.subr.bf16.mxu0 0
      %4958 = vmatpush1.bf16.msra.mxu0 %v3874
      %4959 = vmatprep.subr.bf16.mxu0 0
      %4960 = vmatpush1.bf16.msra.mxu0 %v3875
      %4961 = vmatprep.subr.bf16.mxu0 0
      %4962 = vmatpush1.bf16.msra.mxu0 %v3876
      %4963 = vmatprep.subr.bf16.mxu0 0
      %4964 = vmatpush1.bf16.msra.mxu0 %v3877
      %4965 = vmatprep.subr.bf16.mxu0 0
      %4966 = vmatpush1.bf16.msra.mxu0 %v3878
      %4967 = vmatprep.mubr.bf16.mxu0 %v1371
      %4968 = vmatmul.mubr.bf16.gmra.mrb[0].mxu0 %v1357
      %v4969 = vpop.f32.mrb[0].mxu0
      %v4970 = vadd.f32 %v4930, %v4969
      %v4971 = vpop.f32.mrb[0].mxu0
      %v4972 = vpop.f32.mrb[0].mxu0
      %v4973 = vpop.f32.mrb[0].mxu0
      %4974 = vdwg.mxu0
      %4975 = vmatprep.subr.bf16.mxu0 0
      %4976 = vmatpush1.bf16.msra.mxu0 %v3879
      %4977 = vmatprep.subr.bf16.mxu0 0
      %4978 = vmatpush1.bf16.msra.mxu0 %v3880
      %4979 = vmatprep.subr.bf16.mxu0 0
      %4980 = vmatpush1.bf16.msra.mxu0 %v3881
      %4981 = vmatprep.subr.bf16.mxu0 0
      %4982 = vmatpush1.bf16.msra.mxu0 %v3882
      %4983 = vmatprep.subr.bf16.mxu0 0
      %4984 = vmatpush1.bf16.msra.mxu0 %v3883
      %4985 = vmatprep.subr.bf16.mxu0 0
      %4986 = vmatpush1.bf16.msra.mxu0 %v3884
      %4987 = vmatprep.subr.bf16.mxu0 0
      %4988 = vmatpush1.bf16.msra.mxu0 %v3885
      %4989 = vmatprep.subr.bf16.mxu0 0
      %4990 = vmatpush1.bf16.msra.mxu0 %v3886
      %4991 = vmatprep.subr.bf16.mxu0 0
      %4992 = vmatpush1.bf16.msra.mxu0 %v3887
      %4993 = vmatprep.subr.bf16.mxu0 0
      %4994 = vmatpush1.bf16.msra.mxu0 %v3888
      %4995 = vmatprep.subr.bf16.mxu0 0
      %4996 = vmatpush1.bf16.msra.mxu0 %v3889
      %4997 = vmatprep.subr.bf16.mxu0 0
      %4998 = vmatpush1.bf16.msra.mxu0 %v3890
      %4999 = vmatprep.subr.bf16.mxu0 0
      %5000 = vmatpush1.bf16.msra.mxu0 %v3891
      %5001 = vmatprep.subr.bf16.mxu0 0
      %5002 = vmatpush1.bf16.msra.mxu0 %v3892
      %5003 = vmatprep.subr.bf16.mxu0 0
      %5004 = vmatpush1.bf16.msra.mxu0 %v3893
      %5005 = vmatprep.subr.bf16.mxu0 0
      %5006 = vmatpush1.bf16.msra.mxu0 %v3894
      %5007 = vmatprep.mubr.bf16.mxu0 %v1375
      %5008 = vmatmul.mubr.bf16.gmra.mrb[0].mxu0 %v1373
      %v5009 = vpop.f32.mrb[0].mxu0
      %v5010 = vadd.f32 %v4970, %v5009
      %v5011 = vpop.f32.mrb[0].mxu0
      %v5012 = vpop.f32.mrb[0].mxu0
      %v5013 = vpop.f32.mrb[0].mxu0
      %5014 = vdwg.mxu0
      %5015 = vmatprep.subr.bf16.mxu0 0
      %5016 = vmatpush1.bf16.msra.mxu0 %v3895
      %5017 = vmatprep.subr.bf16.mxu0 0
      %5018 = vmatpush1.bf16.msra.mxu0 %v3896
      %5019 = vmatprep.subr.bf16.mxu0 0
      %5020 = vmatpush1.bf16.msra.mxu0 %v3897
      %5021 = vmatprep.subr.bf16.mxu0 0
      %5022 = vmatpush1.bf16.msra.mxu0 %v3898
      %5023 = vmatprep.subr.bf16.mxu0 0
      %5024 = vmatpush1.bf16.msra.mxu0 %v3899
      %5025 = vmatprep.subr.bf16.mxu0 0
      %5026 = vmatpush1.bf16.msra.mxu0 %v3900
      %5027 = vmatprep.subr.bf16.mxu0 0
      %5028 = vmatpush1.bf16.msra.mxu0 %v3901
      %5029 = vmatprep.subr.bf16.mxu0 0
      %5030 = vmatpush1.bf16.msra.mxu0 %v3902
      %5031 = vmatprep.subr.bf16.mxu0 0
      %5032 = vmatpush1.bf16.msra.mxu0 %v3903
      %5033 = vmatprep.subr.bf16.mxu0 0
      %5034 = vmatpush1.bf16.msra.mxu0 %v3904
      %5035 = vmatprep.subr.bf16.mxu0 0
      %5036 = vmatpush1.bf16.msra.mxu0 %v3905
      %5037 = vmatprep.subr.bf16.mxu0 0
      %5038 = vmatpush1.bf16.msra.mxu0 %v3906
      %5039 = vmatprep.subr.bf16.mxu0 0
      %5040 = vmatpush1.bf16.msra.mxu0 %v3907
      %5041 = vmatprep.subr.bf16.mxu0 0
      %5042 = vmatpush1.bf16.msra.mxu0 %v3908
      %5043 = vmatprep.subr.bf16.mxu0 0
      %5044 = vmatpush1.bf16.msra.mxu0 %v3909
      %5045 = vmatprep.subr.bf16.mxu0 0
      %5046 = vmatpush1.bf16.msra.mxu0 %v3910
      %5047 = vmatprep.mubr.bf16.mxu0 %v1413
      %5048 = vmatmul.mubr.bf16.gmra.mrb[0].mxu0 %v1399
      %v5049 = vpop.f32.mrb[0].mxu0
      %v5050 = vadd.f32 %v5010, %v5049
      %v5051 = vpop.f32.mrb[0].mxu0
      %v5052 = vpop.f32.mrb[0].mxu0
      %v5053 = vpop.f32.mrb[0].mxu0
      %5054 = vdwg.mxu0
      %5055 = vmatprep.subr.bf16.mxu0 0
      %5056 = vmatpush1.bf16.msra.mxu0 %v3911
      %5057 = vmatprep.subr.bf16.mxu0 0
      %5058 = vmatpush1.bf16.msra.mxu0 %v3912
      %5059 = vmatprep.subr.bf16.mxu0 0
      %5060 = vmatpush1.bf16.msra.mxu0 %v3913
      %5061 = vmatprep.subr.bf16.mxu0 0
      %5062 = vmatpush1.bf16.msra.mxu0 %v3914
      %5063 = vmatprep.subr.bf16.mxu0 0
      %5064 = vmatpush1.bf16.msra.mxu0 %v3915
      %5065 = vmatprep.subr.bf16.mxu0 0
      %5066 = vmatpush1.bf16.msra.mxu0 %v3916
      %5067 = vmatprep.subr.bf16.mxu0 0
      %5068 = vmatpush1.bf16.msra.mxu0 %v3917
      %5069 = vmatprep.subr.bf16.mxu0 0
      %5070 = vmatpush1.bf16.msra.mxu0 %v3918
      %5071 = vmatprep.subr.bf16.mxu0 0
      %5072 = vmatpush1.bf16.msra.mxu0 %v3919
      %5073 = vmatprep.subr.bf16.mxu0 0
      %5074 = vmatpush1.bf16.msra.mxu0 %v3920
      %5075 = vmatprep.subr.bf16.mxu0 0
      %5076 = vmatpush1.bf16.msra.mxu0 %v3921
      %5077 = vmatprep.subr.bf16.mxu0 0
      %5078 = vmatpush1.bf16.msra.mxu0 %v3922
      %5079 = vmatprep.subr.bf16.mxu0 0
      %5080 = vmatpush1.bf16.msra.mxu0 %v3923
      %5081 = vmatprep.subr.bf16.mxu0 0
      %5082 = vmatpush1.bf16.msra.mxu0 %v3924
      %5083 = vmatprep.subr.bf16.mxu0 0
      %5084 = vmatpush1.bf16.msra.mxu0 %v3925
      %5085 = vmatprep.subr.bf16.mxu0 0
      %5086 = vmatpush1.bf16.msra.mxu0 %v3926
      %5087 = vmatprep.mubr.bf16.mxu0 %v1423
      %5088 = vmatmul.mubr.bf16.gmra.mrb[0].mxu0 %v1421
      %v5089 = vpop.f32.mrb[0].mxu0
      %v5090 = vadd.f32 %v5050, %v5089
      %v5091 = vpop.f32.mrb[0].mxu0
      %v5092 = vpop.f32.mrb[0].mxu0
      %v5093 = vpop.f32.mrb[0].mxu0
      %5094 = vdwg.mxu0
      %5095 = vmatprep.subr.bf16.mxu0 0
      %5096 = vmatpush1.bf16.msra.mxu0 %v3927
      %5097 = vmatprep.subr.bf16.mxu0 0
      %5098 = vmatpush1.bf16.msra.mxu0 %v3928
      %5099 = vmatprep.subr.bf16.mxu0 0
      %5100 = vmatpush1.bf16.msra.mxu0 %v3929
      %5101 = vmatprep.subr.bf16.mxu0 0
      %5102 = vmatpush1.bf16.msra.mxu0 %v3930
      %5103 = vmatprep.subr.bf16.mxu0 0
      %5104 = vmatpush1.bf16.msra.mxu0 %v3931
      %5105 = vmatprep.subr.bf16.mxu0 0
      %5106 = vmatpush1.bf16.msra.mxu0 %v3932
      %5107 = vmatprep.subr.bf16.mxu0 0
      %5108 = vmatpush1.bf16.msra.mxu0 %v3933
      %5109 = vmatprep.subr.bf16.mxu0 0
      %5110 = vmatpush1.bf16.msra.mxu0 %v3934
      %5111 = vmatprep.subr.bf16.mxu0 0
      %5112 = vmatpush1.bf16.msra.mxu0 %v3935
      %5113 = vmatprep.subr.bf16.mxu0 0
      %5114 = vmatpush1.bf16.msra.mxu0 %v3936
      %5115 = vmatprep.subr.bf16.mxu0 0
      %5116 = vmatpush1.bf16.msra.mxu0 %v3937
      %5117 = vmatprep.subr.bf16.mxu0 0
      %5118 = vmatpush1.bf16.msra.mxu0 %v3938
      %5119 = vmatprep.subr.bf16.mxu0 0
      %5120 = vmatpush1.bf16.msra.mxu0 %v3939
      %5121 = vmatprep.subr.bf16.mxu0 0
      %5122 = vmatpush1.bf16.msra.mxu0 %v3940
      %5123 = vmatprep.subr.bf16.mxu0 0
      %5124 = vmatpush1.bf16.msra.mxu0 %v3941
      %5125 = vmatprep.subr.bf16.mxu0 0
      %5126 = vmatpush1.bf16.msra.mxu0 %v3942
      %5127 = vmatprep.mubr.bf16.mxu0 %v1420
      %5128 = vmatmul.mubr.bf16.gmra.mrb[0].mxu0 %v1406
      %v5129 = vpop.f32.mrb[0].mxu0
      %v5130 = vadd.f32 %v5090, %v5129
      %v5131 = vpop.f32.mrb[0].mxu0
      %v5132 = vpop.f32.mrb[0].mxu0
      %v5133 = vpop.f32.mrb[0].mxu0
      %5134 = vdwg.mxu0
      %5135 = vmatprep.subr.bf16.mxu0 0
      %5136 = vmatpush1.bf16.msra.mxu0 %v3943
      %5137 = vmatprep.subr.bf16.mxu0 0
      %5138 = vmatpush1.bf16.msra.mxu0 %v3944
      %5139 = vmatprep.subr.bf16.mxu0 0
      %5140 = vmatpush1.bf16.msra.mxu0 %v3945
      %5141 = vmatprep.subr.bf16.mxu0 0
      %5142 = vmatpush1.bf16.msra.mxu0 %v3946
      %5143 = vmatprep.subr.bf16.mxu0 0
      %5144 = vmatpush1.bf16.msra.mxu0 %v3947
      %5145 = vmatprep.subr.bf16.mxu0 0
      %5146 = vmatpush1.bf16.msra.mxu0 %v3948
      %5147 = vmatprep.subr.bf16.mxu0 0
      %5148 = vmatpush1.bf16.msra.mxu0 %v3949
      %5149 = vmatprep.subr.bf16.mxu0 0
      %5150 = vmatpush1.bf16.msra.mxu0 %v3950
      %5151 = vmatprep.subr.bf16.mxu0 0
      %5152 = vmatpush1.bf16.msra.mxu0 %v3951
      %5153 = vmatprep.subr.bf16.mxu0 0
      %5154 = vmatpush1.bf16.msra.mxu0 %v3952
      %5155 = vmatprep.subr.bf16.mxu0 0
      %5156 = vmatpush1.bf16.msra.mxu0 %v3953
      %5157 = vmatprep.subr.bf16.mxu0 0
      %5158 = vmatpush1.bf16.msra.mxu0 %v3954
      %5159 = vmatprep.subr.bf16.mxu0 0
      %5160 = vmatpush1.bf16.msra.mxu0 %v3955
      %5161 = vmatprep.subr.bf16.mxu0 0
      %5162 = vmatpush1.bf16.msra.mxu0 %v3956
      %5163 = vmatprep.subr.bf16.mxu0 0
      %5164 = vmatpush1.bf16.msra.mxu0 %v3957
      %5165 = vmatprep.subr.bf16.mxu0 0
      %5166 = vmatpush1.bf16.msra.mxu0 %v3958
      %5167 = vmatprep.mubr.bf16.mxu0 %v1424
      %5168 = vmatmul.mubr.bf16.gmra.mrb[0].mxu0 %v1422
      %v5169 = vpop.f32.mrb[0].mxu0
      %v5170 = vadd.f32 %v5130, %v5169
      %v5171 = vpop.f32.mrb[0].mxu0
      %v5172 = vpop.f32.mrb[0].mxu0
      %v5173 = vpop.f32.mrb[0].mxu0
      %5174 = vdwg.mxu0
      %5175 = vmatprep.subr.bf16.mxu0 0
      %5176 = vmatpush1.bf16.msra.mxu0 %v3959
      %5177 = vmatprep.subr.bf16.mxu0 0
      %5178 = vmatpush1.bf16.msra.mxu0 %v3960
      %5179 = vmatprep.subr.bf16.mxu0 0
      %5180 = vmatpush1.bf16.msra.mxu0 %v3961
      %5181 = vmatprep.subr.bf16.mxu0 0
      %5182 = vmatpush1.bf16.msra.mxu0 %v3962
      %5183 = vmatprep.subr.bf16.mxu0 0
      %5184 = vmatpush1.bf16.msra.mxu0 %v3963
      %5185 = vmatprep.subr.bf16.mxu0 0
      %5186 = vmatpush1.bf16.msra.mxu0 %v3964
      %5187 = vmatprep.subr.bf16.mxu0 0
      %5188 = vmatpush1.bf16.msra.mxu0 %v3965
      %5189 = vmatprep.subr.bf16.mxu0 0
      %5190 = vmatpush1.bf16.msra.mxu0 %v3966
      %5191 = vmatprep.subr.bf16.mxu0 0
      %5192 = vmatpush1.bf16.msra.mxu0 %v3967
      %5193 = vmatprep.subr.bf16.mxu0 0
      %5194 = vmatpush1.bf16.msra.mxu0 %v3968
      %5195 = vmatprep.subr.bf16.mxu0 0
      %5196 = vmatpush1.bf16.msra.mxu0 %v3969
      %5197 = vmatprep.subr.bf16.mxu0 0
      %5198 = vmatpush1.bf16.msra.mxu0 %v3970
      %5199 = vmatprep.subr.bf16.mxu0 0
      %5200 = vmatpush1.bf16.msra.mxu0 %v3971
      %5201 = vmatprep.subr.bf16.mxu0 0
      %5202 = vmatpush1.bf16.msra.mxu0 %v3972
      %5203 = vmatprep.subr.bf16.mxu0 0
      %5204 = vmatpush1.bf16.msra.mxu0 %v3973
      %5205 = vmatprep.subr.bf16.mxu0 0
      %5206 = vmatpush1.bf16.msra.mxu0 %v3974
      %5207 = vmatprep.mubr.bf16.mxu0 %v1462
      %5208 = vmatmul.mubr.bf16.gmra.mrb[0].mxu0 %v1448
      %v5209 = vpop.f32.mrb[0].mxu0
      %v5210 = vadd.f32 %v5170, %v5209
      %v5211 = vpop.f32.mrb[0].mxu0
      %v5212 = vpop.f32.mrb[0].mxu0
      %v5213 = vpop.f32.mrb[0].mxu0
      %5214 = vdwg.mxu0
      %5215 = vmatprep.subr.bf16.mxu0 0
      %5216 = vmatpush1.bf16.msra.mxu0 %v3975
      %5217 = vmatprep.subr.bf16.mxu0 0
      %5218 = vmatpush1.bf16.msra.mxu0 %v3976
      %5219 = vmatprep.subr.bf16.mxu0 0
      %5220 = vmatpush1.bf16.msra.mxu0 %v3977
      %5221 = vmatprep.subr.bf16.mxu0 0
      %5222 = vmatpush1.bf16.msra.mxu0 %v3978
      %5223 = vmatprep.subr.bf16.mxu0 0
      %5224 = vmatpush1.bf16.msra.mxu0 %v3979
      %5225 = vmatprep.subr.bf16.mxu0 0
      %5226 = vmatpush1.bf16.msra.mxu0 %v3980
      %5227 = vmatprep.subr.bf16.mxu0 0
      %5228 = vmatpush1.bf16.msra.mxu0 %v3981
      %5229 = vmatprep.subr.bf16.mxu0 0
      %5230 = vmatpush1.bf16.msra.mxu0 %v3982
      %5231 = vmatprep.subr.bf16.mxu0 0
      %5232 = vmatpush1.bf16.msra.mxu0 %v3983
      %5233 = vmatprep.subr.bf16.mxu0 0
      %5234 = vmatpush1.bf16.msra.mxu0 %v3984
      %5235 = vmatprep.subr.bf16.mxu0 0
      %5236 = vmatpush1.bf16.msra.mxu0 %v3985
      %5237 = vmatprep.subr.bf16.mxu0 0
      %5238 = vmatpush1.bf16.msra.mxu0 %v3986
      %5239 = vmatprep.subr.bf16.mxu0 0
      %5240 = vmatpush1.bf16.msra.mxu0 %v3987
      %5241 = vmatprep.subr.bf16.mxu0 0
      %5242 = vmatpush1.bf16.msra.mxu0 %v3988
      %5243 = vmatprep.subr.bf16.mxu0 0
      %5244 = vmatpush1.bf16.msra.mxu0 %v3989
      %5245 = vmatprep.subr.bf16.mxu0 0
      %5246 = vmatpush1.bf16.msra.mxu0 %v3990
      %5247 = vmatprep.mubr.bf16.mxu0 %v1472
      %5248 = vmatmul.mubr.bf16.gmra.mrb[0].mxu0 %v1470
      %v5249 = vpop.f32.mrb[0].mxu0
      %v5250 = vadd.f32 %v5210, %v5249
      %v5251 = vpop.f32.mrb[0].mxu0
      %v5252 = vpop.f32.mrb[0].mxu0
      %v5253 = vpop.f32.mrb[0].mxu0
      %5254 = vdwg.mxu0
      %5255 = vmatprep.subr.bf16.mxu0 0
      %5256 = vmatpush1.bf16.msra.mxu0 %v3991
      %5257 = vmatprep.subr.bf16.mxu0 0
      %5258 = vmatpush1.bf16.msra.mxu0 %v3992
      %5259 = vmatprep.subr.bf16.mxu0 0
      %5260 = vmatpush1.bf16.msra.mxu0 %v3993
      %5261 = vmatprep.subr.bf16.mxu0 0
      %5262 = vmatpush1.bf16.msra.mxu0 %v3994
      %5263 = vmatprep.subr.bf16.mxu0 0
      %5264 = vmatpush1.bf16.msra.mxu0 %v3995
      %5265 = vmatprep.subr.bf16.mxu0 0
      %5266 = vmatpush1.bf16.msra.mxu0 %v3996
      %5267 = vmatprep.subr.bf16.mxu0 0
      %5268 = vmatpush1.bf16.msra.mxu0 %v3997
      %5269 = vmatprep.subr.bf16.mxu0 0
      %5270 = vmatpush1.bf16.msra.mxu0 %v3998
      %5271 = vmatprep.subr.bf16.mxu0 0
      %5272 = vmatpush1.bf16.msra.mxu0 %v3999
      %5273 = vmatprep.subr.bf16.mxu0 0
      %5274 = vmatpush1.bf16.msra.mxu0 %v4000
      %5275 = vmatprep.subr.bf16.mxu0 0
      %5276 = vmatpush1.bf16.msra.mxu0 %v4001
      %5277 = vmatprep.subr.bf16.mxu0 0
      %5278 = vmatpush1.bf16.msra.mxu0 %v4002
      %5279 = vmatprep.subr.bf16.mxu0 0
      %5280 = vmatpush1.bf16.msra.mxu0 %v4003
      %5281 = vmatprep.subr.bf16.mxu0 0
      %5282 = vmatpush1.bf16.msra.mxu0 %v4004
      %5283 = vmatprep.subr.bf16.mxu0 0
      %5284 = vmatpush1.bf16.msra.mxu0 %v4005
      %5285 = vmatprep.subr.bf16.mxu0 0
      %5286 = vmatpush1.bf16.msra.mxu0 %v4006
      %5287 = vmatprep.mubr.bf16.mxu0 %v1469
      %5288 = vmatmul.mubr.bf16.gmra.mrb[0].mxu0 %v1455
      %v5289 = vpop.f32.mrb[0].mxu0
      %v5290 = vadd.f32 %v5250, %v5289
      %v5291 = vpop.f32.mrb[0].mxu0
      %v5292 = vpop.f32.mrb[0].mxu0
      %v5293 = vpop.f32.mrb[0].mxu0
      %5294 = vdwg.mxu0
      %5295 = vmatprep.subr.bf16.mxu0 0
      %5296 = vmatpush1.bf16.msra.mxu0 %v4007
      %5297 = vmatprep.subr.bf16.mxu0 0
      %5298 = vmatpush1.bf16.msra.mxu0 %v4008
      %5299 = vmatprep.subr.bf16.mxu0 0
      %5300 = vmatpush1.bf16.msra.mxu0 %v4009
      %5301 = vmatprep.subr.bf16.mxu0 0
      %5302 = vmatpush1.bf16.msra.mxu0 %v4010
      %5303 = vmatprep.subr.bf16.mxu0 0
      %5304 = vmatpush1.bf16.msra.mxu0 %v4011
      %5305 = vmatprep.subr.bf16.mxu0 0
      %5306 = vmatpush1.bf16.msra.mxu0 %v4012
      %5307 = vmatprep.subr.bf16.mxu0 0
      %5308 = vmatpush1.bf16.msra.mxu0 %v4013
      %5309 = vmatprep.subr.bf16.mxu0 0
      %5310 = vmatpush1.bf16.msra.mxu0 %v4014
      %5311 = vmatprep.subr.bf16.mxu0 0
      %5312 = vmatpush1.bf16.msra.mxu0 %v4015
      %5313 = vmatprep.subr.bf16.mxu0 0
      %5314 = vmatpush1.bf16.msra.mxu0 %v4016
      %5315 = vmatprep.subr.bf16.mxu0 0
      %5316 = vmatpush1.bf16.msra.mxu0 %v4017
      %5317 = vmatprep.subr.bf16.mxu0 0
      %5318 = vmatpush1.bf16.msra.mxu0 %v4018
      %5319 = vmatprep.subr.bf16.mxu0 0
      %5320 = vmatpush1.bf16.msra.mxu0 %v4019
      %5321 = vmatprep.subr.bf16.mxu0 0
      %5322 = vmatpush1.bf16.msra.mxu0 %v4020
      %5323 = vmatprep.subr.bf16.mxu0 0
      %5324 = vmatpush1.bf16.msra.mxu0 %v4021
      %5325 = vmatprep.subr.bf16.mxu0 0
      %5326 = vmatpush1.bf16.msra.mxu0 %v4022
      %5327 = vmatprep.mubr.bf16.mxu0 %v1473
      %5328 = vmatmul.mubr.bf16.gmra.mrb[0].mxu0 %v1471
      %v5329 = vpop.f32.mrb[0].mxu0
      %v5330 = vadd.f32 %v5290, %v5329
      %v5331 = vpop.f32.mrb[0].mxu0
      %v5332 = vpop.f32.mrb[0].mxu0
      %v5333 = vpop.f32.mrb[0].mxu0
      %5334 = vdwg.mxu0
      %5335 = vmatprep.subr.bf16.mxu0 0
      %5336 = vmatpush1.bf16.msra.mxu0 %v4023
      %5337 = vmatprep.subr.bf16.mxu0 0
      %5338 = vmatpush1.bf16.msra.mxu0 %v4024
      %5339 = vmatprep.subr.bf16.mxu0 0
      %5340 = vmatpush1.bf16.msra.mxu0 %v4025
      %5341 = vmatprep.subr.bf16.mxu0 0
      %5342 = vmatpush1.bf16.msra.mxu0 %v4026
      %5343 = vmatprep.subr.bf16.mxu0 0
      %5344 = vmatpush1.bf16.msra.mxu0 %v4027
      %5345 = vmatprep.subr.bf16.mxu0 0
      %5346 = vmatpush1.bf16.msra.mxu0 %v4028
      %5347 = vmatprep.subr.bf16.mxu0 0
      %5348 = vmatpush1.bf16.msra.mxu0 %v4029
      %5349 = vmatprep.subr.bf16.mxu0 0
      %5350 = vmatpush1.bf16.msra.mxu0 %v4030
      %5351 = vmatprep.subr.bf16.mxu0 0
      %5352 = vmatpush1.bf16.msra.mxu0 %v4031
      %5353 = vmatprep.subr.bf16.mxu0 0
      %5354 = vmatpush1.bf16.msra.mxu0 %v4032
      %5355 = vmatprep.subr.bf16.mxu0 0
      %5356 = vmatpush1.bf16.msra.mxu0 %v4033
      %5357 = vmatprep.subr.bf16.mxu0 0
      %5358 = vmatpush1.bf16.msra.mxu0 %v4034
      %5359 = vmatprep.subr.bf16.mxu0 0
      %5360 = vmatpush1.bf16.msra.mxu0 %v4035
      %5361 = vmatprep.subr.bf16.mxu0 0
      %5362 = vmatpush1.bf16.msra.mxu0 %v4036
      %5363 = vmatprep.subr.bf16.mxu0 0
      %5364 = vmatpush1.bf16.msra.mxu0 %v4037
      %5365 = vmatprep.subr.bf16.mxu0 0
      %5366 = vmatpush1.bf16.msra.mxu0 %v4038
      %5367 = vmatprep.mubr.bf16.mxu0 %v1511
      %5368 = vmatmul.mubr.bf16.gmra.mrb[0].mxu0 %v1497
      %v5369 = vpop.f32.mrb[0].mxu0
      %v5370 = vadd.f32 %v5330, %v5369
      %v5371 = vpop.f32.mrb[0].mxu0
      %v5372 = vpop.f32.mrb[0].mxu0
      %v5373 = vpop.f32.mrb[0].mxu0
      %5374 = vdwg.mxu0
      %5375 = vmatprep.subr.bf16.mxu0 0
      %5376 = vmatpush1.bf16.msra.mxu0 %v4039
      %5377 = vmatprep.subr.bf16.mxu0 0
      %5378 = vmatpush1.bf16.msra.mxu0 %v4040
      %5379 = vmatprep.subr.bf16.mxu0 0
      %5380 = vmatpush1.bf16.msra.mxu0 %v4041
      %5381 = vmatprep.subr.bf16.mxu0 0
      %5382 = vmatpush1.bf16.msra.mxu0 %v4042
      %5383 = vmatprep.subr.bf16.mxu0 0
      %5384 = vmatpush1.bf16.msra.mxu0 %v4043
      %5385 = vmatprep.subr.bf16.mxu0 0
      %5386 = vmatpush1.bf16.msra.mxu0 %v4044
      %5387 = vmatprep.subr.bf16.mxu0 0
      %5388 = vmatpush1.bf16.msra.mxu0 %v4045
      %5389 = vmatprep.subr.bf16.mxu0 0
      %5390 = vmatpush1.bf16.msra.mxu0 %v4046
      %5391 = vmatprep.subr.bf16.mxu0 0
      %5392 = vmatpush1.bf16.msra.mxu0 %v4047
      %5393 = vmatprep.subr.bf16.mxu0 0
      %5394 = vmatpush1.bf16.msra.mxu0 %v4048
      %5395 = vmatprep.subr.bf16.mxu0 0
      %5396 = vmatpush1.bf16.msra.mxu0 %v4049
      %5397 = vmatprep.subr.bf16.mxu0 0
      %5398 = vmatpush1.bf16.msra.mxu0 %v4050
      %5399 = vmatprep.subr.bf16.mxu0 0
      %5400 = vmatpush1.bf16.msra.mxu0 %v4051
      %5401 = vmatprep.subr.bf16.mxu0 0
      %5402 = vmatpush1.bf16.msra.mxu0 %v4052
      %5403 = vmatprep.subr.bf16.mxu0 0
      %5404 = vmatpush1.bf16.msra.mxu0 %v4053
      %5405 = vmatprep.subr.bf16.mxu0 0
      %5406 = vmatpush1.bf16.msra.mxu0 %v4054
      %5407 = vmatprep.mubr.bf16.mxu0 %v1521
      %5408 = vmatmul.mubr.bf16.gmra.mrb[0].mxu0 %v1519
      %v5409 = vpop.f32.mrb[0].mxu0
      %v5410 = vadd.f32 %v5370, %v5409
      %v5411 = vpop.f32.mrb[0].mxu0
      %v5412 = vpop.f32.mrb[0].mxu0
      %v5413 = vpop.f32.mrb[0].mxu0
      %5414 = vdwg.mxu0
      %5415 = vmatprep.subr.bf16.mxu0 0
      %5416 = vmatpush1.bf16.msra.mxu0 %v4055
      %5417 = vmatprep.subr.bf16.mxu0 0
      %5418 = vmatpush1.bf16.msra.mxu0 %v4056
      %5419 = vmatprep.subr.bf16.mxu0 0
      %5420 = vmatpush1.bf16.msra.mxu0 %v4057
      %5421 = vmatprep.subr.bf16.mxu0 0
      %5422 = vmatpush1.bf16.msra.mxu0 %v4058
      %5423 = vmatprep.subr.bf16.mxu0 0
      %5424 = vmatpush1.bf16.msra.mxu0 %v4059
      %5425 = vmatprep.subr.bf16.mxu0 0
      %5426 = vmatpush1.bf16.msra.mxu0 %v4060
      %5427 = vmatprep.subr.bf16.mxu0 0
      %5428 = vmatpush1.bf16.msra.mxu0 %v4061
      %5429 = vmatprep.subr.bf16.mxu0 0
      %5430 = vmatpush1.bf16.msra.mxu0 %v4062
      %5431 = vmatprep.subr.bf16.mxu0 0
      %5432 = vmatpush1.bf16.msra.mxu0 %v4063
      %5433 = vmatprep.subr.bf16.mxu0 0
      %5434 = vmatpush1.bf16.msra.mxu0 %v4064
      %5435 = vmatprep.subr.bf16.mxu0 0
      %5436 = vmatpush1.bf16.msra.mxu0 %v4065
      %5437 = vmatprep.subr.bf16.mxu0 0
      %5438 = vmatpush1.bf16.msra.mxu0 %v4066
      %5439 = vmatprep.subr.bf16.mxu0 0
      %5440 = vmatpush1.bf16.msra.mxu0 %v4067
      %5441 = vmatprep.subr.bf16.mxu0 0
      %5442 = vmatpush1.bf16.msra.mxu0 %v4068
      %5443 = vmatprep.subr.bf16.mxu0 0
      %5444 = vmatpush1.bf16.msra.mxu0 %v4069
      %5445 = vmatprep.subr.bf16.mxu0 0
      %5446 = vmatpush1.bf16.msra.mxu0 %v4070
      %5447 = vmatprep.mubr.bf16.mxu0 %v1518
      %5448 = vmatmul.mubr.bf16.gmra.mrb[0].mxu0 %v1504
      %v5449 = vpop.f32.mrb[0].mxu0
      %v5450 = vadd.f32 %v5410, %v5449
      %v5451 = vpop.f32.mrb[0].mxu0
      %v5452 = vpop.f32.mrb[0].mxu0
      %v5453 = vpop.f32.mrb[0].mxu0
      %5454 = vdwg.mxu0
      %5455 = vmatprep.subr.bf16.mxu0 0
      %5456 = vmatpush1.bf16.msra.mxu0 %v4071
      %5457 = vmatprep.subr.bf16.mxu0 0
      %5458 = vmatpush1.bf16.msra.mxu0 %v4072
      %5459 = vmatprep.subr.bf16.mxu0 0
      %5460 = vmatpush1.bf16.msra.mxu0 %v4073
      %5461 = vmatprep.subr.bf16.mxu0 0
      %5462 = vmatpush1.bf16.msra.mxu0 %v4074
      %5463 = vmatprep.subr.bf16.mxu0 0
      %5464 = vmatpush1.bf16.msra.mxu0 %v4075
      %5465 = vmatprep.subr.bf16.mxu0 0
      %5466 = vmatpush1.bf16.msra.mxu0 %v4076
      %5467 = vmatprep.subr.bf16.mxu0 0
      %5468 = vmatpush1.bf16.msra.mxu0 %v4077
      %5469 = vmatprep.subr.bf16.mxu0 0
      %5470 = vmatpush1.bf16.msra.mxu0 %v4078
      %5471 = vmatprep.subr.bf16.mxu0 0
      %5472 = vmatpush1.bf16.msra.mxu0 %v4079
      %5473 = vmatprep.subr.bf16.mxu0 0
      %5474 = vmatpush1.bf16.msra.mxu0 %v4080
      %5475 = vmatprep.subr.bf16.mxu0 0
      %5476 = vmatpush1.bf16.msra.mxu0 %v4081
      %5477 = vmatprep.subr.bf16.mxu0 0
      %5478 = vmatpush1.bf16.msra.mxu0 %v4082
      %5479 = vmatprep.subr.bf16.mxu0 0
      %5480 = vmatpush1.bf16.msra.mxu0 %v4083
      %5481 = vmatprep.subr.bf16.mxu0 0
      %5482 = vmatpush1.bf16.msra.mxu0 %v4084
      %5483 = vmatprep.subr.bf16.mxu0 0
      %5484 = vmatpush1.bf16.msra.mxu0 %v4085
      %5485 = vmatprep.subr.bf16.mxu0 0
      %5486 = vmatpush1.bf16.msra.mxu0 %v4086
      %5487 = vmatprep.mubr.bf16.mxu0 %v1522
      %5488 = vmatmul.mubr.bf16.gmra.mrb[0].mxu0 %v1520
      %v5489 = vpop.f32.mrb[0].mxu0
      %v5490 = vadd.f32 %v5450, %v5489
      %v5491 = vpop.f32.mrb[0].mxu0
      %v5492 = vpop.f32.mrb[0].mxu0
      %v5493 = vpop.f32.mrb[0].mxu0
      %5494 = vdwg.mxu0
      %5495 = vmatprep.subr.bf16.mxu0 0
      %5496 = vmatpush1.bf16.msra.mxu0 %v4087
      %5497 = vmatprep.subr.bf16.mxu0 0
      %5498 = vmatpush1.bf16.msra.mxu0 %v4088
      %5499 = vmatprep.subr.bf16.mxu0 0
      %5500 = vmatpush1.bf16.msra.mxu0 %v4089
      %5501 = vmatprep.subr.bf16.mxu0 0
      %5502 = vmatpush1.bf16.msra.mxu0 %v4090
      %5503 = vmatprep.subr.bf16.mxu0 0
      %5504 = vmatpush1.bf16.msra.mxu0 %v4091
      %5505 = vmatprep.subr.bf16.mxu0 0
      %5506 = vmatpush1.bf16.msra.mxu0 %v4092
      %5507 = vmatprep.subr.bf16.mxu0 0
      %5508 = vmatpush1.bf16.msra.mxu0 %v4093
      %5509 = vmatprep.subr.bf16.mxu0 0
      %5510 = vmatpush1.bf16.msra.mxu0 %v4094
      %5511 = vmatprep.subr.bf16.mxu0 0
      %5512 = vmatpush1.bf16.msra.mxu0 %v4095
      %5513 = vmatprep.subr.bf16.mxu0 0
      %5514 = vmatpush1.bf16.msra.mxu0 %v4096
      %5515 = vmatprep.subr.bf16.mxu0 0
      %5516 = vmatpush1.bf16.msra.mxu0 %v4097
      %5517 = vmatprep.subr.bf16.mxu0 0
      %5518 = vmatpush1.bf16.msra.mxu0 %v4098
      %5519 = vmatprep.subr.bf16.mxu0 0
      %5520 = vmatpush1.bf16.msra.mxu0 %v4099
      %5521 = vmatprep.subr.bf16.mxu0 0
      %5522 = vmatpush1.bf16.msra.mxu0 %v4100
      %5523 = vmatprep.subr.bf16.mxu0 0
      %5524 = vmatpush1.bf16.msra.mxu0 %v4101
      %5525 = vmatprep.subr.bf16.mxu0 0
      %5526 = vmatpush1.bf16.msra.mxu0 %v4102
      %5527 = vmatprep.mubr.bf16.mxu0 %v1560
      %5528 = vmatmul.mubr.bf16.gmra.mrb[0].mxu0 %v1546
      %v5529 = vpop.f32.mrb[0].mxu0
      %v5530 = vadd.f32 %v5490, %v5529
      %v5531 = vpop.f32.mrb[0].mxu0
      %v5532 = vpop.f32.mrb[0].mxu0
      %v5533 = vpop.f32.mrb[0].mxu0
      %5534 = vdwg.mxu0
      %5535 = vmatprep.subr.bf16.mxu0 0
      %5536 = vmatpush1.bf16.msra.mxu0 %v4103
      %5537 = vmatprep.subr.bf16.mxu0 0
      %5538 = vmatpush1.bf16.msra.mxu0 %v4104
      %5539 = vmatprep.subr.bf16.mxu0 0
      %5540 = vmatpush1.bf16.msra.mxu0 %v4105
      %5541 = vmatprep.subr.bf16.mxu0 0
      %5542 = vmatpush1.bf16.msra.mxu0 %v4106
      %5543 = vmatprep.subr.bf16.mxu0 0
      %5544 = vmatpush1.bf16.msra.mxu0 %v4107
      %5545 = vmatprep.subr.bf16.mxu0 0
      %5546 = vmatpush1.bf16.msra.mxu0 %v4108
      %5547 = vmatprep.subr.bf16.mxu0 0
      %5548 = vmatpush1.bf16.msra.mxu0 %v4109
      %5549 = vmatprep.subr.bf16.mxu0 0
      %5550 = vmatpush1.bf16.msra.mxu0 %v4110
      %5551 = vmatprep.subr.bf16.mxu0 0
      %5552 = vmatpush1.bf16.msra.mxu0 %v4111
      %5553 = vmatprep.subr.bf16.mxu0 0
      %5554 = vmatpush1.bf16.msra.mxu0 %v4112
      %5555 = vmatprep.subr.bf16.mxu0 0
      %5556 = vmatpush1.bf16.msra.mxu0 %v4113
      %5557 = vmatprep.subr.bf16.mxu0 0
      %5558 = vmatpush1.bf16.msra.mxu0 %v4114
      %5559 = vmatprep.subr.bf16.mxu0 0
      %5560 = vmatpush1.bf16.msra.mxu0 %v4115
      %5561 = vmatprep.subr.bf16.mxu0 0
      %5562 = vmatpush1.bf16.msra.mxu0 %v4116
      %5563 = vmatprep.subr.bf16.mxu0 0
      %5564 = vmatpush1.bf16.msra.mxu0 %v4117
      %5565 = vmatprep.subr.bf16.mxu0 0
      %5566 = vmatpush1.bf16.msra.mxu0 %v4118
      %5567 = vmatprep.mubr.bf16.mxu0 %v1570
      %5568 = vmatmul.mubr.bf16.gmra.mrb[0].mxu0 %v1568
      %v5569 = vpop.f32.mrb[0].mxu0
      %v5570 = vadd.f32 %v5530, %v5569
      %v5571 = vpop.f32.mrb[0].mxu0
      %v5572 = vpop.f32.mrb[0].mxu0
      %v5573 = vpop.f32.mrb[0].mxu0
      %5574 = vdwg.mxu0
      %5575 = vmatprep.subr.bf16.mxu0 0
      %5576 = vmatpush1.bf16.msra.mxu0 %v4119
      %5577 = vmatprep.subr.bf16.mxu0 0
      %5578 = vmatpush1.bf16.msra.mxu0 %v4120
      %5579 = vmatprep.subr.bf16.mxu0 0
      %5580 = vmatpush1.bf16.msra.mxu0 %v4121
      %5581 = vmatprep.subr.bf16.mxu0 0
      %5582 = vmatpush1.bf16.msra.mxu0 %v4122
      %5583 = vmatprep.subr.bf16.mxu0 0
      %5584 = vmatpush1.bf16.msra.mxu0 %v4123
      %5585 = vmatprep.subr.bf16.mxu0 0
      %5586 = vmatpush1.bf16.msra.mxu0 %v4124
      %5587 = vmatprep.subr.bf16.mxu0 0
      %5588 = vmatpush1.bf16.msra.mxu0 %v4125
      %5589 = vmatprep.subr.bf16.mxu0 0
      %5590 = vmatpush1.bf16.msra.mxu0 %v4126
      %5591 = vmatprep.subr.bf16.mxu0 0
      %5592 = vmatpush1.bf16.msra.mxu0 %v4127
      %5593 = vmatprep.subr.bf16.mxu0 0
      %5594 = vmatpush1.bf16.msra.mxu0 %v4128
      %5595 = vmatprep.subr.bf16.mxu0 0
      %5596 = vmatpush1.bf16.msra.mxu0 %v4129
      %5597 = vmatprep.subr.bf16.mxu0 0
      %5598 = vmatpush1.bf16.msra.mxu0 %v4130
      %5599 = vmatprep.subr.bf16.mxu0 0
      %5600 = vmatpush1.bf16.msra.mxu0 %v4131
      %5601 = vmatprep.subr.bf16.mxu0 0
      %5602 = vmatpush1.bf16.msra.mxu0 %v4132
      %5603 = vmatprep.subr.bf16.mxu0 0
      %5604 = vmatpush1.bf16.msra.mxu0 %v4133
      %5605 = vmatprep.subr.bf16.mxu0 0
      %5606 = vmatpush1.bf16.msra.mxu0 %v4134
      %5607 = vmatprep.mubr.bf16.mxu0 %v1567
      %5608 = vmatmul.mubr.bf16.gmra.mrb[0].mxu0 %v1553
      %v5609 = vpop.f32.mrb[0].mxu0
      %v5610 = vadd.f32 %v5570, %v5609
      %v5611 = vpop.f32.mrb[0].mxu0
      %v5612 = vpop.f32.mrb[0].mxu0
      %v5613 = vpop.f32.mrb[0].mxu0
      %5614 = vdwg.mxu0
      %5615 = vmatprep.subr.bf16.mxu0 0
      %5616 = vmatpush1.bf16.msra.mxu0 %v4135
      %5617 = vmatprep.subr.bf16.mxu0 0
      %5618 = vmatpush1.bf16.msra.mxu0 %v4136
      %5619 = vmatprep.subr.bf16.mxu0 0
      %5620 = vmatpush1.bf16.msra.mxu0 %v4137
      %5621 = vmatprep.subr.bf16.mxu0 0
      %5622 = vmatpush1.bf16.msra.mxu0 %v4138
      %5623 = vmatprep.subr.bf16.mxu0 0
      %5624 = vmatpush1.bf16.msra.mxu0 %v4139
      %5625 = vmatprep.subr.bf16.mxu0 0
      %5626 = vmatpush1.bf16.msra.mxu0 %v4140
      %5627 = vmatprep.subr.bf16.mxu0 0
      %5628 = vmatpush1.bf16.msra.mxu0 %v4141
      %5629 = vmatprep.subr.bf16.mxu0 0
      %5630 = vmatpush1.bf16.msra.mxu0 %v4142
      %5631 = vmatprep.subr.bf16.mxu0 0
      %5632 = vmatpush1.bf16.msra.mxu0 %v4143
      %5633 = vmatprep.subr.bf16.mxu0 0
      %5634 = vmatpush1.bf16.msra.mxu0 %v4144
      %5635 = vmatprep.subr.bf16.mxu0 0
      %5636 = vmatpush1.bf16.msra.mxu0 %v4145
      %5637 = vmatprep.subr.bf16.mxu0 0
      %5638 = vmatpush1.bf16.msra.mxu0 %v4146
      %5639 = vmatprep.subr.bf16.mxu0 0
      %5640 = vmatpush1.bf16.msra.mxu0 %v4147
      %5641 = vmatprep.subr.bf16.mxu0 0
      %5642 = vmatpush1.bf16.msra.mxu0 %v4148
      %5643 = vmatprep.subr.bf16.mxu0 0
      %5644 = vmatpush1.bf16.msra.mxu0 %v4149
      %5645 = vmatprep.subr.bf16.mxu0 0
      %5646 = vmatpush1.bf16.msra.mxu0 %v4150
      %5647 = vmatprep.mubr.bf16.mxu0 %v1571
      %5648 = vmatmul.mubr.bf16.gmra.mrb[0].mxu0 %v1569
      %v5649 = vpop.f32.mrb[0].mxu0
      %v5650 = vadd.f32 %v5610, %v5649
      %v5651 = vpop.f32.mrb[0].mxu0
      %v5652 = vpop.f32.mrb[0].mxu0
      %v5653 = vpop.f32.mrb[0].mxu0
      %5654 = vdwg.mxu0
      %5655 = vmatprep.subr.bf16.mxu0 0
      %5656 = vmatpush1.bf16.msra.mxu0 %v4151
      %5657 = vmatprep.subr.bf16.mxu0 0
      %5658 = vmatpush1.bf16.msra.mxu0 %v4152
      %5659 = vmatprep.subr.bf16.mxu0 0
      %5660 = vmatpush1.bf16.msra.mxu0 %v4153
      %5661 = vmatprep.subr.bf16.mxu0 0
      %5662 = vmatpush1.bf16.msra.mxu0 %v4154
      %5663 = vmatprep.subr.bf16.mxu0 0
      %5664 = vmatpush1.bf16.msra.mxu0 %v4155
      %5665 = vmatprep.subr.bf16.mxu0 0
      %5666 = vmatpush1.bf16.msra.mxu0 %v4156
      %5667 = vmatprep.subr.bf16.mxu0 0
      %5668 = vmatpush1.bf16.msra.mxu0 %v4157
      %5669 = vmatprep.subr.bf16.mxu0 0
      %5670 = vmatpush1.bf16.msra.mxu0 %v4158
      %5671 = vmatprep.subr.bf16.mxu0 0
      %5672 = vmatpush1.bf16.msra.mxu0 %v4159
      %5673 = vmatprep.subr.bf16.mxu0 0
      %5674 = vmatpush1.bf16.msra.mxu0 %v4160
      %5675 = vmatprep.subr.bf16.mxu0 0
      %5676 = vmatpush1.bf16.msra.mxu0 %v4161
      %5677 = vmatprep.subr.bf16.mxu0 0
      %5678 = vmatpush1.bf16.msra.mxu0 %v4162
      %5679 = vmatprep.subr.bf16.mxu0 0
      %5680 = vmatpush1.bf16.msra.mxu0 %v4163
      %5681 = vmatprep.subr.bf16.mxu0 0
      %5682 = vmatpush1.bf16.msra.mxu0 %v4164
      %5683 = vmatprep.subr.bf16.mxu0 0
      %5684 = vmatpush1.bf16.msra.mxu0 %v4165
      %5685 = vmatprep.subr.bf16.mxu0 0
      %5686 = vmatpush1.bf16.msra.mxu0 %v4166
      %5687 = vmatprep.mubr.bf16.mxu0 %v1609
      %5688 = vmatmul.mubr.bf16.gmra.mrb[0].mxu0 %v1595
      %v5689 = vpop.f32.mrb[0].mxu0
      %v5690 = vadd.f32 %v5650, %v5689
      %v5691 = vpop.f32.mrb[0].mxu0
      %v5692 = vpop.f32.mrb[0].mxu0
      %v5693 = vpop.f32.mrb[0].mxu0
      %5694 = vdwg.mxu0
      %5695 = vmatprep.subr.bf16.mxu0 0
      %5696 = vmatpush1.bf16.msra.mxu0 %v4167
      %5697 = vmatprep.subr.bf16.mxu0 0
      %5698 = vmatpush1.bf16.msra.mxu0 %v4168
      %5699 = vmatprep.subr.bf16.mxu0 0
      %5700 = vmatpush1.bf16.msra.mxu0 %v4169
      %5701 = vmatprep.subr.bf16.mxu0 0
      %5702 = vmatpush1.bf16.msra.mxu0 %v4170
      %5703 = vmatprep.subr.bf16.mxu0 0
      %5704 = vmatpush1.bf16.msra.mxu0 %v4171
      %5705 = vmatprep.subr.bf16.mxu0 0
      %5706 = vmatpush1.bf16.msra.mxu0 %v4172
      %5707 = vmatprep.subr.bf16.mxu0 0
      %5708 = vmatpush1.bf16.msra.mxu0 %v4173
      %5709 = vmatprep.subr.bf16.mxu0 0
      %5710 = vmatpush1.bf16.msra.mxu0 %v4174
      %5711 = vmatprep.subr.bf16.mxu0 0
      %5712 = vmatpush1.bf16.msra.mxu0 %v4175
      %5713 = vmatprep.subr.bf16.mxu0 0
      %5714 = vmatpush1.bf16.msra.mxu0 %v4176
      %5715 = vmatprep.subr.bf16.mxu0 0
      %5716 = vmatpush1.bf16.msra.mxu0 %v4177
      %5717 = vmatprep.subr.bf16.mxu0 0
      %5718 = vmatpush1.bf16.msra.mxu0 %v4178
      %5719 = vmatprep.subr.bf16.mxu0 0
      %5720 = vmatpush1.bf16.msra.mxu0 %v4179
      %5721 = vmatprep.subr.bf16.mxu0 0
      %5722 = vmatpush1.bf16.msra.mxu0 %v4180
      %5723 = vmatprep.subr.bf16.mxu0 0
      %5724 = vmatpush1.bf16.msra.mxu0 %v4181
      %5725 = vmatprep.subr.bf16.mxu0 0
      %5726 = vmatpush1.bf16.msra.mxu0 %v4182
      %5727 = vmatprep.mubr.bf16.mxu0 %v1619
      %5728 = vmatmul.mubr.bf16.gmra.mrb[0].mxu0 %v1617
      %v5729 = vpop.f32.mrb[0].mxu0
      %v5730 = vadd.f32 %v5690, %v5729
      %v5731 = vpop.f32.mrb[0].mxu0
      %v5732 = vpop.f32.mrb[0].mxu0
      %v5733 = vpop.f32.mrb[0].mxu0
      %5734 = vdwg.mxu0
      %5735 = vmatprep.subr.bf16.mxu0 0
      %5736 = vmatpush1.bf16.msra.mxu0 %v4183
      %5737 = vmatprep.subr.bf16.mxu0 0
      %5738 = vmatpush1.bf16.msra.mxu0 %v4184
      %5739 = vmatprep.subr.bf16.mxu0 0
      %5740 = vmatpush1.bf16.msra.mxu0 %v4185
      %5741 = vmatprep.subr.bf16.mxu0 0
      %5742 = vmatpush1.bf16.msra.mxu0 %v4186
      %5743 = vmatprep.subr.bf16.mxu0 0
      %5744 = vmatpush1.bf16.msra.mxu0 %v4187
      %5745 = vmatprep.subr.bf16.mxu0 0
      %5746 = vmatpush1.bf16.msra.mxu0 %v4188
      %5747 = vmatprep.subr.bf16.mxu0 0
      %5748 = vmatpush1.bf16.msra.mxu0 %v4189
      %5749 = vmatprep.subr.bf16.mxu0 0
      %5750 = vmatpush1.bf16.msra.mxu0 %v4190
      %5751 = vmatprep.subr.bf16.mxu0 0
      %5752 = vmatpush1.bf16.msra.mxu0 %v4191
      %5753 = vmatprep.subr.bf16.mxu0 0
      %5754 = vmatpush1.bf16.msra.mxu0 %v4192
      %5755 = vmatprep.subr.bf16.mxu0 0
      %5756 = vmatpush1.bf16.msra.mxu0 %v4193
      %5757 = vmatprep.subr.bf16.mxu0 0
      %5758 = vmatpush1.bf16.msra.mxu0 %v4194
      %5759 = vmatprep.subr.bf16.mxu0 0
      %5760 = vmatpush1.bf16.msra.mxu0 %v4195
      %5761 = vmatprep.subr.bf16.mxu0 0
      %5762 = vmatpush1.bf16.msra.mxu0 %v4196
      %5763 = vmatprep.subr.bf16.mxu0 0
      %5764 = vmatpush1.bf16.msra.mxu0 %v4197
      %5765 = vmatprep.subr.bf16.mxu0 0
      %5766 = vmatpush1.bf16.msra.mxu0 %v4198
      %5767 = vmatprep.mubr.bf16.mxu0 %v1616
      %5768 = vmatmul.mubr.bf16.gmra.mrb[0].mxu0 %v1602
      %v5769 = vpop.f32.mrb[0].mxu0
      %v5770 = vadd.f32 %v5730, %v5769
      %v5771 = vpop.f32.mrb[0].mxu0
      %v5772 = vpop.f32.mrb[0].mxu0
      %v5773 = vpop.f32.mrb[0].mxu0
      %5774 = vdwg.mxu0
      %5775 = vmatprep.subr.bf16.mxu0 0
      %5776 = vmatpush1.bf16.msra.mxu0 %v4199
      %5777 = vmatprep.subr.bf16.mxu0 0
      %5778 = vmatpush1.bf16.msra.mxu0 %v4200
      %5779 = vmatprep.subr.bf16.mxu0 0
      %5780 = vmatpush1.bf16.msra.mxu0 %v4201
      %5781 = vmatprep.subr.bf16.mxu0 0
      %5782 = vmatpush1.bf16.msra.mxu0 %v4202
      %5783 = vmatprep.subr.bf16.mxu0 0
      %5784 = vmatpush1.bf16.msra.mxu0 %v4203
      %5785 = vmatprep.subr.bf16.mxu0 0
      %5786 = vmatpush1.bf16.msra.mxu0 %v4204
      %5787 = vmatprep.subr.bf16.mxu0 0
      %5788 = vmatpush1.bf16.msra.mxu0 %v4205
      %5789 = vmatprep.subr.bf16.mxu0 0
      %5790 = vmatpush1.bf16.msra.mxu0 %v4206
      %5791 = vmatprep.subr.bf16.mxu0 0
      %5792 = vmatpush1.bf16.msra.mxu0 %v4207
      %5793 = vmatprep.subr.bf16.mxu0 0
      %5794 = vmatpush1.bf16.msra.mxu0 %v4208
      %5795 = vmatprep.subr.bf16.mxu0 0
      %5796 = vmatpush1.bf16.msra.mxu0 %v4209
      %5797 = vmatprep.subr.bf16.mxu0 0
      %5798 = vmatpush1.bf16.msra.mxu0 %v4210
      %5799 = vmatprep.subr.bf16.mxu0 0
      %5800 = vmatpush1.bf16.msra.mxu0 %v4211
      %5801 = vmatprep.subr.bf16.mxu0 0
      %5802 = vmatpush1.bf16.msra.mxu0 %v4212
      %5803 = vmatprep.subr.bf16.mxu0 0
      %5804 = vmatpush1.bf16.msra.mxu0 %v4213
      %5805 = vmatprep.subr.bf16.mxu0 0
      %5806 = vmatpush1.bf16.msra.mxu0 %v4214
      %5807 = vmatprep.mubr.bf16.mxu0 %v1620
      %5808 = vmatmul.mubr.bf16.gmra.mrb[0].mxu0 %v1618
      %v5809 = vpop.f32.mrb[0].mxu0
      %v5810 = vadd.f32 %v5770, %v5809
      %v5811 = vpop.f32.mrb[0].mxu0
      %v5812 = vpop.f32.mrb[0].mxu0
      %v5813 = vpop.f32.mrb[0].mxu0
      %5814 = vdwg.mxu0
      %5815 = vmatprep.subr.bf16.mxu0 0
      %5816 = vmatpush1.bf16.msra.mxu0 %v4215
      %5817 = vmatprep.subr.bf16.mxu0 0
      %5818 = vmatpush1.bf16.msra.mxu0 %v4216
      %5819 = vmatprep.subr.bf16.mxu0 0
      %5820 = vmatpush1.bf16.msra.mxu0 %v4217
      %5821 = vmatprep.subr.bf16.mxu0 0
      %5822 = vmatpush1.bf16.msra.mxu0 %v4218
      %5823 = vmatprep.subr.bf16.mxu0 0
      %5824 = vmatpush1.bf16.msra.mxu0 %v4219
      %5825 = vmatprep.subr.bf16.mxu0 0
      %5826 = vmatpush1.bf16.msra.mxu0 %v4220
      %5827 = vmatprep.subr.bf16.mxu0 0
      %5828 = vmatpush1.bf16.msra.mxu0 %v4221
      %5829 = vmatprep.subr.bf16.mxu0 0
      %5830 = vmatpush1.bf16.msra.mxu0 %v4222
      %5831 = vmatprep.subr.bf16.mxu0 0
      %5832 = vmatpush1.bf16.msra.mxu0 %v4223
      %5833 = vmatprep.subr.bf16.mxu0 0
      %5834 = vmatpush1.bf16.msra.mxu0 %v4224
      %5835 = vmatprep.subr.bf16.mxu0 0
      %5836 = vmatpush1.bf16.msra.mxu0 %v4225
      %5837 = vmatprep.subr.bf16.mxu0 0
      %5838 = vmatpush1.bf16.msra.mxu0 %v4226
      %5839 = vmatprep.subr.bf16.mxu0 0
      %5840 = vmatpush1.bf16.msra.mxu0 %v4227
      %5841 = vmatprep.subr.bf16.mxu0 0
      %5842 = vmatpush1.bf16.msra.mxu0 %v4228
      %5843 = vmatprep.subr.bf16.mxu0 0
      %5844 = vmatpush1.bf16.msra.mxu0 %v4229
      %5845 = vmatprep.subr.bf16.mxu0 0
      %5846 = vmatpush1.bf16.msra.mxu0 %v4230
      %5847 = vmatprep.mubr.bf16.mxu0 %v1658
      %5848 = vmatmul.mubr.bf16.gmra.mrb[0].mxu0 %v1644
      %v5849 = vpop.f32.mrb[0].mxu0
      %v5850 = vadd.f32 %v5810, %v5849
      %v5851 = vpop.f32.mrb[0].mxu0
      %v5852 = vpop.f32.mrb[0].mxu0
      %v5853 = vpop.f32.mrb[0].mxu0
      %5854 = vdwg.mxu0
      %5855 = vmatprep.subr.bf16.mxu0 0
      %5856 = vmatpush1.bf16.msra.mxu0 %v4231
      %5857 = vmatprep.subr.bf16.mxu0 0
      %5858 = vmatpush1.bf16.msra.mxu0 %v4232
      %5859 = vmatprep.subr.bf16.mxu0 0
      %5860 = vmatpush1.bf16.msra.mxu0 %v4233
      %5861 = vmatprep.subr.bf16.mxu0 0
      %5862 = vmatpush1.bf16.msra.mxu0 %v4234
      %5863 = vmatprep.subr.bf16.mxu0 0
      %5864 = vmatpush1.bf16.msra.mxu0 %v4235
      %5865 = vmatprep.subr.bf16.mxu0 0
      %5866 = vmatpush1.bf16.msra.mxu0 %v4236
      %5867 = vmatprep.subr.bf16.mxu0 0
      %5868 = vmatpush1.bf16.msra.mxu0 %v4237
      %5869 = vmatprep.subr.bf16.mxu0 0
      %5870 = vmatpush1.bf16.msra.mxu0 %v4238
      %5871 = vmatprep.subr.bf16.mxu0 0
      %5872 = vmatpush1.bf16.msra.mxu0 %v4239
      %5873 = vmatprep.subr.bf16.mxu0 0
      %5874 = vmatpush1.bf16.msra.mxu0 %v4240
      %5875 = vmatprep.subr.bf16.mxu0 0
      %5876 = vmatpush1.bf16.msra.mxu0 %v4241
      %5877 = vmatprep.subr.bf16.mxu0 0
      %5878 = vmatpush1.bf16.msra.mxu0 %v4242
      %5879 = vmatprep.subr.bf16.mxu0 0
      %5880 = vmatpush1.bf16.msra.mxu0 %v4243
      %5881 = vmatprep.subr.bf16.mxu0 0
      %5882 = vmatpush1.bf16.msra.mxu0 %v4244
      %5883 = vmatprep.subr.bf16.mxu0 0
      %5884 = vmatpush1.bf16.msra.mxu0 %v4245
      %5885 = vmatprep.subr.bf16.mxu0 0
      %5886 = vmatpush1.bf16.msra.mxu0 %v4246
      %5887 = vmatprep.mubr.bf16.mxu0 %v1668
      %5888 = vmatmul.mubr.bf16.gmra.mrb[0].mxu0 %v1666
      %v5889 = vpop.f32.mrb[0].mxu0
      %v5890 = vadd.f32 %v5850, %v5889
      %v5891 = vpop.f32.mrb[0].mxu0
      %v5892 = vpop.f32.mrb[0].mxu0
      %v5893 = vpop.f32.mrb[0].mxu0
      %5894 = vdwg.mxu0
      %5895 = vmatprep.subr.bf16.mxu0 0
      %5896 = vmatpush1.bf16.msra.mxu0 %v4247
      %5897 = vmatprep.subr.bf16.mxu0 0
      %5898 = vmatpush1.bf16.msra.mxu0 %v4248
      %5899 = vmatprep.subr.bf16.mxu0 0
      %5900 = vmatpush1.bf16.msra.mxu0 %v4249
      %5901 = vmatprep.subr.bf16.mxu0 0
      %5902 = vmatpush1.bf16.msra.mxu0 %v4250
      %5903 = vmatprep.subr.bf16.mxu0 0
      %5904 = vmatpush1.bf16.msra.mxu0 %v4251
      %5905 = vmatprep.subr.bf16.mxu0 0
      %5906 = vmatpush1.bf16.msra.mxu0 %v4252
      %5907 = vmatprep.subr.bf16.mxu0 0
      %5908 = vmatpush1.bf16.msra.mxu0 %v4253
      %5909 = vmatprep.subr.bf16.mxu0 0
      %5910 = vmatpush1.bf16.msra.mxu0 %v4254
      %5911 = vmatprep.subr.bf16.mxu0 0
      %5912 = vmatpush1.bf16.msra.mxu0 %v4255
      %5913 = vmatprep.subr.bf16.mxu0 0
      %5914 = vmatpush1.bf16.msra.mxu0 %v4256
      %5915 = vmatprep.subr.bf16.mxu0 0
      %5916 = vmatpush1.bf16.msra.mxu0 %v4257
      %5917 = vmatprep.subr.bf16.mxu0 0
      %5918 = vmatpush1.bf16.msra.mxu0 %v4258
      %5919 = vmatprep.subr.bf16.mxu0 0
      %5920 = vmatpush1.bf16.msra.mxu0 %v4259
      %5921 = vmatprep.subr.bf16.mxu0 0
      %5922 = vmatpush1.bf16.msra.mxu0 %v4260
      %5923 = vmatprep.subr.bf16.mxu0 0
      %5924 = vmatpush1.bf16.msra.mxu0 %v4261
      %5925 = vmatprep.subr.bf16.mxu0 0
      %5926 = vmatpush1.bf16.msra.mxu0 %v4262
      %5927 = vmatprep.mubr.bf16.mxu0 %v1665
      %5928 = vmatmul.mubr.bf16.gmra.mrb[0].mxu0 %v1651
      %v5929 = vpop.f32.mrb[0].mxu0
      %v5930 = vadd.f32 %v5890, %v5929
      %v5931 = vpop.f32.mrb[0].mxu0
      %v5932 = vpop.f32.mrb[0].mxu0
      %v5933 = vpop.f32.mrb[0].mxu0
      %5934 = vdwg.mxu0
      %5935 = vmatprep.subr.bf16.mxu0 0
      %5936 = vmatpush1.bf16.msra.mxu0 %v4263
      %5937 = vmatprep.subr.bf16.mxu0 0
      %5938 = vmatpush1.bf16.msra.mxu0 %v4264
      %5939 = vmatprep.subr.bf16.mxu0 0
      %5940 = vmatpush1.bf16.msra.mxu0 %v4265
      %5941 = vmatprep.subr.bf16.mxu0 0
      %5942 = vmatpush1.bf16.msra.mxu0 %v4266
      %5943 = vmatprep.subr.bf16.mxu0 0
      %5944 = vmatpush1.bf16.msra.mxu0 %v4267
      %5945 = vmatprep.subr.bf16.mxu0 0
      %5946 = vmatpush1.bf16.msra.mxu0 %v4268
      %5947 = vmatprep.subr.bf16.mxu0 0
      %5948 = vmatpush1.bf16.msra.mxu0 %v4269
      %5949 = vmatprep.subr.bf16.mxu0 0
      %5950 = vmatpush1.bf16.msra.mxu0 %v4270
      %5951 = vmatprep.subr.bf16.mxu0 0
      %5952 = vmatpush1.bf16.msra.mxu0 %v4271
      %5953 = vmatprep.subr.bf16.mxu0 0
      %5954 = vmatpush1.bf16.msra.mxu0 %v4272
      %5955 = vmatprep.subr.bf16.mxu0 0
      %5956 = vmatpush1.bf16.msra.mxu0 %v4273
      %5957 = vmatprep.subr.bf16.mxu0 0
      %5958 = vmatpush1.bf16.msra.mxu0 %v4274
      %5959 = vmatprep.subr.bf16.mxu0 0
      %5960 = vmatpush1.bf16.msra.mxu0 %v4275
      %5961 = vmatprep.subr.bf16.mxu0 0
      %5962 = vmatpush1.bf16.msra.mxu0 %v4276
      %5963 = vmatprep.subr.bf16.mxu0 0
      %5964 = vmatpush1.bf16.msra.mxu0 %v4277
      %5965 = vmatprep.subr.bf16.mxu0 0
      %5966 = vmatpush1.bf16.msra.mxu0 %v4278
      %5967 = vmatprep.mubr.bf16.mxu0 %v1669
      %5968 = vmatmul.mubr.bf16.gmra.mrb[0].mxu0 %v1667
      %v5969 = vpop.f32.mrb[0].mxu0
      %v5970 = vadd.f32 %v5930, %v5969
      %v5971 = vpop.f32.mrb[0].mxu0
      %v5972 = vpop.f32.mrb[0].mxu0
      %v5973 = vpop.f32.mrb[0].mxu0
      %5974 = vdwg.mxu0
      %5975 = vmatprep.subr.bf16.mxu0 0
      %5976 = vmatpush1.bf16.msra.mxu0 %v4279
      %5977 = vmatprep.subr.bf16.mxu0 0
      %5978 = vmatpush1.bf16.msra.mxu0 %v4280
      %5979 = vmatprep.subr.bf16.mxu0 0
      %5980 = vmatpush1.bf16.msra.mxu0 %v4281
      %5981 = vmatprep.subr.bf16.mxu0 0
      %5982 = vmatpush1.bf16.msra.mxu0 %v4282
      %5983 = vmatprep.subr.bf16.mxu0 0
      %5984 = vmatpush1.bf16.msra.mxu0 %v4283
      %5985 = vmatprep.subr.bf16.mxu0 0
      %5986 = vmatpush1.bf16.msra.mxu0 %v4284
      %5987 = vmatprep.subr.bf16.mxu0 0
      %5988 = vmatpush1.bf16.msra.mxu0 %v4285
      %5989 = vmatprep.subr.bf16.mxu0 0
      %5990 = vmatpush1.bf16.msra.mxu0 %v4286
      %5991 = vmatprep.subr.bf16.mxu0 0
      %5992 = vmatpush1.bf16.msra.mxu0 %v4287
      %5993 = vmatprep.subr.bf16.mxu0 0
      %5994 = vmatpush1.bf16.msra.mxu0 %v4288
      %5995 = vmatprep.subr.bf16.mxu0 0
      %5996 = vmatpush1.bf16.msra.mxu0 %v4289
      %5997 = vmatprep.subr.bf16.mxu0 0
      %5998 = vmatpush1.bf16.msra.mxu0 %v4290
      %5999 = vmatprep.subr.bf16.mxu0 0
      %6000 = vmatpush1.bf16.msra.mxu0 %v4291
      %6001 = vmatprep.subr.bf16.mxu0 0
      %6002 = vmatpush1.bf16.msra.mxu0 %v4292
      %6003 = vmatprep.subr.bf16.mxu0 0
      %6004 = vmatpush1.bf16.msra.mxu0 %v4293
      %6005 = vmatprep.subr.bf16.mxu0 0
      %6006 = vmatpush1.bf16.msra.mxu0 %v4294
      %6007 = vmatprep.mubr.bf16.mxu0 %v1707
      %6008 = vmatmul.mubr.bf16.gmra.mrb[0].mxu0 %v1693
      %v6009 = vpop.f32.mrb[0].mxu0
      %v6010 = vadd.f32 %v5970, %v6009
      %v6011 = vpop.f32.mrb[0].mxu0
      %v6012 = vpop.f32.mrb[0].mxu0
      %v6013 = vpop.f32.mrb[0].mxu0
      %6014 = vdwg.mxu0
      %6015 = vmatprep.subr.bf16.mxu0 0
      %6016 = vmatpush1.bf16.msra.mxu0 %v4295
      %6017 = vmatprep.subr.bf16.mxu0 0
      %6018 = vmatpush1.bf16.msra.mxu0 %v4296
      %6019 = vmatprep.subr.bf16.mxu0 0
      %6020 = vmatpush1.bf16.msra.mxu0 %v4297
      %6021 = vmatprep.subr.bf16.mxu0 0
      %6022 = vmatpush1.bf16.msra.mxu0 %v4298
      %6023 = vmatprep.subr.bf16.mxu0 0
      %6024 = vmatpush1.bf16.msra.mxu0 %v4299
      %6025 = vmatprep.subr.bf16.mxu0 0
      %6026 = vmatpush1.bf16.msra.mxu0 %v4300
      %6027 = vmatprep.subr.bf16.mxu0 0
      %6028 = vmatpush1.bf16.msra.mxu0 %v4301
      %6029 = vmatprep.subr.bf16.mxu0 0
      %6030 = vmatpush1.bf16.msra.mxu0 %v4302
      %6031 = vmatprep.subr.bf16.mxu0 0
      %6032 = vmatpush1.bf16.msra.mxu0 %v4303
      %6033 = vmatprep.subr.bf16.mxu0 0
      %6034 = vmatpush1.bf16.msra.mxu0 %v4304
      %6035 = vmatprep.subr.bf16.mxu0 0
      %6036 = vmatpush1.bf16.msra.mxu0 %v4305
      %6037 = vmatprep.subr.bf16.mxu0 0
      %6038 = vmatpush1.bf16.msra.mxu0 %v4306
      %6039 = vmatprep.subr.bf16.mxu0 0
      %6040 = vmatpush1.bf16.msra.mxu0 %v4307
      %6041 = vmatprep.subr.bf16.mxu0 0
      %6042 = vmatpush1.bf16.msra.mxu0 %v4308
      %6043 = vmatprep.subr.bf16.mxu0 0
      %6044 = vmatpush1.bf16.msra.mxu0 %v4309
      %6045 = vmatprep.subr.bf16.mxu0 0
      %6046 = vmatpush1.bf16.msra.mxu0 %v4310
      %6047 = vmatprep.mubr.bf16.mxu0 %v1717
      %6048 = vmatmul.mubr.bf16.gmra.mrb[0].mxu0 %v1715
      %v6049 = vpop.f32.mrb[0].mxu0
      %v6050 = vadd.f32 %v6010, %v6049
      %v6051 = vpop.f32.mrb[0].mxu0
      %v6052 = vpop.f32.mrb[0].mxu0
      %v6053 = vpop.f32.mrb[0].mxu0
      %6054 = vdwg.mxu0
      %6055 = vmatprep.subr.bf16.mxu0 0
      %6056 = vmatpush1.bf16.msra.mxu0 %v4311
      %6057 = vmatprep.subr.bf16.mxu0 0
      %6058 = vmatpush1.bf16.msra.mxu0 %v4312
      %6059 = vmatprep.subr.bf16.mxu0 0
      %6060 = vmatpush1.bf16.msra.mxu0 %v4313
      %6061 = vmatprep.subr.bf16.mxu0 0
      %6062 = vmatpush1.bf16.msra.mxu0 %v4314
      %6063 = vmatprep.subr.bf16.mxu0 0
      %6064 = vmatpush1.bf16.msra.mxu0 %v4315
      %6065 = vmatprep.subr.bf16.mxu0 0
      %6066 = vmatpush1.bf16.msra.mxu0 %v4316
      %6067 = vmatprep.subr.bf16.mxu0 0
      %6068 = vmatpush1.bf16.msra.mxu0 %v4317
      %6069 = vmatprep.subr.bf16.mxu0 0
      %6070 = vmatpush1.bf16.msra.mxu0 %v4318
      %6071 = vmatprep.subr.bf16.mxu0 0
      %6072 = vmatpush1.bf16.msra.mxu0 %v4319
      %6073 = vmatprep.subr.bf16.mxu0 0
      %6074 = vmatpush1.bf16.msra.mxu0 %v4320
      %6075 = vmatprep.subr.bf16.mxu0 0
      %6076 = vmatpush1.bf16.msra.mxu0 %v4321
      %6077 = vmatprep.subr.bf16.mxu0 0
      %6078 = vmatpush1.bf16.msra.mxu0 %v4322
      %6079 = vmatprep.subr.bf16.mxu0 0
      %6080 = vmatpush1.bf16.msra.mxu0 %v4323
      %6081 = vmatprep.subr.bf16.mxu0 0
      %6082 = vmatpush1.bf16.msra.mxu0 %v4324
      %6083 = vmatprep.subr.bf16.mxu0 0
      %6084 = vmatpush1.bf16.msra.mxu0 %v4325
      %6085 = vmatprep.subr.bf16.mxu0 0
      %6086 = vmatpush1.bf16.msra.mxu0 %v4326
      %6087 = vmatprep.mubr.bf16.mxu0 %v1714
      %6088 = vmatmul.mubr.bf16.gmra.mrb[0].mxu0 %v1700
      %v6089 = vpop.f32.mrb[0].mxu0
      %v6090 = vadd.f32 %v6050, %v6089
      %v6091 = vpop.f32.mrb[0].mxu0
      %v6092 = vpop.f32.mrb[0].mxu0
      %v6093 = vpop.f32.mrb[0].mxu0
      %6094 = vdwg.mxu0
      %6095 = vmatprep.subr.bf16.mxu0 0
      %6096 = vmatpush1.bf16.msra.mxu0 %v4327
      %6097 = vmatprep.subr.bf16.mxu0 0
      %6098 = vmatpush1.bf16.msra.mxu0 %v4328
      %6099 = vmatprep.subr.bf16.mxu0 0
      %6100 = vmatpush1.bf16.msra.mxu0 %v4329
      %6101 = vmatprep.subr.bf16.mxu0 0
      %6102 = vmatpush1.bf16.msra.mxu0 %v4330
      %6103 = vmatprep.subr.bf16.mxu0 0
      %6104 = vmatpush1.bf16.msra.mxu0 %v4331
      %6105 = vmatprep.subr.bf16.mxu0 0
      %6106 = vmatpush1.bf16.msra.mxu0 %v4332
      %6107 = vmatprep.subr.bf16.mxu0 0
      %6108 = vmatpush1.bf16.msra.mxu0 %v4333
      %6109 = vmatprep.subr.bf16.mxu0 0
      %6110 = vmatpush1.bf16.msra.mxu0 %v4334
      %6111 = vmatprep.subr.bf16.mxu0 0
      %6112 = vmatpush1.bf16.msra.mxu0 %v4335
      %6113 = vmatprep.subr.bf16.mxu0 0
      %6114 = vmatpush1.bf16.msra.mxu0 %v4336
      %6115 = vmatprep.subr.bf16.mxu0 0
      %6116 = vmatpush1.bf16.msra.mxu0 %v4337
      %6117 = vmatprep.subr.bf16.mxu0 0
      %6118 = vmatpush1.bf16.msra.mxu0 %v4338
      %6119 = vmatprep.subr.bf16.mxu0 0
      %6120 = vmatpush1.bf16.msra.mxu0 %v4339
      %6121 = vmatprep.subr.bf16.mxu0 0
      %6122 = vmatpush1.bf16.msra.mxu0 %v4340
      %6123 = vmatprep.subr.bf16.mxu0 0
      %6124 = vmatpush1.bf16.msra.mxu0 %v4341
      %6125 = vmatprep.subr.bf16.mxu0 0
      %6126 = vmatpush1.bf16.msra.mxu0 %v4342
      %6127 = vmatprep.mubr.bf16.mxu0 %v1718
      %6128 = vmatmul.mubr.bf16.gmra.mrb[0].mxu0 %v1716
      %v6129 = vpop.f32.mrb[0].mxu0
      %v6130 = vadd.f32 %v6090, %v6129
      %v6131 = vpop.f32.mrb[0].mxu0
      %v6132 = vpop.f32.mrb[0].mxu0
      %v6133 = vpop.f32.mrb[0].mxu0
      %6134 = vdwg.mxu0
      %v6135 = vadd.f32 %v286, %v6130
      %vm6136 = vcmask 517120
      %6137 = vst.msk [vmem:[#allocation2] sm:$0x3] %vm6136, %v6135
      %p6138 = scmp.eq.s32.totalorder %s20, 1
      // Predicated region
      $region41: #{network_forward.3} parent=35 // pred_check
        %p6139 = pneg %p6138
      $region42: #{network_forward.3} parent=35 // pred_check_branch
        %6141 = sbr.rel (%p6139) target = $region44
      $region43: #{network_forward.3} parent=35 // pred_region
        %v6142 = vld [vmem:[#allocation2] sm:$0x3]
        %v6143 = vld [vmem:[%s268] sm:$0x1]
        %v6145 = vlaneseq
        %v6146 = vshrl.u32 %v6145, 7
        %v6147 = vsub.s32 0, %v6146
        %v6148 = vrot.slane %v6143, %v6147
        %v6150 = vadd.f32 %v6142, %v6148
        %v6151 = vmax.f32 %v6150, 0.0
        %v6152 = vld [vmem:[%s273] sm:$0xff]
        %v6153 = vld [vmem:[%s273 + $0x8] sm:$0xff]
        %v6154 = vld [vmem:[%s273 + $0x10] sm:$0xff]
        %v6155 = vld [vmem:[%s273 + $0x18] sm:$0xff]
        %v6156 = vld [vmem:[%s273 + $0x20] sm:$0xff]
        %v6157 = vld [vmem:[%s273 + $0x28] sm:$0xff]
        %v6158 = vld [vmem:[%s273 + $0x30] sm:$0xff]
        %v6159 = vld [vmem:[%s273 + $0x38] sm:$0xff]
        %vm6160 = vcmask 523264
        %v6162 = vsel %vm6160, %v6151, 0
        %6164 = vmatprep.subr.mxu0 0.0
        %6165 = vmatpush1.msra.mxu0 %v6152
        %6166 = vmatprep.subr.mxu0 0.0
        %6167 = vmatpush1.msra.mxu0 %v6153
        %6168 = vmatprep.subr.mxu0 0.0
        %6169 = vmatpush1.msra.mxu0 %v6154
        %6170 = vmatprep.subr.mxu0 0.0
        %6171 = vmatpush1.msra.mxu0 %v6155
        %6172 = vmatprep.subr.mxu0 0.0
        %6173 = vmatpush1.msra.mxu0 %v6156
        %6174 = vmatprep.subr.mxu0 0.0
        %6175 = vmatpush1.msra.mxu0 %v6157
        %6176 = vmatprep.subr.mxu0 0.0
        %6177 = vmatpush1.msra.mxu0 %v6158
        %6178 = vmatprep.subr.mxu0 0.0
        %6179 = vmatpush1.msra.mxu0 %v6159
        %6180 = vmatprep.subr.mxu0 0.0
        %6181 = vmatpush1.msra.mxu0 0.0
        %6182 = vmatprep.subr.mxu0 0.0
        %6183 = vmatpush1.msra.mxu0 0.0
        %6184 = vmatprep.subr.mxu0 0.0
        %6185 = vmatpush1.msra.mxu0 0.0
        %6186 = vmatprep.subr.mxu0 0.0
        %6187 = vmatpush1.msra.mxu0 0.0
        %6188 = vmatprep.subr.mxu0 0.0
        %6189 = vmatpush1.msra.mxu0 0.0
        %6190 = vmatprep.subr.mxu0 0.0
        %6191 = vmatpush1.msra.mxu0 0.0
        %6192 = vmatprep.subr.mxu0 0.0
        %6193 = vmatpush1.msra.mxu0 0.0
        %6194 = vmatprep.subr.mxu0 0.0
        %6195 = vmatpush1.msra.mxu0 0.0
        %6196 = vmatprep.subr.mxu0 0.0
        %6197 = vmatpush1.msra.mxu0 0.0
        %6198 = vmatprep.subr.mxu0 0.0
        %6199 = vmatpush1.msra.mxu0 0.0
        %6200 = vmatprep.subr.mxu0 0.0
        %6201 = vmatpush1.msra.mxu0 0.0
        %6202 = vmatprep.subr.mxu0 0.0
        %6203 = vmatpush1.msra.mxu0 0.0
        %6204 = vmatprep.subr.mxu0 0.0
        %6205 = vmatpush1.msra.mxu0 0.0
        %6206 = vmatprep.subr.mxu0 0.0
        %6207 = vmatpush1.msra.mxu0 0.0
        %6208 = vmatprep.subr.mxu0 0.0
        %6209 = vmatpush1.msra.mxu0 0.0
        %6210 = vmatprep.subr.mxu0 0.0
        %6211 = vmatpush1.msra.mxu0 0.0
        %6212 = vmatprep.subr.mxu0 0.0
        %6213 = vmatpush1.msra.mxu0 0.0
        %6214 = vmatprep.subr.mxu0 0.0
        %6215 = vmatpush1.msra.mxu0 0.0
        %6216 = vmatprep.subr.mxu0 0.0
        %6217 = vmatpush1.msra.mxu0 0.0
        %6218 = vmatprep.subr.mxu0 0.0
        %6219 = vmatpush1.msra.mxu0 0.0
        %6220 = vmatprep.subr.mxu0 0.0
        %6221 = vmatpush1.msra.mxu0 0.0
        %6222 = vmatprep.subr.mxu0 0.0
        %6223 = vmatpush1.msra.mxu0 0.0
        %6224 = vmatprep.subr.mxu0 0.0
        %6225 = vmatpush1.msra.mxu0 0.0
        %6226 = vmatprep.subr.mxu0 0.0
        %6227 = vmatpush1.msra.mxu0 0.0
        %6228 = vmatprep.mubr.f32.mxu0 0.0
        %6229 = vmatmul.mubr.f32.gmra.mrb[0].mxu0 %v6162
        %v6230 = vpop.f32.mrb[0].mxu0
        %v6231 = vadd.f32 0.0, %v6230
        %v6232 = vpop.f32.mrb[0].mxu0
        %6233 = vdwg.mxu0
        %vm6234 = vcmask 74752
        %6235 = vst.msk [vmem:[%s278] sm:$0x3] %vm6234, %v6231
      $region44: #{network_forward.3} parent=35 // pred_fallthru
        _
      %p6236 = scmp.lt.s32.totalorder %s19, 1
      %s6237 = scalar_select %p6236, %s19, 1
      %s6238 = smul.addr %s6237, 2
      %s6239 = scalar_lea.vmem %s4, %s6238
      // Predicated region
      $region45: #{network_forward.3} parent=35 // pred_check
        %p6240 = pneg %p151
      $region46: #{network_forward.3} parent=35 // pred_check_branch
        %6242 = sbr.rel (%p6240) target = $region48
      $region47: #{network_forward.3} parent=35 // pred_region
        _
      $region48: #{network_forward.3} parent=35 // pred_fallthru
        _
    $region36: #{network_forward.3} parent=5 // pred_fallthru
      _
    %p6243 = scmp.le.s32.totalorder 2, %s10
    // Predicated region
    $region49: #{network_forward.3} parent=5 // pred_check
      %p6244 = pneg %p6243
    $region50: #{network_forward.3} parent=5 // pred_check_branch
      %6246 = sbr.rel (%p6244) target = $region52
    $region51: #{network_forward.3} parent=5 // pred_region
      %s6247 = ssub.s32 %s10, 2
      // Predicated region
      $region53: #{network_forward.3} parent=51 // pred_check
        %p6248 = pneg %p157
      $region54: #{network_forward.3} parent=51 // pred_check_branch
        %6250 = sbr.rel (%p6248) target = $region56
      $region55: #{network_forward.3} parent=51 // pred_region
        %p6251 = scmp.lt.s32.totalorder %s21, 1
        %s6252 = scalar_select %p6251, %s21, 1
        %s6253 = smul.addr %s6252, 2
        %s6254 = scalar_lea.vmem %s4, %s6253
      $region56: #{network_forward.3} parent=51 // pred_fallthru
        _
    $region52: #{network_forward.3} parent=5 // pred_fallthru
      _
  $region6: #{network_forward.3} parent=0 // loop_footer
    %s14 = sadd.s32 1, %s10
  $region7: #{network_forward.3} parent=0 // loop_footer_branch
    %9 = sbr.rel target = $region3
  $region8: #{network_forward.3} parent=0 // loop_exit
    _

</llo_original>
